<compile_context>
chip_gen: v5e
topology: v5e:2x2
jax: 0.10.0
libtpu: 0.0.40
codegen_flags: <defaults>
</compile_context>

<pallas_src>
import math

import jax
import jax.numpy as jnp
from jax import lax
from jax.experimental import pallas as pl
from jax.experimental.pallas import tpu as pltpu

EPS = 1e-5  # PyTorch BatchNorm1d default eps


def _vmem_spec():
    return pl.BlockSpec(memory_space=pltpu.MemorySpace.VMEM)


# --------------------------- fused forward kernel -----------------------------
def _make_fused_kernel(Ks, strides, num_heads):
    """Build the single fused kernel body (configs are static Python values)."""

    def conv_block(h, pad_ref, w_ref, sc_ref, sh_ref, K, stride):
        """h: (B, Lin, Cin) fp32; w_ref: (K, Cin, Cout); sc/sh: (1, Cout).
        Conv1d (K shifted-slice matmuls, bf16 operands / fp32 acc) + folded
        eval-mode BN + ReLU + MaxPool1d(2)."""
        B_, Lin, Cin = h.shape
        _, _, Cout = w_ref.shape
        pad = (K - 1) // 2
        Lp = Lin + 2 * pad
        Lconv = (Lp - K) // stride + 1
        Lout = Lconv // 2

        # in-kernel zero padding into VMEM scratch (no HBM round trip)
        pad_ref[...] = jnp.zeros_like(pad_ref)
        pad_ref[:, pad:pad + Lin, :] = h

        wv = w_ref[...]                                     # (K, Cin, Cout) fp32
        acc = jnp.zeros((B_ * Lconv, Cout), jnp.float32)
        if stride == 1:
            xp = pad_ref[...]                               # load padded once
        for k in range(K):                                  # small static unroll
            if stride == 1:
                xs = xp[:, k:k + Lconv, :]
            else:
                # strided window read straight from VMEM (Stride>1 configs only)
                xs = pad_ref[:, pl.ds(k, Lconv, stride), :]
            acc = acc + jnp.dot(xs.reshape(B_ * Lconv, Cin).astype(jnp.bfloat16),
                                wv[k].astype(jnp.bfloat16),
                                preferred_element_type=jnp.float32)
        y = jnp.maximum(acc * sc_ref[...] + sh_ref[...], 0.0)   # BN + ReLU (fp32)
        y = y.reshape(B_, Lconv, Cout)
        y = y[:, :2 * Lout, :]                # MaxPool1d(2) drops odd tail (torch)
        y = y.reshape(B_, Lout, 2, Cout)
        return jnp.max(y, axis=2)             # (B, Lout, Cout)

    def kernel(*refs):
        (x_ref, det_ref,
         cw0, cs0, ct0, cw1, cs1, ct1, cw2, cs2, ct2, cw3, cs3, ct3,
         wqkv_ref, bqkv_ref, wo_ref, bo_ref,
         wdet_ref, bdet_ref, w1a_ref, w1b_ref, b1_ref,
         wf2_ref, bf2_ref, wf3_ref, bf3_ref, wz_ref, bz_ref,
         ab_ref, un_ref, attn_ref,
         pad0, pad1, pad2, pad3) = refs

        cws = (cw0, cw1, cw2, cw3)
        css = (cs0, cs1, cs2, cs3)
        cts = (ct0, ct1, ct2, ct3)
        pads = (pad0, pad1, pad2, pad3)

        # ----------------- conv / BN / ReLU / pool chain ----------------------
        h = x_ref[...]                                       # (B, L, 2)
        for i in range(4):
            h = conv_block(h, pads[i], cws[i], css[i], cts[i], Ks[i], strides[i])
        # TODO(synk): nn.Dropout is identity in eval mode; training-mode RNG masking not implemented.

        # ----------------- multi-head attention + avg pool --------------------
        B_, S_, D_ = h.shape
        H = num_heads
        hd = D_ // H
        inv_scale = 1.0 / math.sqrt(D_)       # torch divides scores by input_dim**0.5
        x2 = h.reshape(B_ * S_, D_)
        # fused Q|K|V projection: one matmul instead of three
        qkv = jnp.dot(x2.astype(jnp.bfloat16), wqkv_ref[...].astype(jnp.bfloat16),
                      preferred_element_type=jnp.float32) + bqkv_ref[...]
        Q2 = qkv[:, :D_]
        K2 = qkv[:, D_:2 * D_]
        V2 = qkv[:, 2 * D_:]
        wov = wo_ref[...]                                    # (D, D) fp32
        acc2 = jnp.zeros((B_ * S_, D_), jnp.float32)
        for hh in range(H):                                  # static unroll
            lo = hh * hd
            qh = Q2[:, lo:lo + hd].reshape(B_, S_, hd).astype(jnp.bfloat16)
            kh = K2[:, lo:lo + hd].reshape(B_, S_, hd).astype(jnp.bfloat16)
            vh = V2[:, lo:lo + hd].reshape(B_, S_, hd).astype(jnp.bfloat16)
            s = jnp.einsum('bsd,btd->bst', qh, kh,
                           preferred_element_type=jnp.float32) * inv_scale
            m = jnp.max(s, axis=-1, keepdims=True)
            e = jnp.exp(s - m)
            a = e * pl.reciprocal(jnp.sum(e, axis=-1, keepdims=True), approx=True)
            # direct (B, H, S, S) store -- no transpose glue outside the kernel
            attn_ref[:, hh:hh + 1, :, :] = a.reshape(B_, 1, S_, S_)
            oh = jnp.einsum('bst,btd->bsd', a.astype(jnp.bfloat16), vh,
                            preferred_element_type=jnp.float32)
            # concat-of-heads @ Wo  ==  sum_h head_h @ Wo[h*hd:(h+1)*hd]
            acc2 = acc2 + jnp.dot(oh.reshape(B_ * S_, hd).astype(jnp.bfloat16),
                                  wov[lo:lo + hd, :].astype(jnp.bfloat16),
                                  preferred_element_type=jnp.float32)
        out = (acc2 + bo_ref[...]).reshape(B_, S_, D_)
        pooled = jnp.mean(out, axis=1)                       # AdaptiveAvgPool1d(1)

        # ----------------- MLP head (tiny; fp32 HIGHEST matmuls) --------------
        P = lax.Precision.HIGHEST
        det_h = jnp.maximum(
            jnp.dot(det_ref[...], wdet_ref[...], precision=P,
                    preferred_element_type=jnp.float32) + bdet_ref[...], 0.0)
        # fc_combined(concat([pooled, det_h])) == pooled@W[:32] + det_h@W[32:]
        hc = (jnp.dot(pooled, w1a_ref[...], precision=P,
                      preferred_element_type=jnp.float32)
              + jnp.dot(det_h, w1b_ref[...], precision=P,
                        preferred_element_type=jnp.float32) + b1_ref[...])
        hc = jnp.maximum(hc, 0.0)
        hc = jnp.maximum(jnp.dot(hc, wf2_ref[...], precision=P,
                                 preferred_element_type=jnp.float32)
                         + bf2_ref[...], 0.0)
        hc = jnp.maximum(jnp.dot(hc, wf3_ref[...], precision=P,
                                 preferred_element_type=jnp.float32)
                         + bf3_ref[...], 0.0)
        # fused (fc4 | fc_uncertainty) head: one (32, 14) matmul, then split
        yz = jnp.dot(hc, wz_ref[...], precision=P,
                     preferred_element_type=jnp.float32) + bz_ref[...]
        n_out = yz.shape[-1] // 2
        logits = yz[:, :n_out]
        u = yz[:, n_out:]
        m = jnp.max(logits, axis=-1, keepdims=True)          # softmax(dim=1)
        e = jnp.exp(logits - m)
        ab_ref[...] = e * pl.reciprocal(jnp.sum(e, axis=-1, keepdims=True),
                                        approx=True)
        # numerically-stable softplus
        un_ref[...] = jnp.maximum(u, 0.0) + jnp.log(1.0 + jnp.exp(-jnp.abs(u)))

    return kernel


# ----------------------------- Python wrapper ----------------------------------
def abundance_forward(x, det, p, cfg):
    """Fused Pallas forward. x: (B, L, 2) float32, det: (B, 7) float32."""
    B, L, _ = x.shape
    Ks = [cfg['Kernel1'], cfg['Kernel2'], cfg['Kernel3'], cfg['Kernel4']]
    strides = [cfg['Stride1'], cfg['Stride2'], cfg['Stride3'], cfg['Stride4']]
    chans = [2, cfg['Conv1'], cfg['Conv2'], cfg['Conv3'], cfg['Conv4']]
    H = cfg['Heads']

    # static shape bookkeeping for the per-layer padded-input scratch buffers
    pad_shapes = []
    L_cur = L
    for i in range(4):
        pad = (Ks[i] - 1) // 2
        Lp = L_cur + 2 * pad
        Lconv = (Lp - Ks[i]) // strides[i] + 1
        pad_shapes.append((B, Lp, chans[i]))
        L_cur = Lconv // 2                 # MaxPool1d(2) (drops odd tail)
    S = L_cur
    D = chans[4]                           # attention input_dim (= 32 in the model)

    # fold eval-mode BatchNorm (+ conv bias) into per-channel scale/shift
    conv_args = []
    for i in range(4):
        scale = p[f'gamma{i}'] / jnp.sqrt(p[f'rvar{i}'] + EPS)
        shift = p[f'beta{i}'] - p[f'rmean{i}'] * scale + scale * p[f'convb{i}']
        conv_args += [p[f'convw{i}'], scale.reshape(1, -1), shift.reshape(1, -1)]

    # fuse Q|K|V projections and the fc4|fc_uncertainty output heads
    wqkv = jnp.concatenate([p['wq'], p['wk'], p['wv']], axis=1)          # (D, 3D)
    bqkv = jnp.concatenate([p['bq'], p['bk'], p['bv']]).reshape(1, -1)   # (1, 3D)
    wz = jnp.concatenate([p['w4'], p['wu']], axis=1)                     # (32, 14)
    bz = jnp.concatenate([p['b4'], p['bu']]).reshape(1, -1)              # (1, 14)

    inputs = [x.astype(jnp.float32), det.astype(jnp.float32), *conv_args,
              wqkv, bqkv, p['wo'], p['bo'].reshape(1, -1),
              p['wdet'], p['bdet'].reshape(1, -1),
              p['w_comb'][:D, :], p['w_comb'][D:, :], p['b_comb'].reshape(1, -1),
              p['w2'], p['b2'].reshape(1, -1),
              p['w3'], p['b3'].reshape(1, -1),
              wz, bz]

    kernel = _make_fused_kernel(Ks, strides, H)

    abund, unc, attn = pl.pallas_call(
        kernel,
        out_shape=(jax.ShapeDtypeStruct((B, 7), jnp.float32),
                   jax.ShapeDtypeStruct((B, 7), jnp.float32),
                   jax.ShapeDtypeStruct((B, H, S, S), jnp.float32)),
        in_specs=[_vmem_spec() for _ in inputs],
        out_specs=(_vmem_spec(), _vmem_spec(), _vmem_spec()),
        scratch_shapes=[pltpu.VMEM(s, jnp.float32) for s in pad_shapes],
    )(*inputs)
    return abund, unc, attn


# ------------------------------- parameters ------------------------------------
def init_params(key, cfg):
    it = iter(jax.random.split(key, 48))

    def nrm(shape, scale=0.1):
        return scale * jax.random.normal(next(it), shape, dtype=jnp.float32)

    p = {'wdet': nrm((7, 64)), 'bdet': nrm((64,))}
    chans = [2, cfg['Conv1'], cfg['Conv2'], cfg['Conv3'], cfg['Conv4']]
    Ks = [cfg['Kernel1'], cfg['Kernel2'], cfg['Kernel3'], cfg['Kernel4']]
    for i in range(4):
        cin, cout = chans[i], chans[i + 1]
        p[f'convw{i}'] = nrm((Ks[i], cin, cout), 0.2)        # (K, Cin, Cout)
        p[f'convb{i}'] = nrm((cout,))
        p[f'gamma{i}'] = 1.0 + nrm((cout,))
        p[f'beta{i}'] = nrm((cout,))
        p[f'rmean{i}'] = nrm((cout,))
        p[f'rvar{i}'] = 1.0 + jnp.abs(nrm((cout,)))
    for name in ('q', 'k', 'v', 'o'):
        p[f'w{name}'] = nrm((32, 32))
        p[f'b{name}'] = nrm((32,))
    p['w_comb'] = nrm((96, 128)); p['b_comb'] = nrm((128,))
    p['w2'] = nrm((128, 64));     p['b2'] = nrm((64,))
    p['w3'] = nrm((64, 32));      p['b3'] = nrm((32,))
    p['w4'] = nrm((32, 7));       p['b4'] = nrm((7,))
    p['wu'] = nrm((32, 7));       p['bu'] = nrm((7,))
    return p


# ------------------------- pure-JAX reference (check) --------------------------
def reference_forward(x, det, p, cfg):
    with jax.default_matmul_precision("highest"):            # true fp32 reference
        det_h = jax.nn.relu(det @ p['wdet'] + p['bdet'])
        Ks = [cfg['Kernel1'], cfg['Kernel2'], cfg['Kernel3'], cfg['Kernel4']]
        strides = [cfg['Stride1'], cfg['Stride2'], cfg['Stride3'], cfg['Stride4']]
        h = jnp.transpose(x, (0, 2, 1))                      # NCL, like PyTorch
        for i in range(4):
            w = jnp.transpose(p[f'convw{i}'], (2, 1, 0))     # (Cout, Cin, K)
            pad = (Ks[i] - 1) // 2
            h = lax.conv_general_dilated(h, w, (strides[i],), [(pad, pad)],
                                         dimension_numbers=('NCH', 'OIH', 'NCH'))
            h = h + p[f'convb{i}'][None, :, None]
            h = (h - p[f'rmean{i}'][None, :, None]) / jnp.sqrt(
                p[f'rvar{i}'][None, :, None] + EPS)
            h = h * p[f'gamma{i}'][None, :, None] + p[f'beta{i}'][None, :, None]
            h = jax.nn.relu(h)
            Bc, Cc, Lc = h.shape
            h = h[:, :, :(Lc // 2) * 2].reshape(Bc, Cc, Lc // 2, 2).max(axis=-1)
        xa = jnp.transpose(h, (0, 2, 1))                     # (B, S, 32)
        B_, S_, D_ = xa.shape
        H = cfg['Heads']; hd = D_ // H
        Q = xa @ p['wq'] + p['bq']
        K = xa @ p['wk'] + p['bk']
        V = xa @ p['wv'] + p['bv']
        Qh = jnp.transpose(Q.reshape(B_, S_, H, hd), (0, 2, 1, 3))
        Kh = jnp.transpose(K.reshape(B_, S_, H, hd), (0, 2, 1, 3))
        Vh = jnp.transpose(V.reshape(B_, S_, H, hd), (0, 2, 1, 3))
        scores = Qh @ jnp.transpose(Kh, (0, 1, 3, 2)) / (D_ ** 0.5)
        attn = jax.nn.softmax(scores, axis=-1)
        ws = jnp.transpose(attn @ Vh, (0, 2, 1, 3)).reshape(B_, S_, D_)
        out = ws @ p['wo'] + p['bo']
        pooled = jnp.mean(out, axis=1)
        combined = jnp.concatenate([pooled, det_h], axis=1)
        c = jax.nn.relu(combined @ p['w_comb'] + p['b_comb'])
        c = jax.nn.relu(c @ p['w2'] + p['b2'])
        c = jax.nn.relu(c @ p['w3'] + p['b3'])
        abund = jax.nn.softmax(c @ p['w4'] + p['b4'], axis=1)
        unc = jax.nn.softplus(c @ p['wu'] + p['bu'])
        return abund, unc, attn


if __name__ == "__main__":
    cfg = {'Conv1': 8, 'Conv2': 16, 'Conv3': 32, 'Conv4': 32,
           'Kernel1': 3, 'Kernel2': 3, 'Kernel3': 3, 'Kernel4': 3,
           'Stride1': 1, 'Stride2': 1, 'Stride3': 1, 'Stride4': 1,
           'Heads': 4, 'Drop1': 0.1, 'Drop2': 0.1}
    key = jax.random.PRNGKey(0)
    kx, kd, kp = jax.random.split(key, 3)
    B, L = 2, 64
    x = jax.random.normal(kx, (B, L, 2), dtype=jnp.float32)
    det = jax.random.normal(kd, (B, 7), dtype=jnp.float32)
    params = init_params(kp, cfg)

    fwd = jax.jit(lambda xx, dd: abundance_forward(xx, dd, params, cfg))
    abund, unc, attn = fwd(x, det)
    jax.block_until_ready((abund, unc, attn))

    r_ab, r_un, r_at = reference_forward(x, det, params, cfg)
    assert abund.shape == (B, 7) and unc.shape == (B, 7)
    assert attn.shape == (B, cfg['Heads'], L // 16, L // 16)
    # bf16 MXU operands (+ approx EUP reciprocal) in the fused kernel vs the
    # fp32 'highest' reference -> tolerance loosened from 1e-3 to 2e-2.
    assert bool(jnp.allclose(abund, r_ab, atol=2e-2, rtol=2e-2))
    assert bool(jnp.allclose(unc, r_un, atol=2e-2, rtol=2e-2))
    assert bool(jnp.allclose(attn, r_at, atol=2e-2, rtol=2e-2))
    print("KERNEL_OK")
</pallas_src>

<mosaic_0001>
module attributes {stable_mosaic.version = 11 : i64} {
  func.func @kernel(%arg0: memref<2x64x2xf32, #tpu.memory_space<vmem>>, %arg1: memref<2x7xf32, #tpu.memory_space<vmem>>, %arg2: memref<3x2x8xf32, #tpu.memory_space<vmem>>, %arg3: memref<1x8xf32, #tpu.memory_space<vmem>>, %arg4: memref<1x8xf32, #tpu.memory_space<vmem>>, %arg5: memref<3x8x16xf32, #tpu.memory_space<vmem>>, %arg6: memref<1x16xf32, #tpu.memory_space<vmem>>, %arg7: memref<1x16xf32, #tpu.memory_space<vmem>>, %arg8: memref<3x16x32xf32, #tpu.memory_space<vmem>>, %arg9: memref<1x32xf32, #tpu.memory_space<vmem>>, %arg10: memref<1x32xf32, #tpu.memory_space<vmem>>, %arg11: memref<3x32x32xf32, #tpu.memory_space<vmem>>, %arg12: memref<1x32xf32, #tpu.memory_space<vmem>>, %arg13: memref<1x32xf32, #tpu.memory_space<vmem>>, %arg14: memref<32x96xf32, #tpu.memory_space<vmem>>, %arg15: memref<1x96xf32, #tpu.memory_space<vmem>>, %arg16: memref<32x32xf32, #tpu.memory_space<vmem>>, %arg17: memref<1x32xf32, #tpu.memory_space<vmem>>, %arg18: memref<7x64xf32, #tpu.memory_space<vmem>>, %arg19: memref<1x64xf32, #tpu.memory_space<vmem>>, %arg20: memref<32x128xf32, #tpu.memory_space<vmem>>, %arg21: memref<64x128xf32, #tpu.memory_space<vmem>>, %arg22: memref<1x128xf32, #tpu.memory_space<vmem>>, %arg23: memref<128x64xf32, #tpu.memory_space<vmem>>, %arg24: memref<1x64xf32, #tpu.memory_space<vmem>>, %arg25: memref<64x32xf32, #tpu.memory_space<vmem>>, %arg26: memref<1x32xf32, #tpu.memory_space<vmem>>, %arg27: memref<32x14xf32, #tpu.memory_space<vmem>>, %arg28: memref<1x14xf32, #tpu.memory_space<vmem>>, %arg29: memref<2x7xf32, #tpu.memory_space<vmem>>, %arg30: memref<2x7xf32, #tpu.memory_space<vmem>>, %arg31: memref<2x4x4x4xf32, #tpu.memory_space<vmem>>, %arg32: memref<2x66x2xf32, #tpu.memory_space<vmem>>, %arg33: memref<2x34x8xf32, #tpu.memory_space<vmem>>, %arg34: memref<2x18x16xf32, #tpu.memory_space<vmem>>, %arg35: memref<2x10x32xf32, #tpu.memory_space<vmem>>) attributes {dimension_semantics = [], scalar_prefetch = 0 : i64, scratch_operands = 4 : i64, tpu.core_type = #tpu.core_type<tc>} {
    %c0 = arith.constant 0 : index
    %c0_0 = arith.constant 0 : index
    %c0_1 = arith.constant 0 : index
    %0 = vector.load %arg0[%c0, %c0_0, %c0_1] : memref<2x64x2xf32, #tpu.memory_space<vmem>>, vector<2x64x2xf32>
    %cst = arith.constant 0.000000e+00 : f32
    %1 = vector.broadcast %cst : f32 to vector<2x66x2xf32>
    %c0_2 = arith.constant 0 : index
    %c0_3 = arith.constant 0 : index
    %c0_4 = arith.constant 0 : index
    %2 = vector.load %arg32[%c0_2, %c0_3, %c0_4] : memref<2x66x2xf32, #tpu.memory_space<vmem>>, vector<2x66x2xf32>
    tpu.vector_store %arg32[%c0_2, %c0_3, %c0_4], %1 {strides = array<i32>} : memref<2x66x2xf32, #tpu.memory_space<vmem>>, vector<2x66x2xf32>,
    %c0_5 = arith.constant 0 : index
    %c1 = arith.constant 1 : index
    %c0_6 = arith.constant 0 : index
    %3 = vector.load %arg32[%c0_5, %c1, %c0_6] : memref<2x66x2xf32, #tpu.memory_space<vmem>>, vector<2x64x2xf32>
    tpu.vector_store %arg32[%c0_5, %c1, %c0_6], %0 {strides = array<i32>} : memref<2x66x2xf32, #tpu.memory_space<vmem>>, vector<2x64x2xf32>,
    %c0_7 = arith.constant 0 : index
    %c0_8 = arith.constant 0 : index
    %c0_9 = arith.constant 0 : index
    %4 = vector.load %arg2[%c0_7, %c0_8, %c0_9] : memref<3x2x8xf32, #tpu.memory_space<vmem>>, vector<3x2x8xf32>
    %cst_10 = arith.constant 0.000000e+00 : f32
    %5 = vector.broadcast %cst_10 : f32 to vector<128x8xf32>
    %c0_11 = arith.constant 0 : index
    %c0_12 = arith.constant 0 : index
    %c0_13 = arith.constant 0 : index
    %6 = vector.load %arg32[%c0_11, %c0_12, %c0_13] : memref<2x66x2xf32, #tpu.memory_space<vmem>>, vector<2x66x2xf32>
    %7 = vector.extract_strided_slice %6 {offsets = [0, 0, 0], sizes = [2, 64, 2], strides = [1, 1, 1]} : vector<2x66x2xf32> to vector<2x64x2xf32>
    %8 = vector.shape_cast %7 : vector<2x64x2xf32> to vector<128x2xf32>
    %9 = arith.truncf %8 : vector<128x2xf32> to vector<128x2xbf16>
    %10 = vector.extract_strided_slice %4 {offsets = [0, 0, 0], sizes = [1, 2, 8], strides = [1, 1, 1]} : vector<3x2x8xf32> to vector<1x2x8xf32>
    %11 = vector.shape_cast %10 : vector<1x2x8xf32> to vector<2x8xf32>
    %12 = arith.truncf %11 : vector<2x8xf32> to vector<2x8xbf16>
    %cst_14 = arith.constant dense<0.000000e+00> : vector<128x8xf32>
    %13 = tpu.matmul %9, %12, %cst_14 {dimension_numbers = #tpu.dot_dimension_numbers<[1], [0], [0], [1], [0, 0, 1, 1], [], []>} : vector<128x2xbf16>, vector<2x8xbf16>, vector<128x8xf32> -> vector<128x8xf32>
    %14 = arith.addf %5, %13 : vector<128x8xf32>
    %15 = vector.extract_strided_slice %6 {offsets = [0, 1, 0], sizes = [2, 64, 2], strides = [1, 1, 1]} : vector<2x66x2xf32> to vector<2x64x2xf32>
    %16 = vector.shape_cast %15 : vector<2x64x2xf32> to vector<128x2xf32>
    %17 = arith.truncf %16 : vector<128x2xf32> to vector<128x2xbf16>
    %18 = vector.extract_strided_slice %4 {offsets = [1, 0, 0], sizes = [1, 2, 8], strides = [1, 1, 1]} : vector<3x2x8xf32> to vector<1x2x8xf32>
    %19 = vector.shape_cast %18 : vector<1x2x8xf32> to vector<2x8xf32>
    %20 = arith.truncf %19 : vector<2x8xf32> to vector<2x8xbf16>
    %cst_15 = arith.constant dense<0.000000e+00> : vector<128x8xf32>
    %21 = tpu.matmul %17, %20, %cst_15 {dimension_numbers = #tpu.dot_dimension_numbers<[1], [0], [0], [1], [0, 0, 1, 1], [], []>} : vector<128x2xbf16>, vector<2x8xbf16>, vector<128x8xf32> -> vector<128x8xf32>
    %22 = arith.addf %14, %21 : vector<128x8xf32>
    %23 = vector.extract_strided_slice %6 {offsets = [0, 2, 0], sizes = [2, 64, 2], strides = [1, 1, 1]} : vector<2x66x2xf32> to vector<2x64x2xf32>
    %24 = vector.shape_cast %23 : vector<2x64x2xf32> to vector<128x2xf32>
    %25 = arith.truncf %24 : vector<128x2xf32> to vector<128x2xbf16>
    %26 = vector.extract_strided_slice %4 {offsets = [2, 0, 0], sizes = [1, 2, 8], strides = [1, 1, 1]} : vector<3x2x8xf32> to vector<1x2x8xf32>
    %27 = vector.shape_cast %26 : vector<1x2x8xf32> to vector<2x8xf32>
    %28 = arith.truncf %27 : vector<2x8xf32> to vector<2x8xbf16>
    %cst_16 = arith.constant dense<0.000000e+00> : vector<128x8xf32>
    %29 = tpu.matmul %25, %28, %cst_16 {dimension_numbers = #tpu.dot_dimension_numbers<[1], [0], [0], [1], [0, 0, 1, 1], [], []>} : vector<128x2xbf16>, vector<2x8xbf16>, vector<128x8xf32> -> vector<128x8xf32>
    %30 = arith.addf %22, %29 : vector<128x8xf32>
    %c0_17 = arith.constant 0 : index
    %c0_18 = arith.constant 0 : index
    %31 = vector.load %arg3[%c0_17, %c0_18] : memref<1x8xf32, #tpu.memory_space<vmem>>, vector<1x8xf32>
    %32 = vector.broadcast %31 : vector<1x8xf32> to vector<128x8xf32>
    %33 = arith.mulf %30, %32 : vector<128x8xf32>
    %c0_19 = arith.constant 0 : index
    %c0_20 = arith.constant 0 : index
    %34 = vector.load %arg4[%c0_19, %c0_20] : memref<1x8xf32, #tpu.memory_space<vmem>>, vector<1x8xf32>
    %35 = vector.broadcast %34 : vector<1x8xf32> to vector<128x8xf32>
    %36 = arith.addf %33, %35 : vector<128x8xf32>
    %cst_21 = arith.constant 0.000000e+00 : f32
    %37 = vector.broadcast %cst_21 : f32 to vector<128x8xf32>
    %38 = arith.maximumf %36, %37 : vector<128x8xf32>
    %39 = vector.shape_cast %38 : vector<128x8xf32> to vector<2x64x8xf32>
    %40 = vector.shape_cast %39 : vector<2x64x8xf32> to vector<2x32x2x8xf32>
    %cst_22 = arith.constant dense<0xFF800000> : vector<2x32x8xf32>
    %41 = vector.multi_reduction <maximumf>, %40, %cst_22 [2] : vector<2x32x2x8xf32> to vector<2x32x8xf32>
    %cst_23 = arith.constant 0.000000e+00 : f32
    %42 = vector.broadcast %cst_23 : f32 to vector<2x34x8xf32>
    %c0_24 = arith.constant 0 : index
    %c0_25 = arith.constant 0 : index
    %c0_26 = arith.constant 0 : index
    %43 = vector.load %arg33[%c0_24, %c0_25, %c0_26] : memref<2x34x8xf32, #tpu.memory_space<vmem>>, vector<2x34x8xf32>
    tpu.vector_store %arg33[%c0_24, %c0_25, %c0_26], %42 {strides = array<i32>} : memref<2x34x8xf32, #tpu.memory_space<vmem>>, vector<2x34x8xf32>,
    %c0_27 = arith.constant 0 : index
    %c1_28 = arith.constant 1 : index
    %c0_29 = arith.constant 0 : index
    %44 = vector.load %arg33[%c0_27, %c1_28, %c0_29] : memref<2x34x8xf32, #tpu.memory_space<vmem>>, vector<2x32x8xf32>
    tpu.vector_store %arg33[%c0_27, %c1_28, %c0_29], %41 {strides = array<i32>} : memref<2x34x8xf32, #tpu.memory_space<vmem>>, vector<2x32x8xf32>,
    %c0_30 = arith.constant 0 : index
    %c0_31 = arith.constant 0 : index
    %c0_32 = arith.constant 0 : index
    %45 = vector.load %arg5[%c0_30, %c0_31, %c0_32] : memref<3x8x16xf32, #tpu.memory_space<vmem>>, vector<3x8x16xf32>
    %cst_33 = arith.constant 0.000000e+00 : f32
    %46 = vector.broadcast %cst_33 : f32 to vector<64x16xf32>
    %c0_34 = arith.constant 0 : index
    %c0_35 = arith.constant 0 : index
    %c0_36 = arith.constant 0 : index
    %47 = vector.load %arg33[%c0_34, %c0_35, %c0_36] : memref<2x34x8xf32, #tpu.memory_space<vmem>>, vector<2x34x8xf32>
    %48 = vector.extract_strided_slice %47 {offsets = [0, 0, 0], sizes = [2, 32, 8], strides = [1, 1, 1]} : vector<2x34x8xf32> to vector<2x32x8xf32>
    %49 = vector.shape_cast %48 : vector<2x32x8xf32> to vector<64x8xf32>
    %50 = arith.truncf %49 : vector<64x8xf32> to vector<64x8xbf16>
    %51 = vector.extract_strided_slice %45 {offsets = [0, 0, 0], sizes = [1, 8, 16], strides = [1, 1, 1]} : vector<3x8x16xf32> to vector<1x8x16xf32>
    %52 = vector.shape_cast %51 : vector<1x8x16xf32> to vector<8x16xf32>
    %53 = arith.truncf %52 : vector<8x16xf32> to vector<8x16xbf16>
    %cst_37 = arith.constant dense<0.000000e+00> : vector<64x16xf32>
    %54 = tpu.matmul %50, %53, %cst_37 {dimension_numbers = #tpu.dot_dimension_numbers<[1], [0], [0], [1], [0, 0, 1, 1], [], []>} : vector<64x8xbf16>, vector<8x16xbf16>, vector<64x16xf32> -> vector<64x16xf32>
    %55 = arith.addf %46, %54 : vector<64x16xf32>
    %56 = vector.extract_strided_slice %47 {offsets = [0, 1, 0], sizes = [2, 32, 8], strides = [1, 1, 1]} : vector<2x34x8xf32> to vector<2x32x8xf32>
    %57 = vector.shape_cast %56 : vector<2x32x8xf32> to vector<64x8xf32>
    %58 = arith.truncf %57 : vector<64x8xf32> to vector<64x8xbf16>
    %59 = vector.extract_strided_slice %45 {offsets = [1, 0, 0], sizes = [1, 8, 16], strides = [1, 1, 1]} : vector<3x8x16xf32> to vector<1x8x16xf32>
    %60 = vector.shape_cast %59 : vector<1x8x16xf32> to vector<8x16xf32>
    %61 = arith.truncf %60 : vector<8x16xf32> to vector<8x16xbf16>
    %cst_38 = arith.constant dense<0.000000e+00> : vector<64x16xf32>
    %62 = tpu.matmul %58, %61, %cst_38 {dimension_numbers = #tpu.dot_dimension_numbers<[1], [0], [0], [1], [0, 0, 1, 1], [], []>} : vector<64x8xbf16>, vector<8x16xbf16>, vector<64x16xf32> -> vector<64x16xf32>
    %63 = arith.addf %55, %62 : vector<64x16xf32>
    %64 = vector.extract_strided_slice %47 {offsets = [0, 2, 0], sizes = [2, 32, 8], strides = [1, 1, 1]} : vector<2x34x8xf32> to vector<2x32x8xf32>
    %65 = vector.shape_cast %64 : vector<2x32x8xf32> to vector<64x8xf32>
    %66 = arith.truncf %65 : vector<64x8xf32> to vector<64x8xbf16>
    %67 = vector.extract_strided_slice %45 {offsets = [2, 0, 0], sizes = [1, 8, 16], strides = [1, 1, 1]} : vector<3x8x16xf32> to vector<1x8x16xf32>
    %68 = vector.shape_cast %67 : vector<1x8x16xf32> to vector<8x16xf32>
    %69 = arith.truncf %68 : vector<8x16xf32> to vector<8x16xbf16>
    %cst_39 = arith.constant dense<0.000000e+00> : vector<64x16xf32>
    %70 = tpu.matmul %66, %69, %cst_39 {dimension_numbers = #tpu.dot_dimension_numbers<[1], [0], [0], [1], [0, 0, 1, 1], [], []>} : vector<64x8xbf16>, vector<8x16xbf16>, vector<64x16xf32> -> vector<64x16xf32>
    %71 = arith.addf %63, %70 : vector<64x16xf32>
    %c0_40 = arith.constant 0 : index
    %c0_41 = arith.constant 0 : index
    %72 = vector.load %arg6[%c0_40, %c0_41] : memref<1x16xf32, #tpu.memory_space<vmem>>, vector<1x16xf32>
    %73 = vector.broadcast %72 : vector<1x16xf32> to vector<64x16xf32>
    %74 = arith.mulf %71, %73 : vector<64x16xf32>
    %c0_42 = arith.constant 0 : index
    %c0_43 = arith.constant 0 : index
    %75 = vector.load %arg7[%c0_42, %c0_43] : memref<1x16xf32, #tpu.memory_space<vmem>>, vector<1x16xf32>
    %76 = vector.broadcast %75 : vector<1x16xf32> to vector<64x16xf32>
    %77 = arith.addf %74, %76 : vector<64x16xf32>
    %cst_44 = arith.constant 0.000000e+00 : f32
    %78 = vector.broadcast %cst_44 : f32 to vector<64x16xf32>
    %79 = arith.maximumf %77, %78 : vector<64x16xf32>
    %80 = vector.shape_cast %79 : vector<64x16xf32> to vector<2x32x16xf32>
    %81 = vector.shape_cast %80 : vector<2x32x16xf32> to vector<2x16x2x16xf32>
    %cst_45 = arith.constant dense<0xFF800000> : vector<2x16x16xf32>
    %82 = vector.multi_reduction <maximumf>, %81, %cst_45 [2] : vector<2x16x2x16xf32> to vector<2x16x16xf32>
    %cst_46 = arith.constant 0.000000e+00 : f32
    %83 = vector.broadcast %cst_46 : f32 to vector<2x18x16xf32>
    %c0_47 = arith.constant 0 : index
    %c0_48 = arith.constant 0 : index
    %c0_49 = arith.constant 0 : index
    %84 = vector.load %arg34[%c0_47, %c0_48, %c0_49] : memref<2x18x16xf32, #tpu.memory_space<vmem>>, vector<2x18x16xf32>
    tpu.vector_store %arg34[%c0_47, %c0_48, %c0_49], %83 {strides = array<i32>} : memref<2x18x16xf32, #tpu.memory_space<vmem>>, vector<2x18x16xf32>,
    %c0_50 = arith.constant 0 : index
    %c1_51 = arith.constant 1 : index
    %c0_52 = arith.constant 0 : index
    %85 = vector.load %arg34[%c0_50, %c1_51, %c0_52] : memref<2x18x16xf32, #tpu.memory_space<vmem>>, vector<2x16x16xf32>
    tpu.vector_store %arg34[%c0_50, %c1_51, %c0_52], %82 {strides = array<i32>} : memref<2x18x16xf32, #tpu.memory_space<vmem>>, vector<2x16x16xf32>,
    %c0_53 = arith.constant 0 : index
    %c0_54 = arith.constant 0 : index
    %c0_55 = arith.constant 0 : index
    %86 = vector.load %arg8[%c0_53, %c0_54, %c0_55] : memref<3x16x32xf32, #tpu.memory_space<vmem>>, vector<3x16x32xf32>
    %cst_56 = arith.constant 0.000000e+00 : f32
    %87 = vector.broadcast %cst_56 : f32 to vector<32x32xf32>
    %c0_57 = arith.constant 0 : index
    %c0_58 = arith.constant 0 : index
    %c0_59 = arith.constant 0 : index
    %88 = vector.load %arg34[%c0_57, %c0_58, %c0_59] : memref<2x18x16xf32, #tpu.memory_space<vmem>>, vector<2x18x16xf32>
    %89 = vector.extract_strided_slice %88 {offsets = [0, 0, 0], sizes = [2, 16, 16], strides = [1, 1, 1]} : vector<2x18x16xf32> to vector<2x16x16xf32>
    %90 = vector.shape_cast %89 : vector<2x16x16xf32> to vector<32x16xf32>
    %91 = arith.truncf %90 : vector<32x16xf32> to vector<32x16xbf16>
    %92 = vector.extract_strided_slice %86 {offsets = [0, 0, 0], sizes = [1, 16, 32], strides = [1, 1, 1]} : vector<3x16x32xf32> to vector<1x16x32xf32>
    %93 = vector.shape_cast %92 : vector<1x16x32xf32> to vector<16x32xf32>
    %94 = arith.truncf %93 : vector<16x32xf32> to vector<16x32xbf16>
    %cst_60 = arith.constant dense<0.000000e+00> : vector<32x32xf32>
    %95 = tpu.matmul %91, %94, %cst_60 {dimension_numbers = #tpu.dot_dimension_numbers<[1], [0], [0], [1], [0, 0, 1, 1], [], []>} : vector<32x16xbf16>, vector<16x32xbf16>, vector<32x32xf32> -> vector<32x32xf32>
    %96 = arith.addf %87, %95 : vector<32x32xf32>
    %97 = vector.extract_strided_slice %88 {offsets = [0, 1, 0], sizes = [2, 16, 16], strides = [1, 1, 1]} : vector<2x18x16xf32> to vector<2x16x16xf32>
    %98 = vector.shape_cast %97 : vector<2x16x16xf32> to vector<32x16xf32>
    %99 = arith.truncf %98 : vector<32x16xf32> to vector<32x16xbf16>
    %100 = vector.extract_strided_slice %86 {offsets = [1, 0, 0], sizes = [1, 16, 32], strides = [1, 1, 1]} : vector<3x16x32xf32> to vector<1x16x32xf32>
    %101 = vector.shape_cast %100 : vector<1x16x32xf32> to vector<16x32xf32>
    %102 = arith.truncf %101 : vector<16x32xf32> to vector<16x32xbf16>
    %cst_61 = arith.constant dense<0.000000e+00> : vector<32x32xf32>
    %103 = tpu.matmul %99, %102, %cst_61 {dimension_numbers = #tpu.dot_dimension_numbers<[1], [0], [0], [1], [0, 0, 1, 1], [], []>} : vector<32x16xbf16>, vector<16x32xbf16>, vector<32x32xf32> -> vector<32x32xf32>
    %104 = arith.addf %96, %103 : vector<32x32xf32>
    %105 = vector.extract_strided_slice %88 {offsets = [0, 2, 0], sizes = [2, 16, 16], strides = [1, 1, 1]} : vector<2x18x16xf32> to vector<2x16x16xf32>
    %106 = vector.shape_cast %105 : vector<2x16x16xf32> to vector<32x16xf32>
    %107 = arith.truncf %106 : vector<32x16xf32> to vector<32x16xbf16>
    %108 = vector.extract_strided_slice %86 {offsets = [2, 0, 0], sizes = [1, 16, 32], strides = [1, 1, 1]} : vector<3x16x32xf32> to vector<1x16x32xf32>
    %109 = vector.shape_cast %108 : vector<1x16x32xf32> to vector<16x32xf32>
    %110 = arith.truncf %109 : vector<16x32xf32> to vector<16x32xbf16>
    %cst_62 = arith.constant dense<0.000000e+00> : vector<32x32xf32>
    %111 = tpu.matmul %107, %110, %cst_62 {dimension_numbers = #tpu.dot_dimension_numbers<[1], [0], [0], [1], [0, 0, 1, 1], [], []>} : vector<32x16xbf16>, vector<16x32xbf16>, vector<32x32xf32> -> vector<32x32xf32>
    %112 = arith.addf %104, %111 : vector<32x32xf32>
    %c0_63 = arith.constant 0 : index
    %c0_64 = arith.constant 0 : index
    %113 = vector.load %arg9[%c0_63, %c0_64] : memref<1x32xf32, #tpu.memory_space<vmem>>, vector<1x32xf32>
    %114 = vector.broadcast %113 : vector<1x32xf32> to vector<32x32xf32>
    %115 = arith.mulf %112, %114 : vector<32x32xf32>
    %c0_65 = arith.constant 0 : index
    %c0_66 = arith.constant 0 : index
    %116 = vector.load %arg10[%c0_65, %c0_66] : memref<1x32xf32, #tpu.memory_space<vmem>>, vector<1x32xf32>
    %117 = vector.broadcast %116 : vector<1x32xf32> to vector<32x32xf32>
    %118 = arith.addf %115, %117 : vector<32x32xf32>
    %cst_67 = arith.constant 0.000000e+00 : f32
    %119 = vector.broadcast %cst_67 : f32 to vector<32x32xf32>
    %120 = arith.maximumf %118, %119 : vector<32x32xf32>
    %121 = vector.shape_cast %120 : vector<32x32xf32> to vector<2x16x32xf32>
    %122 = vector.shape_cast %121 : vector<2x16x32xf32> to vector<2x8x2x32xf32>
    %cst_68 = arith.constant dense<0xFF800000> : vector<2x8x32xf32>
    %123 = vector.multi_reduction <maximumf>, %122, %cst_68 [2] : vector<2x8x2x32xf32> to vector<2x8x32xf32>
    %cst_69 = arith.constant 0.000000e+00 : f32
    %124 = vector.broadcast %cst_69 : f32 to vector<2x10x32xf32>
    %c0_70 = arith.constant 0 : index
    %c0_71 = arith.constant 0 : index
    %c0_72 = arith.constant 0 : index
    %125 = vector.load %arg35[%c0_70, %c0_71, %c0_72] : memref<2x10x32xf32, #tpu.memory_space<vmem>>, vector<2x10x32xf32>
    tpu.vector_store %arg35[%c0_70, %c0_71, %c0_72], %124 {strides = array<i32>} : memref<2x10x32xf32, #tpu.memory_space<vmem>>, vector<2x10x32xf32>,
    %c0_73 = arith.constant 0 : index
    %c1_74 = arith.constant 1 : index
    %c0_75 = arith.constant 0 : index
    %126 = vector.load %arg35[%c0_73, %c1_74, %c0_75] : memref<2x10x32xf32, #tpu.memory_space<vmem>>, vector<2x8x32xf32>
    tpu.vector_store %arg35[%c0_73, %c1_74, %c0_75], %123 {strides = array<i32>} : memref<2x10x32xf32, #tpu.memory_space<vmem>>, vector<2x8x32xf32>,
    %c0_76 = arith.constant 0 : index
    %c0_77 = arith.constant 0 : index
    %c0_78 = arith.constant 0 : index
    %127 = vector.load %arg11[%c0_76, %c0_77, %c0_78] : memref<3x32x32xf32, #tpu.memory_space<vmem>>, vector<3x32x32xf32>
    %cst_79 = arith.constant 0.000000e+00 : f32
    %128 = vector.broadcast %cst_79 : f32 to vector<16x32xf32>
    %c0_80 = arith.constant 0 : index
    %c0_81 = arith.constant 0 : index
    %c0_82 = arith.constant 0 : index
    %129 = vector.load %arg35[%c0_80, %c0_81, %c0_82] : memref<2x10x32xf32, #tpu.memory_space<vmem>>, vector<2x10x32xf32>
    %130 = vector.extract_strided_slice %129 {offsets = [0, 0, 0], sizes = [2, 8, 32], strides = [1, 1, 1]} : vector<2x10x32xf32> to vector<2x8x32xf32>
    %131 = vector.shape_cast %130 : vector<2x8x32xf32> to vector<16x32xf32>
    %132 = arith.truncf %131 : vector<16x32xf32> to vector<16x32xbf16>
    %133 = vector.extract_strided_slice %127 {offsets = [0, 0, 0], sizes = [1, 32, 32], strides = [1, 1, 1]} : vector<3x32x32xf32> to vector<1x32x32xf32>
    %134 = vector.shape_cast %133 : vector<1x32x32xf32> to vector<32x32xf32>
    %135 = arith.truncf %134 : vector<32x32xf32> to vector<32x32xbf16>
    %cst_83 = arith.constant dense<0.000000e+00> : vector<16x32xf32>
    %136 = tpu.matmul %132, %135, %cst_83 {dimension_numbers = #tpu.dot_dimension_numbers<[1], [0], [0], [1], [0, 0, 1, 1], [], []>} : vector<16x32xbf16>, vector<32x32xbf16>, vector<16x32xf32> -> vector<16x32xf32>
    %137 = arith.addf %128, %136 : vector<16x32xf32>
    %138 = vector.extract_strided_slice %129 {offsets = [0, 1, 0], sizes = [2, 8, 32], strides = [1, 1, 1]} : vector<2x10x32xf32> to vector<2x8x32xf32>
    %139 = vector.shape_cast %138 : vector<2x8x32xf32> to vector<16x32xf32>
    %140 = arith.truncf %139 : vector<16x32xf32> to vector<16x32xbf16>
    %141 = vector.extract_strided_slice %127 {offsets = [1, 0, 0], sizes = [1, 32, 32], strides = [1, 1, 1]} : vector<3x32x32xf32> to vector<1x32x32xf32>
    %142 = vector.shape_cast %141 : vector<1x32x32xf32> to vector<32x32xf32>
    %143 = arith.truncf %142 : vector<32x32xf32> to vector<32x32xbf16>
    %cst_84 = arith.constant dense<0.000000e+00> : vector<16x32xf32>
    %144 = tpu.matmul %140, %143, %cst_84 {dimension_numbers = #tpu.dot_dimension_numbers<[1], [0], [0], [1], [0, 0, 1, 1], [], []>} : vector<16x32xbf16>, vector<32x32xbf16>, vector<16x32xf32> -> vector<16x32xf32>
    %145 = arith.addf %137, %144 : vector<16x32xf32>
    %146 = vector.extract_strided_slice %129 {offsets = [0, 2, 0], sizes = [2, 8, 32], strides = [1, 1, 1]} : vector<2x10x32xf32> to vector<2x8x32xf32>
    %147 = vector.shape_cast %146 : vector<2x8x32xf32> to vector<16x32xf32>
    %148 = arith.truncf %147 : vector<16x32xf32> to vector<16x32xbf16>
    %149 = vector.extract_strided_slice %127 {offsets = [2, 0, 0], sizes = [1, 32, 32], strides = [1, 1, 1]} : vector<3x32x32xf32> to vector<1x32x32xf32>
    %150 = vector.shape_cast %149 : vector<1x32x32xf32> to vector<32x32xf32>
    %151 = arith.truncf %150 : vector<32x32xf32> to vector<32x32xbf16>
    %cst_85 = arith.constant dense<0.000000e+00> : vector<16x32xf32>
    %152 = tpu.matmul %148, %151, %cst_85 {dimension_numbers = #tpu.dot_dimension_numbers<[1], [0], [0], [1], [0, 0, 1, 1], [], []>} : vector<16x32xbf16>, vector<32x32xbf16>, vector<16x32xf32> -> vector<16x32xf32>
    %153 = arith.addf %145, %152 : vector<16x32xf32>
    %c0_86 = arith.constant 0 : index
    %c0_87 = arith.constant 0 : index
    %154 = vector.load %arg12[%c0_86, %c0_87] : memref<1x32xf32, #tpu.memory_space<vmem>>, vector<1x32xf32>
    %155 = vector.broadcast %154 : vector<1x32xf32> to vector<16x32xf32>
    %156 = arith.mulf %153, %155 : vector<16x32xf32>
    %c0_88 = arith.constant 0 : index
    %c0_89 = arith.constant 0 : index
    %157 = vector.load %arg13[%c0_88, %c0_89] : memref<1x32xf32, #tpu.memory_space<vmem>>, vector<1x32xf32>
    %158 = vector.broadcast %157 : vector<1x32xf32> to vector<16x32xf32>
    %159 = arith.addf %156, %158 : vector<16x32xf32>
    %cst_90 = arith.constant 0.000000e+00 : f32
    %160 = vector.broadcast %cst_90 : f32 to vector<16x32xf32>
    %161 = arith.maximumf %159, %160 : vector<16x32xf32>
    %162 = vector.shape_cast %161 : vector<16x32xf32> to vector<2x8x32xf32>
    %163 = vector.shape_cast %162 : vector<2x8x32xf32> to vector<2x4x2x32xf32>
    %cst_91 = arith.constant dense<0xFF800000> : vector<2x4x32xf32>
    %164 = vector.multi_reduction <maximumf>, %163, %cst_91 [2] : vector<2x4x2x32xf32> to vector<2x4x32xf32>
    %165 = vector.shape_cast %164 : vector<2x4x32xf32> to vector<8x32xf32>
    %166 = arith.truncf %165 : vector<8x32xf32> to vector<8x32xbf16>
    %c0_92 = arith.constant 0 : index
    %c0_93 = arith.constant 0 : index
    %167 = vector.load %arg14[%c0_92, %c0_93] : memref<32x96xf32, #tpu.memory_space<vmem>>, vector<32x96xf32>
    %168 = arith.truncf %167 : vector<32x96xf32> to vector<32x96xbf16>
    %cst_94 = arith.constant dense<0.000000e+00> : vector<8x96xf32>
    %169 = tpu.matmul %166, %168, %cst_94 {dimension_numbers = #tpu.dot_dimension_numbers<[1], [0], [0], [1], [0, 0, 1, 1], [], []>} : vector<8x32xbf16>, vector<32x96xbf16>, vector<8x96xf32> -> vector<8x96xf32>
    %c0_95 = arith.constant 0 : index
    %c0_96 = arith.constant 0 : index
    %170 = vector.load %arg15[%c0_95, %c0_96] : memref<1x96xf32, #tpu.memory_space<vmem>>, vector<1x96xf32>
    %171 = vector.broadcast %170 : vector<1x96xf32> to vector<8x96xf32>
    %172 = arith.addf %169, %171 : vector<8x96xf32>
    %173 = vector.extract_strided_slice %172 {offsets = [0, 0], sizes = [8, 32], strides = [1, 1]} : vector<8x96xf32> to vector<8x32xf32>
    %174 = vector.extract_strided_slice %172 {offsets = [0, 32], sizes = [8, 32], strides = [1, 1]} : vector<8x96xf32> to vector<8x32xf32>
    %175 = vector.extract_strided_slice %172 {offsets = [0, 64], sizes = [8, 32], strides = [1, 1]} : vector<8x96xf32> to vector<8x32xf32>
    %c0_97 = arith.constant 0 : index
    %c0_98 = arith.constant 0 : index
    %176 = vector.load %arg16[%c0_97, %c0_98] : memref<32x32xf32, #tpu.memory_space<vmem>>, vector<32x32xf32>
    %cst_99 = arith.constant 0.000000e+00 : f32
    %177 = vector.broadcast %cst_99 : f32 to vector<8x32xf32>
    %178 = vector.extract_strided_slice %173 {offsets = [0, 0], sizes = [8, 8], strides = [1, 1]} : vector<8x32xf32> to vector<8x8xf32>
    %179 = vector.shape_cast %178 : vector<8x8xf32> to vector<2x4x8xf32>
    %180 = arith.truncf %179 : vector<2x4x8xf32> to vector<2x4x8xbf16>
    %181 = vector.extract_strided_slice %174 {offsets = [0, 0], sizes = [8, 8], strides = [1, 1]} : vector<8x32xf32> to vector<8x8xf32>
    %182 = vector.shape_cast %181 : vector<8x8xf32> to vector<2x4x8xf32>
    %183 = arith.truncf %182 : vector<2x4x8xf32> to vector<2x4x8xbf16>
    %184 = vector.extract_strided_slice %175 {offsets = [0, 0], sizes = [8, 8], strides = [1, 1]} : vector<8x32xf32> to vector<8x8xf32>
    %185 = vector.shape_cast %184 : vector<8x8xf32> to vector<2x4x8xf32>
    %186 = arith.truncf %185 : vector<2x4x8xf32> to vector<2x4x8xbf16>
    "tpu.trace_start"() <{level = 10 : i32, message = "bsd,btd->bst"}> : () -> ()
    %cst_100 = arith.constant dense<0.000000e+00> : vector<2x4x4xf32>
    %187 = tpu.matmul %180, %183, %cst_100 {dimension_numbers = #tpu.dot_dimension_numbers<[2], [2], [1], [1], [0, 0, 0, 1, 1, 1], [0], [0]>} : vector<2x4x8xbf16>, vector<2x4x8xbf16>, vector<2x4x4xf32> -> vector<2x4x4xf32>
    "tpu.trace_stop"() : () -> ()
    %cst_101 = arith.constant 0.176776692 : f32
    %188 = vector.broadcast %cst_101 : f32 to vector<2x4x4xf32>
    %189 = arith.mulf %187, %188 : vector<2x4x4xf32>
    %cst_102 = arith.constant dense<0xFF800000> : vector<2x4xf32>
    %190 = vector.multi_reduction <maximumf>, %189, %cst_102 [2] : vector<2x4x4xf32> to vector<2x4xf32>
    %191 = vector.shape_cast %190 : vector<2x4xf32> to vector<2x4x1xf32>
    %192 = vector.broadcast %191 : vector<2x4x1xf32> to vector<2x4x4xf32>
    %193 = arith.subf %189, %192 : vector<2x4x4xf32>
    %194 = math.exp %193 : vector<2x4x4xf32>
    %cst_103 = arith.constant dense<0.000000e+00> : vector<2x4xf32>
    %195 = vector.multi_reduction <add>, %194, %cst_103 [2] : vector<2x4x4xf32> to vector<2x4xf32>
    %196 = vector.shape_cast %195 : vector<2x4xf32> to vector<2x4x1xf32>
    %197 = tpu.reciprocal %196 {approx = true} : vector<2x4x1xf32> -> vector<2x4x1xf32>
    %198 = vector.broadcast %197 : vector<2x4x1xf32> to vector<2x4x4xf32>
    %199 = arith.mulf %194, %198 : vector<2x4x4xf32>
    %200 = vector.shape_cast %199 : vector<2x4x4xf32> to vector<2x1x4x4xf32>
    %c0_104 = arith.constant 0 : index
    %c0_105 = arith.constant 0 : index
    %c0_106 = arith.constant 0 : index
    %c0_107 = arith.constant 0 : index
    %201 = vector.load %arg31[%c0_104, %c0_105, %c0_106, %c0_107] : memref<2x4x4x4xf32, #tpu.memory_space<vmem>>, vector<2x1x4x4xf32>
    tpu.vector_store %arg31[%c0_104, %c0_105, %c0_106, %c0_107], %200 {strides = array<i32>} : memref<2x4x4x4xf32, #tpu.memory_space<vmem>>, vector<2x1x4x4xf32>,
    %202 = arith.truncf %199 : vector<2x4x4xf32> to vector<2x4x4xbf16>
    "tpu.trace_start"() <{level = 10 : i32, message = "bst,btd->bsd"}> : () -> ()
    %cst_108 = arith.constant dense<0.000000e+00> : vector<2x4x8xf32>
    %203 = tpu.matmul %202, %186, %cst_108 {dimension_numbers = #tpu.dot_dimension_numbers<[2], [1], [1], [2], [0, 0, 0, 1, 1, 2], [0], [0]>} : vector<2x4x4xbf16>, vector<2x4x8xbf16>, vector<2x4x8xf32> -> vector<2x4x8xf32>
    "tpu.trace_stop"() : () -> ()
    %204 = vector.shape_cast %203 : vector<2x4x8xf32> to vector<8x8xf32>
    %205 = arith.truncf %204 : vector<8x8xf32> to vector<8x8xbf16>
    %206 = vector.extract_strided_slice %176 {offsets = [0, 0], sizes = [8, 32], strides = [1, 1]} : vector<32x32xf32> to vector<8x32xf32>
    %207 = arith.truncf %206 : vector<8x32xf32> to vector<8x32xbf16>
    %cst_109 = arith.constant dense<0.000000e+00> : vector<8x32xf32>
    %208 = tpu.matmul %205, %207, %cst_109 {dimension_numbers = #tpu.dot_dimension_numbers<[1], [0], [0], [1], [0, 0, 1, 1], [], []>} : vector<8x8xbf16>, vector<8x32xbf16>, vector<8x32xf32> -> vector<8x32xf32>
    %209 = arith.addf %177, %208 : vector<8x32xf32>
    %210 = vector.extract_strided_slice %173 {offsets = [0, 8], sizes = [8, 8], strides = [1, 1]} : vector<8x32xf32> to vector<8x8xf32>
    %211 = vector.shape_cast %210 : vector<8x8xf32> to vector<2x4x8xf32>
    %212 = arith.truncf %211 : vector<2x4x8xf32> to vector<2x4x8xbf16>
    %213 = vector.extract_strided_slice %174 {offsets = [0, 8], sizes = [8, 8], strides = [1, 1]} : vector<8x32xf32> to vector<8x8xf32>
    %214 = vector.shape_cast %213 : vector<8x8xf32> to vector<2x4x8xf32>
    %215 = arith.truncf %214 : vector<2x4x8xf32> to vector<2x4x8xbf16>
    %216 = vector.extract_strided_slice %175 {offsets = [0, 8], sizes = [8, 8], strides = [1, 1]} : vector<8x32xf32> to vector<8x8xf32>
    %217 = vector.shape_cast %216 : vector<8x8xf32> to vector<2x4x8xf32>
    %218 = arith.truncf %217 : vector<2x4x8xf32> to vector<2x4x8xbf16>
    "tpu.trace_start"() <{level = 10 : i32, message = "bsd,btd->bst"}> : () -> ()
    %cst_110 = arith.constant dense<0.000000e+00> : vector<2x4x4xf32>
    %219 = tpu.matmul %212, %215, %cst_110 {dimension_numbers = #tpu.dot_dimension_numbers<[2], [2], [1], [1], [0, 0, 0, 1, 1, 1], [0], [0]>} : vector<2x4x8xbf16>, vector<2x4x8xbf16>, vector<2x4x4xf32> -> vector<2x4x4xf32>
    "tpu.trace_stop"() : () -> ()
    %cst_111 = arith.constant 0.176776692 : f32
    %220 = vector.broadcast %cst_111 : f32 to vector<2x4x4xf32>
    %221 = arith.mulf %219, %220 : vector<2x4x4xf32>
    %cst_112 = arith.constant dense<0xFF800000> : vector<2x4xf32>
    %222 = vector.multi_reduction <maximumf>, %221, %cst_112 [2] : vector<2x4x4xf32> to vector<2x4xf32>
    %223 = vector.shape_cast %222 : vector<2x4xf32> to vector<2x4x1xf32>
    %224 = vector.broadcast %223 : vector<2x4x1xf32> to vector<2x4x4xf32>
    %225 = arith.subf %221, %224 : vector<2x4x4xf32>
    %226 = math.exp %225 : vector<2x4x4xf32>
    %cst_113 = arith.constant dense<0.000000e+00> : vector<2x4xf32>
    %227 = vector.multi_reduction <add>, %226, %cst_113 [2] : vector<2x4x4xf32> to vector<2x4xf32>
    %228 = vector.shape_cast %227 : vector<2x4xf32> to vector<2x4x1xf32>
    %229 = tpu.reciprocal %228 {approx = true} : vector<2x4x1xf32> -> vector<2x4x1xf32>
    %230 = vector.broadcast %229 : vector<2x4x1xf32> to vector<2x4x4xf32>
    %231 = arith.mulf %226, %230 : vector<2x4x4xf32>
    %232 = vector.shape_cast %231 : vector<2x4x4xf32> to vector<2x1x4x4xf32>
    %c0_114 = arith.constant 0 : index
    %c1_115 = arith.constant 1 : index
    %c0_116 = arith.constant 0 : index
    %c0_117 = arith.constant 0 : index
    %233 = vector.load %arg31[%c0_114, %c1_115, %c0_116, %c0_117] : memref<2x4x4x4xf32, #tpu.memory_space<vmem>>, vector<2x1x4x4xf32>
    tpu.vector_store %arg31[%c0_114, %c1_115, %c0_116, %c0_117], %232 {strides = array<i32>} : memref<2x4x4x4xf32, #tpu.memory_space<vmem>>, vector<2x1x4x4xf32>,
    %234 = arith.truncf %231 : vector<2x4x4xf32> to vector<2x4x4xbf16>
    "tpu.trace_start"() <{level = 10 : i32, message = "bst,btd->bsd"}> : () -> ()
    %cst_118 = arith.constant dense<0.000000e+00> : vector<2x4x8xf32>
    %235 = tpu.matmul %234, %218, %cst_118 {dimension_numbers = #tpu.dot_dimension_numbers<[2], [1], [1], [2], [0, 0, 0, 1, 1, 2], [0], [0]>} : vector<2x4x4xbf16>, vector<2x4x8xbf16>, vector<2x4x8xf32> -> vector<2x4x8xf32>
    "tpu.trace_stop"() : () -> ()
    %236 = vector.shape_cast %235 : vector<2x4x8xf32> to vector<8x8xf32>
    %237 = arith.truncf %236 : vector<8x8xf32> to vector<8x8xbf16>
    %238 = vector.extract_strided_slice %176 {offsets = [8, 0], sizes = [8, 32], strides = [1, 1]} : vector<32x32xf32> to vector<8x32xf32>
    %239 = arith.truncf %238 : vector<8x32xf32> to vector<8x32xbf16>
    %cst_119 = arith.constant dense<0.000000e+00> : vector<8x32xf32>
    %240 = tpu.matmul %237, %239, %cst_119 {dimension_numbers = #tpu.dot_dimension_numbers<[1], [0], [0], [1], [0, 0, 1, 1], [], []>} : vector<8x8xbf16>, vector<8x32xbf16>, vector<8x32xf32> -> vector<8x32xf32>
    %241 = arith.addf %209, %240 : vector<8x32xf32>
    %242 = vector.extract_strided_slice %173 {offsets = [0, 16], sizes = [8, 8], strides = [1, 1]} : vector<8x32xf32> to vector<8x8xf32>
    %243 = vector.shape_cast %242 : vector<8x8xf32> to vector<2x4x8xf32>
    %244 = arith.truncf %243 : vector<2x4x8xf32> to vector<2x4x8xbf16>
    %245 = vector.extract_strided_slice %174 {offsets = [0, 16], sizes = [8, 8], strides = [1, 1]} : vector<8x32xf32> to vector<8x8xf32>
    %246 = vector.shape_cast %245 : vector<8x8xf32> to vector<2x4x8xf32>
    %247 = arith.truncf %246 : vector<2x4x8xf32> to vector<2x4x8xbf16>
    %248 = vector.extract_strided_slice %175 {offsets = [0, 16], sizes = [8, 8], strides = [1, 1]} : vector<8x32xf32> to vector<8x8xf32>
    %249 = vector.shape_cast %248 : vector<8x8xf32> to vector<2x4x8xf32>
    %250 = arith.truncf %249 : vector<2x4x8xf32> to vector<2x4x8xbf16>
    "tpu.trace_start"() <{level = 10 : i32, message = "bsd,btd->bst"}> : () -> ()
    %cst_120 = arith.constant dense<0.000000e+00> : vector<2x4x4xf32>
    %251 = tpu.matmul %244, %247, %cst_120 {dimension_numbers = #tpu.dot_dimension_numbers<[2], [2], [1], [1], [0, 0, 0, 1, 1, 1], [0], [0]>} : vector<2x4x8xbf16>, vector<2x4x8xbf16>, vector<2x4x4xf32> -> vector<2x4x4xf32>
    "tpu.trace_stop"() : () -> ()
    %cst_121 = arith.constant 0.176776692 : f32
    %252 = vector.broadcast %cst_121 : f32 to vector<2x4x4xf32>
    %253 = arith.mulf %251, %252 : vector<2x4x4xf32>
    %cst_122 = arith.constant dense<0xFF800000> : vector<2x4xf32>
    %254 = vector.multi_reduction <maximumf>, %253, %cst_122 [2] : vector<2x4x4xf32> to vector<2x4xf32>
    %255 = vector.shape_cast %254 : vector<2x4xf32> to vector<2x4x1xf32>
    %256 = vector.broadcast %255 : vector<2x4x1xf32> to vector<2x4x4xf32>
    %257 = arith.subf %253, %256 : vector<2x4x4xf32>
    %258 = math.exp %257 : vector<2x4x4xf32>
    %cst_123 = arith.constant dense<0.000000e+00> : vector<2x4xf32>
    %259 = vector.multi_reduction <add>, %258, %cst_123 [2] : vector<2x4x4xf32> to vector<2x4xf32>
    %260 = vector.shape_cast %259 : vector<2x4xf32> to vector<2x4x1xf32>
    %261 = tpu.reciprocal %260 {approx = true} : vector<2x4x1xf32> -> vector<2x4x1xf32>
    %262 = vector.broadcast %261 : vector<2x4x1xf32> to vector<2x4x4xf32>
    %263 = arith.mulf %258, %262 : vector<2x4x4xf32>
    %264 = vector.shape_cast %263 : vector<2x4x4xf32> to vector<2x1x4x4xf32>
    %c0_124 = arith.constant 0 : index
    %c2 = arith.constant 2 : index
    %c0_125 = arith.constant 0 : index
    %c0_126 = arith.constant 0 : index
    %265 = vector.load %arg31[%c0_124, %c2, %c0_125, %c0_126] : memref<2x4x4x4xf32, #tpu.memory_space<vmem>>, vector<2x1x4x4xf32>
    tpu.vector_store %arg31[%c0_124, %c2, %c0_125, %c0_126], %264 {strides = array<i32>} : memref<2x4x4x4xf32, #tpu.memory_space<vmem>>, vector<2x1x4x4xf32>,
    %266 = arith.truncf %263 : vector<2x4x4xf32> to vector<2x4x4xbf16>
    "tpu.trace_start"() <{level = 10 : i32, message = "bst,btd->bsd"}> : () -> ()
    %cst_127 = arith.constant dense<0.000000e+00> : vector<2x4x8xf32>
    %267 = tpu.matmul %266, %250, %cst_127 {dimension_numbers = #tpu.dot_dimension_numbers<[2], [1], [1], [2], [0, 0, 0, 1, 1, 2], [0], [0]>} : vector<2x4x4xbf16>, vector<2x4x8xbf16>, vector<2x4x8xf32> -> vector<2x4x8xf32>
    "tpu.trace_stop"() : () -> ()
    %268 = vector.shape_cast %267 : vector<2x4x8xf32> to vector<8x8xf32>
    %269 = arith.truncf %268 : vector<8x8xf32> to vector<8x8xbf16>
    %270 = vector.extract_strided_slice %176 {offsets = [16, 0], sizes = [8, 32], strides = [1, 1]} : vector<32x32xf32> to vector<8x32xf32>
    %271 = arith.truncf %270 : vector<8x32xf32> to vector<8x32xbf16>
    %cst_128 = arith.constant dense<0.000000e+00> : vector<8x32xf32>
    %272 = tpu.matmul %269, %271, %cst_128 {dimension_numbers = #tpu.dot_dimension_numbers<[1], [0], [0], [1], [0, 0, 1, 1], [], []>} : vector<8x8xbf16>, vector<8x32xbf16>, vector<8x32xf32> -> vector<8x32xf32>
    %273 = arith.addf %241, %272 : vector<8x32xf32>
    %274 = vector.extract_strided_slice %173 {offsets = [0, 24], sizes = [8, 8], strides = [1, 1]} : vector<8x32xf32> to vector<8x8xf32>
    %275 = vector.shape_cast %274 : vector<8x8xf32> to vector<2x4x8xf32>
    %276 = arith.truncf %275 : vector<2x4x8xf32> to vector<2x4x8xbf16>
    %277 = vector.extract_strided_slice %174 {offsets = [0, 24], sizes = [8, 8], strides = [1, 1]} : vector<8x32xf32> to vector<8x8xf32>
    %278 = vector.shape_cast %277 : vector<8x8xf32> to vector<2x4x8xf32>
    %279 = arith.truncf %278 : vector<2x4x8xf32> to vector<2x4x8xbf16>
    %280 = vector.extract_strided_slice %175 {offsets = [0, 24], sizes = [8, 8], strides = [1, 1]} : vector<8x32xf32> to vector<8x8xf32>
    %281 = vector.shape_cast %280 : vector<8x8xf32> to vector<2x4x8xf32>
    %282 = arith.truncf %281 : vector<2x4x8xf32> to vector<2x4x8xbf16>
    "tpu.trace_start"() <{level = 10 : i32, message = "bsd,btd->bst"}> : () -> ()
    %cst_129 = arith.constant dense<0.000000e+00> : vector<2x4x4xf32>
    %283 = tpu.matmul %276, %279, %cst_129 {dimension_numbers = #tpu.dot_dimension_numbers<[2], [2], [1], [1], [0, 0, 0, 1, 1, 1], [0], [0]>} : vector<2x4x8xbf16>, vector<2x4x8xbf16>, vector<2x4x4xf32> -> vector<2x4x4xf32>
    "tpu.trace_stop"() : () -> ()
    %cst_130 = arith.constant 0.176776692 : f32
    %284 = vector.broadcast %cst_130 : f32 to vector<2x4x4xf32>
    %285 = arith.mulf %283, %284 : vector<2x4x4xf32>
    %cst_131 = arith.constant dense<0xFF800000> : vector<2x4xf32>
    %286 = vector.multi_reduction <maximumf>, %285, %cst_131 [2] : vector<2x4x4xf32> to vector<2x4xf32>
    %287 = vector.shape_cast %286 : vector<2x4xf32> to vector<2x4x1xf32>
    %288 = vector.broadcast %287 : vector<2x4x1xf32> to vector<2x4x4xf32>
    %289 = arith.subf %285, %288 : vector<2x4x4xf32>
    %290 = math.exp %289 : vector<2x4x4xf32>
    %cst_132 = arith.constant dense<0.000000e+00> : vector<2x4xf32>
    %291 = vector.multi_reduction <add>, %290, %cst_132 [2] : vector<2x4x4xf32> to vector<2x4xf32>
    %292 = vector.shape_cast %291 : vector<2x4xf32> to vector<2x4x1xf32>
    %293 = tpu.reciprocal %292 {approx = true} : vector<2x4x1xf32> -> vector<2x4x1xf32>
    %294 = vector.broadcast %293 : vector<2x4x1xf32> to vector<2x4x4xf32>
    %295 = arith.mulf %290, %294 : vector<2x4x4xf32>
    %296 = vector.shape_cast %295 : vector<2x4x4xf32> to vector<2x1x4x4xf32>
    %c0_133 = arith.constant 0 : index
    %c3 = arith.constant 3 : index
    %c0_134 = arith.constant 0 : index
    %c0_135 = arith.constant 0 : index
    %297 = vector.load %arg31[%c0_133, %c3, %c0_134, %c0_135] : memref<2x4x4x4xf32, #tpu.memory_space<vmem>>, vector<2x1x4x4xf32>
    tpu.vector_store %arg31[%c0_133, %c3, %c0_134, %c0_135], %296 {strides = array<i32>} : memref<2x4x4x4xf32, #tpu.memory_space<vmem>>, vector<2x1x4x4xf32>,
    %298 = arith.truncf %295 : vector<2x4x4xf32> to vector<2x4x4xbf16>
    "tpu.trace_start"() <{level = 10 : i32, message = "bst,btd->bsd"}> : () -> ()
    %cst_136 = arith.constant dense<0.000000e+00> : vector<2x4x8xf32>
    %299 = tpu.matmul %298, %282, %cst_136 {dimension_numbers = #tpu.dot_dimension_numbers<[2], [1], [1], [2], [0, 0, 0, 1, 1, 2], [0], [0]>} : vector<2x4x4xbf16>, vector<2x4x8xbf16>, vector<2x4x8xf32> -> vector<2x4x8xf32>
    "tpu.trace_stop"() : () -> ()
    %300 = vector.shape_cast %299 : vector<2x4x8xf32> to vector<8x8xf32>
    %301 = arith.truncf %300 : vector<8x8xf32> to vector<8x8xbf16>
    %302 = vector.extract_strided_slice %176 {offsets = [24, 0], sizes = [8, 32], strides = [1, 1]} : vector<32x32xf32> to vector<8x32xf32>
    %303 = arith.truncf %302 : vector<8x32xf32> to vector<8x32xbf16>
    %cst_137 = arith.constant dense<0.000000e+00> : vector<8x32xf32>
    %304 = tpu.matmul %301, %303, %cst_137 {dimension_numbers = #tpu.dot_dimension_numbers<[1], [0], [0], [1], [0, 0, 1, 1], [], []>} : vector<8x8xbf16>, vector<8x32xbf16>, vector<8x32xf32> -> vector<8x32xf32>
    %305 = arith.addf %273, %304 : vector<8x32xf32>
    %c0_138 = arith.constant 0 : index
    %c0_139 = arith.constant 0 : index
    %306 = vector.load %arg17[%c0_138, %c0_139] : memref<1x32xf32, #tpu.memory_space<vmem>>, vector<1x32xf32>
    %307 = vector.broadcast %306 : vector<1x32xf32> to vector<8x32xf32>
    %308 = arith.addf %305, %307 : vector<8x32xf32>
    %309 = vector.shape_cast %308 : vector<8x32xf32> to vector<2x4x32xf32>
    %cst_140 = arith.constant dense<0.000000e+00> : vector<2x32xf32>
    %310 = vector.multi_reduction <add>, %309, %cst_140 [1] : vector<2x4x32xf32> to vector<2x32xf32>
    %cst_141 = arith.constant 4.000000e+00 : f32
    %311 = vector.broadcast %cst_141 : f32 to vector<2x32xf32>
    %312 = arith.divf %310, %311 : vector<2x32xf32>
    %c0_142 = arith.constant 0 : index
    %c0_143 = arith.constant 0 : index
    %313 = vector.load %arg1[%c0_142, %c0_143] : memref<2x7xf32, #tpu.memory_space<vmem>>, vector<2x7xf32>
    %c0_144 = arith.constant 0 : index
    %c0_145 = arith.constant 0 : index
    %314 = vector.load %arg18[%c0_144, %c0_145] : memref<7x64xf32, #tpu.memory_space<vmem>>, vector<7x64xf32>
    %cst_146 = arith.constant dense<0.000000e+00> : vector<2x64xf32>
    %315 = tpu.matmul %313, %314, %cst_146 {dimension_numbers = #tpu.dot_dimension_numbers<[1], [0], [0], [1], [0, 0, 1, 1], [], []>, precision = #tpu.contract_precision<fp32>} : vector<2x7xf32>, vector<7x64xf32>, vector<2x64xf32> -> vector<2x64xf32>
    %c0_147 = arith.constant 0 : index
    %c0_148 = arith.constant 0 : index
    %316 = vector.load %arg19[%c0_147, %c0_148] : memref<1x64xf32, #tpu.memory_space<vmem>>, vector<1x64xf32>
    %317 = vector.broadcast %316 : vector<1x64xf32> to vector<2x64xf32>
    %318 = arith.addf %315, %317 : vector<2x64xf32>
    %cst_149 = arith.constant 0.000000e+00 : f32
    %319 = vector.broadcast %cst_149 : f32 to vector<2x64xf32>
    %320 = arith.maximumf %318, %319 : vector<2x64xf32>
    %c0_150 = arith.constant 0 : index
    %c0_151 = arith.constant 0 : index
    %321 = vector.load %arg20[%c0_150, %c0_151] : memref<32x128xf32, #tpu.memory_space<vmem>>, vector<32x128xf32>
    %cst_152 = arith.constant dense<0.000000e+00> : vector<2x128xf32>
    %322 = tpu.matmul %312, %321, %cst_152 {dimension_numbers = #tpu.dot_dimension_numbers<[1], [0], [0], [1], [0, 0, 1, 1], [], []>, precision = #tpu.contract_precision<fp32>} : vector<2x32xf32>, vector<32x128xf32>, vector<2x128xf32> -> vector<2x128xf32>
    %c0_153 = arith.constant 0 : index
    %c0_154 = arith.constant 0 : index
    %323 = vector.load %arg21[%c0_153, %c0_154] : memref<64x128xf32, #tpu.memory_space<vmem>>, vector<64x128xf32>
    %cst_155 = arith.constant dense<0.000000e+00> : vector<2x128xf32>
    %324 = tpu.matmul %320, %323, %cst_155 {dimension_numbers = #tpu.dot_dimension_numbers<[1], [0], [0], [1], [0, 0, 1, 1], [], []>, precision = #tpu.contract_precision<fp32>} : vector<2x64xf32>, vector<64x128xf32>, vector<2x128xf32> -> vector<2x128xf32>
    %325 = arith.addf %322, %324 : vector<2x128xf32>
    %c0_156 = arith.constant 0 : index
    %c0_157 = arith.constant 0 : index
    %326 = vector.load %arg22[%c0_156, %c0_157] : memref<1x128xf32, #tpu.memory_space<vmem>>, vector<1x128xf32>
    %327 = vector.broadcast %326 : vector<1x128xf32> to vector<2x128xf32>
    %328 = arith.addf %325, %327 : vector<2x128xf32>
    %cst_158 = arith.constant 0.000000e+00 : f32
    %329 = vector.broadcast %cst_158 : f32 to vector<2x128xf32>
    %330 = arith.maximumf %328, %329 : vector<2x128xf32>
    %c0_159 = arith.constant 0 : index
    %c0_160 = arith.constant 0 : index
    %331 = vector.load %arg23[%c0_159, %c0_160] : memref<128x64xf32, #tpu.memory_space<vmem>>, vector<128x64xf32>
    %cst_161 = arith.constant dense<0.000000e+00> : vector<2x64xf32>
    %332 = tpu.matmul %330, %331, %cst_161 {dimension_numbers = #tpu.dot_dimension_numbers<[1], [0], [0], [1], [0, 0, 1, 1], [], []>, precision = #tpu.contract_precision<fp32>} : vector<2x128xf32>, vector<128x64xf32>, vector<2x64xf32> -> vector<2x64xf32>
    %c0_162 = arith.constant 0 : index
    %c0_163 = arith.constant 0 : index
    %333 = vector.load %arg24[%c0_162, %c0_163] : memref<1x64xf32, #tpu.memory_space<vmem>>, vector<1x64xf32>
    %334 = vector.broadcast %333 : vector<1x64xf32> to vector<2x64xf32>
    %335 = arith.addf %332, %334 : vector<2x64xf32>
    %cst_164 = arith.constant 0.000000e+00 : f32
    %336 = vector.broadcast %cst_164 : f32 to vector<2x64xf32>
    %337 = arith.maximumf %335, %336 : vector<2x64xf32>
    %c0_165 = arith.constant 0 : index
    %c0_166 = arith.constant 0 : index
    %338 = vector.load %arg25[%c0_165, %c0_166] : memref<64x32xf32, #tpu.memory_space<vmem>>, vector<64x32xf32>
    %cst_167 = arith.constant dense<0.000000e+00> : vector<2x32xf32>
    %339 = tpu.matmul %337, %338, %cst_167 {dimension_numbers = #tpu.dot_dimension_numbers<[1], [0], [0], [1], [0, 0, 1, 1], [], []>, precision = #tpu.contract_precision<fp32>} : vector<2x64xf32>, vector<64x32xf32>, vector<2x32xf32> -> vector<2x32xf32>
    %c0_168 = arith.constant 0 : index
    %c0_169 = arith.constant 0 : index
    %340 = vector.load %arg26[%c0_168, %c0_169] : memref<1x32xf32, #tpu.memory_space<vmem>>, vector<1x32xf32>
    %341 = vector.broadcast %340 : vector<1x32xf32> to vector<2x32xf32>
    %342 = arith.addf %339, %341 : vector<2x32xf32>
    %cst_170 = arith.constant 0.000000e+00 : f32
    %343 = vector.broadcast %cst_170 : f32 to vector<2x32xf32>
    %344 = arith.maximumf %342, %343 : vector<2x32xf32>
    %c0_171 = arith.constant 0 : index
    %c0_172 = arith.constant 0 : index
    %345 = vector.load %arg27[%c0_171, %c0_172] : memref<32x14xf32, #tpu.memory_space<vmem>>, vector<32x14xf32>
    %cst_173 = arith.constant dense<0.000000e+00> : vector<2x14xf32>
    %346 = tpu.matmul %344, %345, %cst_173 {dimension_numbers = #tpu.dot_dimension_numbers<[1], [0], [0], [1], [0, 0, 1, 1], [], []>, precision = #tpu.contract_precision<fp32>} : vector<2x32xf32>, vector<32x14xf32>, vector<2x14xf32> -> vector<2x14xf32>
    %c0_174 = arith.constant 0 : index
    %c0_175 = arith.constant 0 : index
    %347 = vector.load %arg28[%c0_174, %c0_175] : memref<1x14xf32, #tpu.memory_space<vmem>>, vector<1x14xf32>
    %348 = vector.broadcast %347 : vector<1x14xf32> to vector<2x14xf32>
    %349 = arith.addf %346, %348 : vector<2x14xf32>
    %350 = vector.extract_strided_slice %349 {offsets = [0, 0], sizes = [2, 7], strides = [1, 1]} : vector<2x14xf32> to vector<2x7xf32>
    %351 = vector.extract_strided_slice %349 {offsets = [0, 7], sizes = [2, 7], strides = [1, 1]} : vector<2x14xf32> to vector<2x7xf32>
    %cst_176 = arith.constant dense<0xFF800000> : vector<2xf32>
    %352 = vector.multi_reduction <maximumf>, %350, %cst_176 [1] : vector<2x7xf32> to vector<2xf32>
    %353 = vector.shape_cast %352 : vector<2xf32> to vector<2x1xf32>
    %354 = vector.broadcast %353 : vector<2x1xf32> to vector<2x7xf32>
    %355 = arith.subf %350, %354 : vector<2x7xf32>
    %356 = math.exp %355 : vector<2x7xf32>
    %cst_177 = arith.constant dense<0.000000e+00> : vector<2xf32>
    %357 = vector.multi_reduction <add>, %356, %cst_177 [1] : vector<2x7xf32> to vector<2xf32>
    %358 = vector.shape_cast %357 : vector<2xf32> to vector<2x1xf32>
    %359 = tpu.reciprocal %358 {approx = true} : vector<2x1xf32> -> vector<2x1xf32>
    %360 = vector.broadcast %359 : vector<2x1xf32> to vector<2x7xf32>
    %361 = arith.mulf %356, %360 : vector<2x7xf32>
    %c0_178 = arith.constant 0 : index
    %c0_179 = arith.constant 0 : index
    %362 = vector.load %arg29[%c0_178, %c0_179] : memref<2x7xf32, #tpu.memory_space<vmem>>, vector<2x7xf32>
    tpu.vector_store %arg29[%c0_178, %c0_179], %361 {strides = array<i32>} : memref<2x7xf32, #tpu.memory_space<vmem>>, vector<2x7xf32>,
    %cst_180 = arith.constant 0.000000e+00 : f32
    %363 = vector.broadcast %cst_180 : f32 to vector<2x7xf32>
    %364 = arith.maximumf %351, %363 : vector<2x7xf32>
    %365 = math.absf %351 : vector<2x7xf32>
    %cst_181 = arith.constant 0.000000e+00 : f32
    %366 = vector.broadcast %cst_181 : f32 to vector<2x7xf32>
    %367 = arith.subf %366, %365 : vector<2x7xf32>
    %368 = math.exp %367 : vector<2x7xf32>
    %cst_182 = arith.constant 1.000000e+00 : f32
    %369 = vector.broadcast %cst_182 : f32 to vector<2x7xf32>
    %370 = arith.addf %369, %368 : vector<2x7xf32>
    %371 = math.log %370 : vector<2x7xf32>
    %372 = arith.addf %364, %371 : vector<2x7xf32>
    %c0_183 = arith.constant 0 : index
    %c0_184 = arith.constant 0 : index
    %373 = vector.load %arg30[%c0_183, %c0_184] : memref<2x7xf32, #tpu.memory_space<vmem>>, vector<2x7xf32>
    tpu.vector_store %arg30[%c0_183, %c0_184], %372 {strides = array<i32>} : memref<2x7xf32, #tpu.memory_space<vmem>>, vector<2x7xf32>,
    return
  }
}

</mosaic_0001>

<llo_original>
// kernel: _lambda_.1
$region0: #{_lambda_.1}
  #allocation0 [shape = 'u32[]', space=smem, size = 0x4, offset = 0x4, fixed_abs, tag = 'smem constant byte address 0x4 - core index']
  #allocation1 [shape = 'u32[72,128]{1,0:T(1,128)}', space=vmem, size = 0x9000, scoped, tag = 'internal scratch']
  #allocation2 [shape = 'f32[2,66,2]{2,1,0:T(8,128)}', space=vmem, size = 0x12000, scoped, tag = 'scratch operand']
  #allocation3 [shape = 'f32[2,34,8]{2,1,0:T(8,128)}', space=vmem, size = 0xa000, scoped, tag = 'scratch operand']
  #allocation4 [shape = 'f32[2,18,16]{2,1,0:T(8,128)}', space=vmem, size = 0x6000, scoped, tag = 'scratch operand']
  #allocation5 [shape = 'f32[2,10,32]{2,1,0:T(8,128)}', space=vmem, size = 0x4000, scoped, tag = 'scratch operand']
  %s0 = inlined_call_operand.smem [shape: u32[32], index: -1, kind: input, shape index: {}]
  %s1 = sld [smem:[%s0]]
  %s2 = scalar_lea.smem %s0, 1
  %s3 = sld [smem:[%s2]]
  %s4 = scalar_lea.smem %s0, 2
  %s5 = sld [smem:[%s4]]
  %s6 = scalar_lea.smem %s0, 3
  %s7 = sld [smem:[%s6]]
  %s8 = scalar_lea.smem %s0, 4
  %s9 = sld [smem:[%s8]]
  %s10 = scalar_lea.smem %s0, 5
  %s11 = sld [smem:[%s10]]
  %s12 = scalar_lea.smem %s0, 6
  %s13 = sld [smem:[%s12]]
  %s14 = scalar_lea.smem %s0, 7
  %s15 = sld [smem:[%s14]]
  %s16 = scalar_lea.smem %s0, 8
  %s17 = sld [smem:[%s16]]
  %s18 = scalar_lea.smem %s0, 9
  %s19 = sld [smem:[%s18]]
  %s20 = scalar_lea.smem %s0, 10
  %s21 = sld [smem:[%s20]]
  %s22 = scalar_lea.smem %s0, 11
  %s23 = sld [smem:[%s22]]
  %s24 = scalar_lea.smem %s0, 12
  %s25 = sld [smem:[%s24]]
  %s26 = scalar_lea.smem %s0, 13
  %s27 = sld [smem:[%s26]]
  %s28 = scalar_lea.smem %s0, 14
  %s29 = sld [smem:[%s28]]
  %s30 = scalar_lea.smem %s0, 15
  %s31 = sld [smem:[%s30]]
  %s32 = scalar_lea.smem %s0, 16
  %s33 = sld [smem:[%s32]]
  %s34 = scalar_lea.smem %s0, 17
  %s35 = sld [smem:[%s34]]
  %s36 = scalar_lea.smem %s0, 18
  %s37 = sld [smem:[%s36]]
  %s38 = scalar_lea.smem %s0, 19
  %s39 = sld [smem:[%s38]]
  %s40 = scalar_lea.smem %s0, 20
  %s41 = sld [smem:[%s40]]
  %s42 = scalar_lea.smem %s0, 21
  %s43 = sld [smem:[%s42]]
  %s44 = scalar_lea.smem %s0, 22
  %s45 = sld [smem:[%s44]]
  %s46 = scalar_lea.smem %s0, 23
  %s47 = sld [smem:[%s46]]
  %s48 = scalar_lea.smem %s0, 24
  %s49 = sld [smem:[%s48]]
  %s50 = scalar_lea.smem %s0, 25
  %s51 = sld [smem:[%s50]]
  %s52 = scalar_lea.smem %s0, 26
  %s53 = sld [smem:[%s52]]
  %s54 = scalar_lea.smem %s0, 27
  %s55 = sld [smem:[%s54]]
  %s56 = scalar_lea.smem %s0, 28
  %s57 = sld [smem:[%s56]]
  %s58 = scalar_lea.smem %s0, 29
  %s59 = sld [smem:[%s58]]
  %s60 = scalar_lea.smem %s0, 30
  %s61 = sld [smem:[%s60]]
  %s62 = scalar_lea.smem %s0, 31
  %s63 = sld [smem:[%s62]]
  %64 = xla_tuple %s59, %s61, %s63
  %s65 = sld [smem:[#allocation0]]
  $region206: #{_lambda_.1} parent=0
    _
  %s67 = ssub.s32 1, %s65
  %s68 = scalar_select 0, %s67, %s65
  $region1: #{_lambda_.1} parent=0
    #allocation6 [shape = 'u8[3072]{0}', space=vmem, size = 0xc00, scoped, tag = 'input window, operand 2, single buffered']
    #allocation7 [shape = 's32[1]{0}', space=sflag, size = 0x4, scoped, tag = 'scoped memory for _lambda_.1']
    #allocation8 [shape = 's32[1]{0}', space=sflag, size = 0x4, scoped, tag = 'scoped memory for _lambda_.1']
    #allocation9 [shape = 'u8[512]{0}', space=vmem, size = 0x400, scoped, tag = 'input window, operand 3, single buffered']
    #allocation10 [shape = 's32[1]{0}', space=sflag, size = 0x4, scoped, tag = 'scoped memory for _lambda_.1']
    #allocation11 [shape = 'u8[512]{0}', space=vmem, size = 0x400, scoped, tag = 'input window, operand 4, single buffered']
    #allocation12 [shape = 'u8[12288]{0}', space=vmem, size = 0x3000, scoped, tag = 'input window, operand 5, single buffered']
    #allocation13 [shape = 's32[1]{0}', space=sflag, size = 0x4, scoped, tag = 'scoped memory for _lambda_.1']
    #allocation14 [shape = 'u8[512]{0}', space=vmem, size = 0x400, scoped, tag = 'input window, operand 6, single buffered']
    #allocation15 [shape = 'u8[512]{0}', space=vmem, size = 0x400, scoped, tag = 'input window, operand 7, single buffered']
    #allocation16 [shape = 's32[1]{0}', space=sflag, size = 0x4, scoped, tag = 'scoped memory for _lambda_.1']
    #allocation17 [shape = 'u8[24576]{0}', space=vmem, size = 0x6000, scoped, tag = 'input window, operand 8, single buffered']
    #allocation18 [shape = 'u8[512]{0}', space=vmem, size = 0x400, scoped, tag = 'input window, operand 9, single buffered']
    #allocation19 [shape = 's32[1]{0}', space=sflag, size = 0x4, scoped, tag = 'scoped memory for _lambda_.1']
    #allocation20 [shape = 'u8[512]{0}', space=vmem, size = 0x400, scoped, tag = 'input window, operand 10, single buffered']
    #allocation21 [shape = 'u8[49152]{0}', space=vmem, size = 0xc000, scoped, tag = 'input window, operand 11, single buffered']
    #allocation22 [shape = 's32[1]{0}', space=sflag, size = 0x4, scoped, tag = 'scoped memory for _lambda_.1']
    #allocation23 [shape = 'u8[16384]{0}', space=vmem, size = 0x4000, scoped, tag = 'input window, operand 14, single buffered']
    #allocation24 [shape = 'u8[16384]{0}', space=vmem, size = 0x4000, scoped, tag = 'input window, operand 16, single buffered']
    #allocation25 [shape = 's32[1]{0}', space=sflag, size = 0x4, scoped, tag = 'scoped memory for _lambda_.1']
    #allocation26 [shape = 'u8[16384]{0}', space=vmem, size = 0x4000, scoped, tag = 'input window, operand 20, single buffered']
    #allocation27 [shape = 'u8[32768]{0}', space=vmem, size = 0x8000, scoped, tag = 'input window, operand 21, single buffered']
    #allocation28 [shape = 's32[1]{0}', space=sflag, size = 0x4, scoped, tag = 'scoped memory for _lambda_.1']
    #allocation29 [shape = 'u8[32768]{0}', space=vmem, size = 0x8000, scoped, tag = 'input window, operand 25, single buffered']
    #allocation30 [shape = 'u8[16384]{0}', space=vmem, size = 0x4000, scoped, tag = 'input window, operand 27, single buffered']
    #allocation31 [shape = 's32[1]{0}', space=sflag, size = 0x4, scoped, tag = 'scoped memory for _lambda_.1']
    #allocation32 [shape = 'u8[1024]{0}', space=vmem, size = 0x400, scoped, tag = 'output window, operand 0, single buffered']
    #allocation33 [shape = 'u8[1024]{0}', space=vmem, size = 0x400, scoped, tag = 'output window, operand 1, single buffered']
    #allocation34 [shape = 's32[1]{0}', space=sflag, size = 0x4, scoped, tag = 'scoped memory for _lambda_.1']
    #allocation35 [shape = 'u8[16384]{0}', space=vmem, size = 0x4000, scoped, tag = 'output window, operand 2, single buffered']
    %69 = vsyncpa [#allocation7], 0
    %70 = vsyncpa [#allocation10], 0
    %71 = vsyncpa [#allocation13], 0
    %72 = vsyncpa [#allocation16], 0
    %73 = vsyncpa [#allocation19], 0
    %74 = vsyncpa [#allocation22], 0
    %75 = vsyncpa [#allocation25], 0
    %76 = vsyncpa [#allocation28], 0
    %77 = vsyncpa [#allocation31], 0
    %78 = vsyncpa [#allocation8], 0
    %79 = vsyncpa [#allocation34], 0
    // Predicated region
    $region2: #{_lambda_.1} parent=1 // pred_check
      _
    $region3: #{_lambda_.1} parent=1 // pred_check_branch
      %81 = sbr.rel (0) target = $region5
    $region4: #{_lambda_.1} parent=1 // pred_region
      _
    $region5: #{_lambda_.1} parent=1 // pred_fallthru
      _
    // Predicated region
    $region6: #{_lambda_.1} parent=1 // pred_check
      _
    $region7: #{_lambda_.1} parent=1 // pred_check_branch
      %83 = sbr.rel (0) target = $region9
    $region8: #{_lambda_.1} parent=1 // pred_region
      _
    $region9: #{_lambda_.1} parent=1 // pred_fallthru
      _
    // Predicated region
    $region10: #{_lambda_.1} parent=1 // pred_check
      _
    $region11: #{_lambda_.1} parent=1 // pred_check_branch
      %85 = sbr.rel (0) target = $region13
    $region12: #{_lambda_.1} parent=1 // pred_region
      %87 = vsyncadd [#allocation7], 0
      %s88 = sshll.u32 %s5, 4
      %s89 = int_to_ptr.hbm [resolvable:$true] %s88
      %s90 = sshll.u32 [#allocation6], 4
      %s91 = int_to_ptr.vmem [resolvable:$true] %s90
      %96 = dma.hbm_to_vmem [thread:$0]  %s89, 96, %s91, [#allocation7], 32, 32, 2
    $region13: #{_lambda_.1} parent=1 // pred_fallthru
      _
    // Predicated region
    $region14: #{_lambda_.1} parent=1 // pred_check
      _
    $region15: #{_lambda_.1} parent=1 // pred_check_branch
      %98 = sbr.rel (0) target = $region17
    $region16: #{_lambda_.1} parent=1 // pred_region
      %100 = vsyncadd [#allocation10], 0
      %s102 = sshll.u32 %s7, 4
      %s103 = int_to_ptr.hbm [resolvable:$true] %s102
      %s104 = sshll.u32 [#allocation9], 4
      %s105 = int_to_ptr.vmem [resolvable:$true] %s104
      %107 = dma.hbm_to_vmem [thread:$0]  %s103, 16, %s105, [#allocation10]
    $region17: #{_lambda_.1} parent=1 // pred_fallthru
      _
    // Predicated region
    $region18: #{_lambda_.1} parent=1 // pred_check
      _
    $region19: #{_lambda_.1} parent=1 // pred_check_branch
      %109 = sbr.rel (0) target = $region21
    $region20: #{_lambda_.1} parent=1 // pred_region
      %111 = vsyncadd [#allocation10], 0
      %s113 = sshll.u32 %s9, 4
      %s114 = int_to_ptr.hbm [resolvable:$true] %s113
      %s115 = sshll.u32 [#allocation11], 4
      %s116 = int_to_ptr.vmem [resolvable:$true] %s115
      %118 = dma.hbm_to_vmem [thread:$0]  %s114, 16, %s116, [#allocation10]
    $region21: #{_lambda_.1} parent=1 // pred_fallthru
      _
    // Predicated region
    $region22: #{_lambda_.1} parent=1 // pred_check
      _
    $region23: #{_lambda_.1} parent=1 // pred_check_branch
      %120 = sbr.rel (0) target = $region25
    $region24: #{_lambda_.1} parent=1 // pred_region
      %122 = vsyncadd [#allocation13], 0
      %s123 = sshll.u32 %s11, 4
      %s124 = int_to_ptr.hbm [resolvable:$true] %s123
      %s125 = sshll.u32 [#allocation12], 4
      %s126 = int_to_ptr.vmem [resolvable:$true] %s125
      %131 = dma.hbm_to_vmem [thread:$0]  %s124, 384, %s126, [#allocation13], 128, 128, 8
    $region25: #{_lambda_.1} parent=1 // pred_fallthru
      _
    // Predicated region
    $region26: #{_lambda_.1} parent=1 // pred_check
      _
    $region27: #{_lambda_.1} parent=1 // pred_check_branch
      %133 = sbr.rel (0) target = $region29
    $region28: #{_lambda_.1} parent=1 // pred_region
      %135 = vsyncadd [#allocation13], 0
      %s137 = sshll.u32 %s13, 4
      %s138 = int_to_ptr.hbm [resolvable:$true] %s137
      %s139 = sshll.u32 [#allocation14], 4
      %s140 = int_to_ptr.vmem [resolvable:$true] %s139
      %142 = dma.hbm_to_vmem [thread:$0]  %s138, 16, %s140, [#allocation13]
    $region29: #{_lambda_.1} parent=1 // pred_fallthru
      _
    // Predicated region
    $region30: #{_lambda_.1} parent=1 // pred_check
      _
    $region31: #{_lambda_.1} parent=1 // pred_check_branch
      %144 = sbr.rel (0) target = $region33
    $region32: #{_lambda_.1} parent=1 // pred_region
      %146 = vsyncadd [#allocation16], 0
      %s148 = sshll.u32 %s15, 4
      %s149 = int_to_ptr.hbm [resolvable:$true] %s148
      %s150 = sshll.u32 [#allocation15], 4
      %s151 = int_to_ptr.vmem [resolvable:$true] %s150
      %153 = dma.hbm_to_vmem [thread:$0]  %s149, 16, %s151, [#allocation16]
    $region33: #{_lambda_.1} parent=1 // pred_fallthru
      _
    // Predicated region
    $region34: #{_lambda_.1} parent=1 // pred_check
      _
    $region35: #{_lambda_.1} parent=1 // pred_check_branch
      %155 = sbr.rel (0) target = $region37
    $region36: #{_lambda_.1} parent=1 // pred_region
      %157 = vsyncadd [#allocation16], 0
      %s158 = sshll.u32 %s17, 4
      %s159 = int_to_ptr.hbm [resolvable:$true] %s158
      %s160 = sshll.u32 [#allocation17], 4
      %s161 = int_to_ptr.vmem [resolvable:$true] %s160
      %166 = dma.hbm_to_vmem [thread:$0]  %s159, 768, %s161, [#allocation16], 128, 128, 8
    $region37: #{_lambda_.1} parent=1 // pred_fallthru
      _
    // Predicated region
    $region38: #{_lambda_.1} parent=1 // pred_check
      _
    $region39: #{_lambda_.1} parent=1 // pred_check_branch
      %168 = sbr.rel (0) target = $region41
    $region40: #{_lambda_.1} parent=1 // pred_region
      %170 = vsyncadd [#allocation19], 0
      %s172 = sshll.u32 %s19, 4
      %s173 = int_to_ptr.hbm [resolvable:$true] %s172
      %s174 = sshll.u32 [#allocation18], 4
      %s175 = int_to_ptr.vmem [resolvable:$true] %s174
      %177 = dma.hbm_to_vmem [thread:$0]  %s173, 16, %s175, [#allocation19]
    $region41: #{_lambda_.1} parent=1 // pred_fallthru
      _
    // Predicated region
    $region42: #{_lambda_.1} parent=1 // pred_check
      _
    $region43: #{_lambda_.1} parent=1 // pred_check_branch
      %179 = sbr.rel (0) target = $region45
    $region44: #{_lambda_.1} parent=1 // pred_region
      %181 = vsyncadd [#allocation19], 0
      %s183 = sshll.u32 %s21, 4
      %s184 = int_to_ptr.hbm [resolvable:$true] %s183
      %s185 = sshll.u32 [#allocation20], 4
      %s186 = int_to_ptr.vmem [resolvable:$true] %s185
      %188 = dma.hbm_to_vmem [thread:$0]  %s184, 16, %s186, [#allocation19]
    $region45: #{_lambda_.1} parent=1 // pred_fallthru
      _
    // Predicated region
    $region46: #{_lambda_.1} parent=1 // pred_check
      _
    $region47: #{_lambda_.1} parent=1 // pred_check_branch
      %190 = sbr.rel (0) target = $region49
    $region48: #{_lambda_.1} parent=1 // pred_region
      %192 = vsyncadd [#allocation22], 0
      %s193 = sshll.u32 %s23, 4
      %s194 = int_to_ptr.hbm [resolvable:$true] %s193
      %s195 = sshll.u32 [#allocation21], 4
      %s196 = int_to_ptr.vmem [resolvable:$true] %s195
      %201 = dma.hbm_to_vmem [thread:$0]  %s194, 1536, %s196, [#allocation22], 128, 128, 8
    $region49: #{_lambda_.1} parent=1 // pred_fallthru
      _
    // Predicated region
    $region50: #{_lambda_.1} parent=1 // pred_check
      _
    $region51: #{_lambda_.1} parent=1 // pred_check_branch
      %203 = sbr.rel (0) target = $region53
    $region52: #{_lambda_.1} parent=1 // pred_region
      _
    $region53: #{_lambda_.1} parent=1 // pred_fallthru
      _
    // Predicated region
    $region54: #{_lambda_.1} parent=1 // pred_check
      _
    $region55: #{_lambda_.1} parent=1 // pred_check_branch
      %205 = sbr.rel (0) target = $region57
    $region56: #{_lambda_.1} parent=1 // pred_region
      _
    $region57: #{_lambda_.1} parent=1 // pred_fallthru
      _
    // Predicated region
    $region58: #{_lambda_.1} parent=1 // pred_check
      _
    $region59: #{_lambda_.1} parent=1 // pred_check_branch
      %207 = sbr.rel (0) target = $region61
    $region60: #{_lambda_.1} parent=1 // pred_region
      %209 = vsyncadd [#allocation22], 0
      %s210 = sshll.u32 %s29, 4
      %s211 = int_to_ptr.hbm [resolvable:$true] %s210
      %s212 = sshll.u32 [#allocation23], 4
      %s213 = int_to_ptr.vmem [resolvable:$true] %s212
      %218 = dma.hbm_to_vmem [thread:$0]  %s211, 512, %s213, [#allocation22], 128, 128, 8
    $region61: #{_lambda_.1} parent=1 // pred_fallthru
      _
    // Predicated region
    $region62: #{_lambda_.1} parent=1 // pred_check
      _
    $region63: #{_lambda_.1} parent=1 // pred_check_branch
      %220 = sbr.rel (0) target = $region65
    $region64: #{_lambda_.1} parent=1 // pred_region
      _
    $region65: #{_lambda_.1} parent=1 // pred_fallthru
      _
    // Predicated region
    $region66: #{_lambda_.1} parent=1 // pred_check
      _
    $region67: #{_lambda_.1} parent=1 // pred_check_branch
      %222 = sbr.rel (0) target = $region69
    $region68: #{_lambda_.1} parent=1 // pred_region
      %224 = vsyncadd [#allocation25], 0
      %s225 = sshll.u32 %s33, 4
      %s226 = int_to_ptr.hbm [resolvable:$true] %s225
      %s227 = sshll.u32 [#allocation24], 4
      %s228 = int_to_ptr.vmem [resolvable:$true] %s227
      %233 = dma.hbm_to_vmem [thread:$0]  %s226, 512, %s228, [#allocation25], 128, 128, 8
    $region69: #{_lambda_.1} parent=1 // pred_fallthru
      _
    // Predicated region
    $region70: #{_lambda_.1} parent=1 // pred_check
      _
    $region71: #{_lambda_.1} parent=1 // pred_check_branch
      %235 = sbr.rel (0) target = $region73
    $region72: #{_lambda_.1} parent=1 // pred_region
      _
    $region73: #{_lambda_.1} parent=1 // pred_fallthru
      _
    // Predicated region
    $region74: #{_lambda_.1} parent=1 // pred_check
      _
    $region75: #{_lambda_.1} parent=1 // pred_check_branch
      %237 = sbr.rel (0) target = $region77
    $region76: #{_lambda_.1} parent=1 // pred_region
      _
    $region77: #{_lambda_.1} parent=1 // pred_fallthru
      _
    // Predicated region
    $region78: #{_lambda_.1} parent=1 // pred_check
      _
    $region79: #{_lambda_.1} parent=1 // pred_check_branch
      %239 = sbr.rel (0) target = $region81
    $region80: #{_lambda_.1} parent=1 // pred_region
      _
    $region81: #{_lambda_.1} parent=1 // pred_fallthru
      _
    // Predicated region
    $region82: #{_lambda_.1} parent=1 // pred_check
      _
    $region83: #{_lambda_.1} parent=1 // pred_check_branch
      %241 = sbr.rel (0) target = $region85
    $region84: #{_lambda_.1} parent=1 // pred_region
      %243 = vsyncadd [#allocation25], 0
      %s244 = sshll.u32 %s41, 4
      %s245 = int_to_ptr.hbm [resolvable:$true] %s244
      %s246 = sshll.u32 [#allocation26], 4
      %s247 = int_to_ptr.vmem [resolvable:$true] %s246
      %252 = dma.hbm_to_vmem [thread:$0]  %s245, 512, %s247, [#allocation25], 128, 128, 8
    $region85: #{_lambda_.1} parent=1 // pred_fallthru
      _
    // Predicated region
    $region86: #{_lambda_.1} parent=1 // pred_check
      _
    $region87: #{_lambda_.1} parent=1 // pred_check_branch
      %254 = sbr.rel (0) target = $region89
    $region88: #{_lambda_.1} parent=1 // pred_region
      %256 = vsyncadd [#allocation28], 0
      %s257 = sshll.u32 %s43, 4
      %s258 = int_to_ptr.hbm [resolvable:$true] %s257
      %s259 = sshll.u32 [#allocation27], 4
      %s260 = int_to_ptr.vmem [resolvable:$true] %s259
      %265 = dma.hbm_to_vmem [thread:$0]  %s258, 1024, %s260, [#allocation28], 128, 128, 8
    $region89: #{_lambda_.1} parent=1 // pred_fallthru
      _
    // Predicated region
    $region90: #{_lambda_.1} parent=1 // pred_check
      _
    $region91: #{_lambda_.1} parent=1 // pred_check_branch
      %267 = sbr.rel (0) target = $region93
    $region92: #{_lambda_.1} parent=1 // pred_region
      _
    $region93: #{_lambda_.1} parent=1 // pred_fallthru
      _
    // Predicated region
    $region94: #{_lambda_.1} parent=1 // pred_check
      _
    $region95: #{_lambda_.1} parent=1 // pred_check_branch
      %269 = sbr.rel (0) target = $region97
    $region96: #{_lambda_.1} parent=1 // pred_region
      _
    $region97: #{_lambda_.1} parent=1 // pred_fallthru
      _
    // Predicated region
    $region98: #{_lambda_.1} parent=1 // pred_check
      _
    $region99: #{_lambda_.1} parent=1 // pred_check_branch
      %271 = sbr.rel (0) target = $region101
    $region100: #{_lambda_.1} parent=1 // pred_region
      _
    $region101: #{_lambda_.1} parent=1 // pred_fallthru
      _
    // Predicated region
    $region102: #{_lambda_.1} parent=1 // pred_check
      _
    $region103: #{_lambda_.1} parent=1 // pred_check_branch
      %273 = sbr.rel (0) target = $region105
    $region104: #{_lambda_.1} parent=1 // pred_region
      %275 = vsyncadd [#allocation28], 0
      %s276 = sshll.u32 %s51, 4
      %s277 = int_to_ptr.hbm [resolvable:$true] %s276
      %s278 = sshll.u32 [#allocation29], 4
      %s279 = int_to_ptr.vmem [resolvable:$true] %s278
      %284 = dma.hbm_to_vmem [thread:$0]  %s277, 1024, %s279, [#allocation28], 128, 128, 8
    $region105: #{_lambda_.1} parent=1 // pred_fallthru
      _
    // Predicated region
    $region106: #{_lambda_.1} parent=1 // pred_check
      _
    $region107: #{_lambda_.1} parent=1 // pred_check_branch
      %286 = sbr.rel (0) target = $region109
    $region108: #{_lambda_.1} parent=1 // pred_region
      _
    $region109: #{_lambda_.1} parent=1 // pred_fallthru
      _
    // Predicated region
    $region110: #{_lambda_.1} parent=1 // pred_check
      _
    $region111: #{_lambda_.1} parent=1 // pred_check_branch
      %288 = sbr.rel (0) target = $region113
    $region112: #{_lambda_.1} parent=1 // pred_region
      %290 = vsyncadd [#allocation31], 0
      %s291 = sshll.u32 %s55, 4
      %s292 = int_to_ptr.hbm [resolvable:$true] %s291
      %s293 = sshll.u32 [#allocation30], 4
      %s294 = int_to_ptr.vmem [resolvable:$true] %s293
      %299 = dma.hbm_to_vmem [thread:$0]  %s292, 512, %s294, [#allocation31], 128, 128, 8
    $region113: #{_lambda_.1} parent=1 // pred_fallthru
      _
    // Predicated region
    $region114: #{_lambda_.1} parent=1 // pred_check
      _
    $region115: #{_lambda_.1} parent=1 // pred_check_branch
      %301 = sbr.rel (0) target = $region117
    $region116: #{_lambda_.1} parent=1 // pred_region
      _
    $region117: #{_lambda_.1} parent=1 // pred_fallthru
      _
    // Predicated region
    $region118: #{_lambda_.1} parent=1 // pred_check
      _
    $region119: #{_lambda_.1} parent=1 // pred_check_branch
      %303 = sbr.rel (0) target = $region121
    $region120: #{_lambda_.1} parent=1 // pred_region
      %305 = dma.done [#allocation7], 96
    $region121: #{_lambda_.1} parent=1 // pred_fallthru
      _
    // Predicated region
    $region122: #{_lambda_.1} parent=1 // pred_check
      _
    $region123: #{_lambda_.1} parent=1 // pred_check_branch
      %307 = sbr.rel (0) target = $region125
    $region124: #{_lambda_.1} parent=1 // pred_region
      %309 = dma.done [#allocation10], 16
    $region125: #{_lambda_.1} parent=1 // pred_fallthru
      _
    // Predicated region
    $region126: #{_lambda_.1} parent=1 // pred_check
      _
    $region127: #{_lambda_.1} parent=1 // pred_check_branch
      %311 = sbr.rel (0) target = $region129
    $region128: #{_lambda_.1} parent=1 // pred_region
      %313 = dma.done [#allocation10], 16
    $region129: #{_lambda_.1} parent=1 // pred_fallthru
      _
    // Predicated region
    $region130: #{_lambda_.1} parent=1 // pred_check
      _
    $region131: #{_lambda_.1} parent=1 // pred_check_branch
      %315 = sbr.rel (0) target = $region133
    $region132: #{_lambda_.1} parent=1 // pred_region
      %317 = dma.done [#allocation13], 384
    $region133: #{_lambda_.1} parent=1 // pred_fallthru
      _
    // Predicated region
    $region134: #{_lambda_.1} parent=1 // pred_check
      _
    $region135: #{_lambda_.1} parent=1 // pred_check_branch
      %319 = sbr.rel (0) target = $region137
    $region136: #{_lambda_.1} parent=1 // pred_region
      %321 = dma.done [#allocation13], 16
    $region137: #{_lambda_.1} parent=1 // pred_fallthru
      _
    // Predicated region
    $region138: #{_lambda_.1} parent=1 // pred_check
      _
    $region139: #{_lambda_.1} parent=1 // pred_check_branch
      %323 = sbr.rel (0) target = $region141
    $region140: #{_lambda_.1} parent=1 // pred_region
      %325 = dma.done [#allocation16], 16
    $region141: #{_lambda_.1} parent=1 // pred_fallthru
      _
    // Predicated region
    $region142: #{_lambda_.1} parent=1 // pred_check
      _
    $region143: #{_lambda_.1} parent=1 // pred_check_branch
      %327 = sbr.rel (0) target = $region145
    $region144: #{_lambda_.1} parent=1 // pred_region
      %329 = dma.done [#allocation16], 768
    $region145: #{_lambda_.1} parent=1 // pred_fallthru
      _
    // Predicated region
    $region146: #{_lambda_.1} parent=1 // pred_check
      _
    $region147: #{_lambda_.1} parent=1 // pred_check_branch
      %331 = sbr.rel (0) target = $region149
    $region148: #{_lambda_.1} parent=1 // pred_region
      %333 = dma.done [#allocation19], 16
    $region149: #{_lambda_.1} parent=1 // pred_fallthru
      _
    // Predicated region
    $region150: #{_lambda_.1} parent=1 // pred_check
      _
    $region151: #{_lambda_.1} parent=1 // pred_check_branch
      %335 = sbr.rel (0) target = $region153
    $region152: #{_lambda_.1} parent=1 // pred_region
      %337 = dma.done [#allocation19], 16
    $region153: #{_lambda_.1} parent=1 // pred_fallthru
      _
    // Predicated region
    $region154: #{_lambda_.1} parent=1 // pred_check
      _
    $region155: #{_lambda_.1} parent=1 // pred_check_branch
      %339 = sbr.rel (0) target = $region157
    $region156: #{_lambda_.1} parent=1 // pred_region
      %341 = dma.done [#allocation22], 1536
    $region157: #{_lambda_.1} parent=1 // pred_fallthru
      _
    // Predicated region
    $region158: #{_lambda_.1} parent=1 // pred_check
      _
    $region159: #{_lambda_.1} parent=1 // pred_check_branch
      %343 = sbr.rel (0) target = $region161
    $region160: #{_lambda_.1} parent=1 // pred_region
      %345 = dma.done [#allocation22], 512
    $region161: #{_lambda_.1} parent=1 // pred_fallthru
      _
    // Predicated region
    $region162: #{_lambda_.1} parent=1 // pred_check
      _
    $region163: #{_lambda_.1} parent=1 // pred_check_branch
      %347 = sbr.rel (0) target = $region165
    $region164: #{_lambda_.1} parent=1 // pred_region
      %349 = dma.done [#allocation25], 512
    $region165: #{_lambda_.1} parent=1 // pred_fallthru
      _
    // Predicated region
    $region166: #{_lambda_.1} parent=1 // pred_check
      _
    $region167: #{_lambda_.1} parent=1 // pred_check_branch
      %351 = sbr.rel (0) target = $region169
    $region168: #{_lambda_.1} parent=1 // pred_region
      %353 = dma.done [#allocation25], 512
    $region169: #{_lambda_.1} parent=1 // pred_fallthru
      _
    // Predicated region
    $region170: #{_lambda_.1} parent=1 // pred_check
      _
    $region171: #{_lambda_.1} parent=1 // pred_check_branch
      %355 = sbr.rel (0) target = $region173
    $region172: #{_lambda_.1} parent=1 // pred_region
      %357 = dma.done [#allocation28], 1024
    $region173: #{_lambda_.1} parent=1 // pred_fallthru
      _
    // Predicated region
    $region174: #{_lambda_.1} parent=1 // pred_check
      _
    $region175: #{_lambda_.1} parent=1 // pred_check_branch
      %359 = sbr.rel (0) target = $region177
    $region176: #{_lambda_.1} parent=1 // pred_region
      %361 = dma.done [#allocation28], 1024
    $region177: #{_lambda_.1} parent=1 // pred_fallthru
      _
    // Predicated region
    $region178: #{_lambda_.1} parent=1 // pred_check
      _
    $region179: #{_lambda_.1} parent=1 // pred_check_branch
      %363 = sbr.rel (0) target = $region181
    $region180: #{_lambda_.1} parent=1 // pred_region
      %365 = dma.done [#allocation31], 512
    $region181: #{_lambda_.1} parent=1 // pred_fallthru
      _
    %v367 = vld [vmem:[%s1] sm:$0xff]
    %v368 = vld [vmem:[%s1 + $0x8] sm:$0xff]
    %v369 = vld [vmem:[%s1 + $0x10] sm:$0xff]
    %v370 = vld [vmem:[%s1 + $0x18] sm:$0xff]
    %v371 = vld [vmem:[%s1 + $0x20] sm:$0xff]
    %v372 = vld [vmem:[%s1 + $0x28] sm:$0xff]
    %v373 = vld [vmem:[%s1 + $0x30] sm:$0xff]
    %v374 = vld [vmem:[%s1 + $0x38] sm:$0xff]
    %v375 = vld [vmem:[%s1 + $0x40] sm:$0xff]
    %v376 = vld [vmem:[%s1 + $0x48] sm:$0xff]
    %v377 = vld [vmem:[%s1 + $0x50] sm:$0xff]
    %v378 = vld [vmem:[%s1 + $0x58] sm:$0xff]
    %v379 = vld [vmem:[%s1 + $0x60] sm:$0xff]
    %v380 = vld [vmem:[%s1 + $0x68] sm:$0xff]
    %v381 = vld [vmem:[%s1 + $0x70] sm:$0xff]
    %v382 = vld [vmem:[%s1 + $0x78] sm:$0xff]
    %vm383 = vcmask 15360
    %384 = vst.msk [vmem:[#allocation2] sm:$0xff] %vm383, 0.0
    %385 = vst.msk [vmem:[#allocation2 + $0x8] sm:$0xff] %vm383, 0.0
    %386 = vst.msk [vmem:[#allocation2 + $0x10] sm:$0xff] %vm383, 0.0
    %387 = vst.msk [vmem:[#allocation2 + $0x18] sm:$0xff] %vm383, 0.0
    %388 = vst.msk [vmem:[#allocation2 + $0x20] sm:$0xff] %vm383, 0.0
    %389 = vst.msk [vmem:[#allocation2 + $0x28] sm:$0xff] %vm383, 0.0
    %390 = vst.msk [vmem:[#allocation2 + $0x30] sm:$0xff] %vm383, 0.0
    %391 = vst.msk [vmem:[#allocation2 + $0x38] sm:$0xff] %vm383, 0.0
    %vm392 = vcmask 9216
    %393 = vst.msk [vmem:[#allocation2 + $0x40] sm:$0x3] %vm392, 0.0
    %394 = vst.msk [vmem:[#allocation2 + $0x48] sm:$0xff] %vm383, 0.0
    %395 = vst.msk [vmem:[#allocation2 + $0x50] sm:$0xff] %vm383, 0.0
    %396 = vst.msk [vmem:[#allocation2 + $0x58] sm:$0xff] %vm383, 0.0
    %397 = vst.msk [vmem:[#allocation2 + $0x60] sm:$0xff] %vm383, 0.0
    %398 = vst.msk [vmem:[#allocation2 + $0x68] sm:$0xff] %vm383, 0.0
    %399 = vst.msk [vmem:[#allocation2 + $0x70] sm:$0xff] %vm383, 0.0
    %400 = vst.msk [vmem:[#allocation2 + $0x78] sm:$0xff] %vm383, 0.0
    %401 = vst.msk [vmem:[#allocation2 + $0x80] sm:$0xff] %vm383, 0.0
    %402 = vst.msk [vmem:[#allocation2 + $0x88] sm:$0x3] %vm392, 0.0
    %403 = vst.msk [vmem:[#allocation2 + $0x1] sm:$0xff] %vm383, %v367
    %404 = vst.msk [vmem:[#allocation2 + $0x9] sm:$0xff] %vm383, %v368
    %405 = vst.msk [vmem:[#allocation2 + $0x11] sm:$0xff] %vm383, %v369
    %406 = vst.msk [vmem:[#allocation2 + $0x19] sm:$0xff] %vm383, %v370
    %407 = vst.msk [vmem:[#allocation2 + $0x21] sm:$0xff] %vm383, %v371
    %408 = vst.msk [vmem:[#allocation2 + $0x29] sm:$0xff] %vm383, %v372
    %409 = vst.msk [vmem:[#allocation2 + $0x31] sm:$0xff] %vm383, %v373
    %410 = vst.msk [vmem:[#allocation2 + $0x39] sm:$0xff] %vm383, %v374
    %411 = vst.msk [vmem:[#allocation2 + $0x49] sm:$0xff] %vm383, %v375
    %412 = vst.msk [vmem:[#allocation2 + $0x51] sm:$0xff] %vm383, %v376
    %413 = vst.msk [vmem:[#allocation2 + $0x59] sm:$0xff] %vm383, %v377
    %414 = vst.msk [vmem:[#allocation2 + $0x61] sm:$0xff] %vm383, %v378
    %415 = vst.msk [vmem:[#allocation2 + $0x69] sm:$0xff] %vm383, %v379
    %416 = vst.msk [vmem:[#allocation2 + $0x71] sm:$0xff] %vm383, %v380
    %417 = vst.msk [vmem:[#allocation2 + $0x79] sm:$0xff] %vm383, %v381
    %418 = vst.msk [vmem:[#allocation2 + $0x81] sm:$0xff] %vm383, %v382
    %v419 = vld [vmem:[#allocation6] sm:$0x3]
    %v420 = vld [vmem:[#allocation6 + $0x2] sm:$0x3]
    %v421 = vld [vmem:[#allocation6 + $0x4] sm:$0x3]
    %v422 = vld [vmem:[#allocation2] sm:$0xff]
    %v423 = vld [vmem:[#allocation2 + $0x8] sm:$0xff]
    %v424 = vld [vmem:[#allocation2 + $0x10] sm:$0xff]
    %v425 = vld [vmem:[#allocation2 + $0x18] sm:$0xff]
    %v426 = vld [vmem:[#allocation2 + $0x20] sm:$0xff]
    %v427 = vld [vmem:[#allocation2 + $0x28] sm:$0xff]
    %v428 = vld [vmem:[#allocation2 + $0x30] sm:$0xff]
    %v429 = vld [vmem:[#allocation2 + $0x38] sm:$0xff]
    %v430 = vld [vmem:[#allocation2 + $0x40] sm:$0x3]
    %v431 = vld [vmem:[#allocation2 + $0x48] sm:$0xff]
    %v432 = vld [vmem:[#allocation2 + $0x50] sm:$0xff]
    %v433 = vld [vmem:[#allocation2 + $0x58] sm:$0xff]
    %v434 = vld [vmem:[#allocation2 + $0x60] sm:$0xff]
    %v435 = vld [vmem:[#allocation2 + $0x68] sm:$0xff]
    %v436 = vld [vmem:[#allocation2 + $0x70] sm:$0xff]
    %v437 = vld [vmem:[#allocation2 + $0x78] sm:$0xff]
    %v438 = vld [vmem:[#allocation2 + $0x80] sm:$0xff]
    %v439 = vld [vmem:[#allocation2 + $0x88] sm:$0x3]
    %v440 = vpack.c.bf16 %v423, %v422
    %v441 = vpack.c.bf16 %v425, %v424
    %v442 = vpack.c.bf16 %v427, %v426
    %v443 = vpack.c.bf16 %v429, %v428
    %v444 = vpack.c.bf16 %v432, %v431
    %v445 = vpack.c.bf16 %v434, %v433
    %v446 = vpack.c.bf16 %v436, %v435
    %v447 = vpack.c.bf16 %v438, %v437
    %v448 = vpack.c.bf16 %v419, %v419
    %vm467 = vcmask 1046528
    %v468 = vrot.slane %v422, 1
    %v469 = vrot.slane %v423, 1
    %v470 = vsel %vm467, %v468, %v469
    %v471 = vrot.slane %v424, 1
    %v472 = vsel %vm467, %v469, %v471
    %v473 = vrot.slane %v425, 1
    %v474 = vsel %vm467, %v471, %v473
    %v475 = vrot.slane %v426, 1
    %v476 = vsel %vm467, %v473, %v475
    %v477 = vrot.slane %v427, 1
    %v478 = vsel %vm467, %v475, %v477
    %v479 = vrot.slane %v428, 1
    %v480 = vsel %vm467, %v477, %v479
    %v481 = vrot.slane %v429, 1
    %v482 = vsel %vm467, %v479, %v481
    %v483 = vrot.slane %v430, 1
    %v484 = vsel %vm467, %v481, %v483
    %v485 = vrot.slane %v431, 1
    %v486 = vrot.slane %v432, 1
    %v487 = vsel %vm467, %v485, %v486
    %v488 = vrot.slane %v433, 1
    %v489 = vsel %vm467, %v486, %v488
    %v490 = vrot.slane %v434, 1
    %v491 = vsel %vm467, %v488, %v490
    %v492 = vrot.slane %v435, 1
    %v493 = vsel %vm467, %v490, %v492
    %v494 = vrot.slane %v436, 1
    %v495 = vsel %vm467, %v492, %v494
    %v496 = vrot.slane %v437, 1
    %v497 = vsel %vm467, %v494, %v496
    %v498 = vrot.slane %v438, 1
    %v499 = vsel %vm467, %v496, %v498
    %v500 = vrot.slane %v439, 1
    %v501 = vsel %vm467, %v498, %v500
    %v518 = vpack.c.bf16 %v472, %v470
    %v519 = vpack.c.bf16 %v476, %v474
    %v520 = vpack.c.bf16 %v480, %v478
    %v521 = vpack.c.bf16 %v484, %v482
    %v522 = vpack.c.bf16 %v489, %v487
    %v523 = vpack.c.bf16 %v493, %v491
    %v524 = vpack.c.bf16 %v497, %v495
    %v525 = vpack.c.bf16 %v501, %v499
    %v526 = vpack.c.bf16 %v420, %v420
    %v528 = vsel %vm383, %v518, 0
    %v531 = vsel %vm383, %v519, 0
    %v534 = vsel %vm383, %v520, 0
    %v537 = vsel %vm383, %v521, 0
    %v540 = vsel %vm383, %v522, 0
    %v543 = vsel %vm383, %v523, 0
    %v546 = vsel %vm383, %v524, 0
    %v549 = vsel %vm383, %v525, 0
    %vm551 = vcmask 1040384
    %v553 = vsel %vm551, %v526, 0
    %555 = vmatpush.bf16.msra.mxu0 0
    %556 = vmatpush.bf16.msra.mxu0 0
    %557 = vmatpush.bf16.msra.mxu0 0
    %558 = vmatpush.bf16.msra.mxu0 0
    %559 = vmatpush.bf16.msra.mxu0 0
    %560 = vmatpush.bf16.msra.mxu0 0
    %561 = vmatpush.bf16.msra.mxu0 0
    %562 = vmatpush.bf16.msra.mxu0 %v553
    %563 = vmatmul.bf16.gmra.mxu0 %v528
    %v564 = vpop.f32.mrf.mxu0
    %v565 = vadd.f32 0.0, %v564
    %v566 = vpop.f32.mrf.mxu0
    %v567 = vadd.f32 0.0, %v566
    %568 = vmatmul.bf16.gmra.mxu0 %v531
    %v569 = vpop.f32.mrf.mxu0
    %v570 = vadd.f32 0.0, %v569
    %v571 = vpop.f32.mrf.mxu0
    %v572 = vadd.f32 0.0, %v571
    %573 = vmatmul.bf16.gmra.mxu0 %v534
    %v574 = vpop.f32.mrf.mxu0
    %v575 = vadd.f32 0.0, %v574
    %v576 = vpop.f32.mrf.mxu0
    %v577 = vadd.f32 0.0, %v576
    %578 = vmatmul.bf16.gmra.mxu0 %v537
    %v579 = vpop.f32.mrf.mxu0
    %v580 = vadd.f32 0.0, %v579
    %v581 = vpop.f32.mrf.mxu0
    %v582 = vadd.f32 0.0, %v581
    %583 = vmatmul.bf16.gmra.mxu0 %v540
    %v584 = vpop.f32.mrf.mxu0
    %v585 = vadd.f32 0.0, %v584
    %v586 = vpop.f32.mrf.mxu0
    %v587 = vadd.f32 0.0, %v586
    %588 = vmatmul.bf16.gmra.mxu0 %v543
    %v589 = vpop.f32.mrf.mxu0
    %v590 = vadd.f32 0.0, %v589
    %v591 = vpop.f32.mrf.mxu0
    %v592 = vadd.f32 0.0, %v591
    %593 = vmatmul.bf16.gmra.mxu0 %v546
    %v594 = vpop.f32.mrf.mxu0
    %v595 = vadd.f32 0.0, %v594
    %v596 = vpop.f32.mrf.mxu0
    %v597 = vadd.f32 0.0, %v596
    %598 = vmatmul.bf16.gmra.mxu0 %v549
    %v599 = vpop.f32.mrf.mxu0
    %v600 = vadd.f32 0.0, %v599
    %v601 = vpop.f32.mrf.mxu0
    %v602 = vadd.f32 0.0, %v601
    %603 = vdwg.mxu0
    %v605 = vsel %vm383, %v440, 0
    %v608 = vsel %vm383, %v441, 0
    %v611 = vsel %vm383, %v442, 0
    %v614 = vsel %vm383, %v443, 0
    %v617 = vsel %vm383, %v444, 0
    %v620 = vsel %vm383, %v445, 0
    %v623 = vsel %vm383, %v446, 0
    %v626 = vsel %vm383, %v447, 0
    %v629 = vsel %vm551, %v448, 0
    %631 = vmatpush.bf16.msra.mxu0 0
    %632 = vmatpush.bf16.msra.mxu0 0
    %633 = vmatpush.bf16.msra.mxu0 0
    %634 = vmatpush.bf16.msra.mxu0 0
    %635 = vmatpush.bf16.msra.mxu0 0
    %636 = vmatpush.bf16.msra.mxu0 0
    %637 = vmatpush.bf16.msra.mxu0 0
    %638 = vmatpush.bf16.msra.mxu0 %v629
    %639 = vmatmul.bf16.gmra.mxu0 %v605
    %v640 = vpop.f32.mrf.mxu0
    %v641 = vadd.f32 %v565, %v640
    %v642 = vpop.f32.mrf.mxu0
    %v643 = vadd.f32 %v567, %v642
    %644 = vmatmul.bf16.gmra.mxu0 %v608
    %v645 = vpop.f32.mrf.mxu0
    %v646 = vadd.f32 %v570, %v645
    %v647 = vpop.f32.mrf.mxu0
    %v648 = vadd.f32 %v572, %v647
    %649 = vmatmul.bf16.gmra.mxu0 %v611
    %v650 = vpop.f32.mrf.mxu0
    %v651 = vadd.f32 %v575, %v650
    %v652 = vpop.f32.mrf.mxu0
    %v653 = vadd.f32 %v577, %v652
    %654 = vmatmul.bf16.gmra.mxu0 %v614
    %v655 = vpop.f32.mrf.mxu0
    %v656 = vadd.f32 %v580, %v655
    %v657 = vpop.f32.mrf.mxu0
    %v658 = vadd.f32 %v582, %v657
    %659 = vmatmul.bf16.gmra.mxu0 %v617
    %v660 = vpop.f32.mrf.mxu0
    %v661 = vadd.f32 %v585, %v660
    %v662 = vpop.f32.mrf.mxu0
    %v663 = vadd.f32 %v587, %v662
    %664 = vmatmul.bf16.gmra.mxu0 %v620
    %v665 = vpop.f32.mrf.mxu0
    %v666 = vadd.f32 %v590, %v665
    %v667 = vpop.f32.mrf.mxu0
    %v668 = vadd.f32 %v592, %v667
    %669 = vmatmul.bf16.gmra.mxu0 %v623
    %v670 = vpop.f32.mrf.mxu0
    %v671 = vadd.f32 %v595, %v670
    %v672 = vpop.f32.mrf.mxu0
    %v673 = vadd.f32 %v597, %v672
    %674 = vmatmul.bf16.gmra.mxu0 %v626
    %v675 = vpop.f32.mrf.mxu0
    %v676 = vadd.f32 %v600, %v675
    %v677 = vpop.f32.mrf.mxu0
    %v678 = vadd.f32 %v602, %v677
    %679 = vdwg.mxu0
    %vm680 = vcmask 1045504
    %v681 = vrot.slane %v422, 2
    %v682 = vrot.slane %v423, 2
    %v683 = vsel %vm680, %v681, %v682
    %v684 = vrot.slane %v424, 2
    %v685 = vsel %vm680, %v682, %v684
    %v686 = vrot.slane %v425, 2
    %v687 = vsel %vm680, %v684, %v686
    %v688 = vrot.slane %v426, 2
    %v689 = vsel %vm680, %v686, %v688
    %v690 = vrot.slane %v427, 2
    %v691 = vsel %vm680, %v688, %v690
    %v692 = vrot.slane %v428, 2
    %v693 = vsel %vm680, %v690, %v692
    %v694 = vrot.slane %v429, 2
    %v695 = vsel %vm680, %v692, %v694
    %v696 = vrot.slane %v430, 2
    %v697 = vsel %vm680, %v694, %v696
    %v698 = vrot.slane %v431, 2
    %v699 = vrot.slane %v432, 2
    %v700 = vsel %vm680, %v698, %v699
    %v701 = vrot.slane %v433, 2
    %v702 = vsel %vm680, %v699, %v701
    %v703 = vrot.slane %v434, 2
    %v704 = vsel %vm680, %v701, %v703
    %v705 = vrot.slane %v435, 2
    %v706 = vsel %vm680, %v703, %v705
    %v707 = vrot.slane %v436, 2
    %v708 = vsel %vm680, %v705, %v707
    %v709 = vrot.slane %v437, 2
    %v710 = vsel %vm680, %v707, %v709
    %v711 = vrot.slane %v438, 2
    %v712 = vsel %vm680, %v709, %v711
    %v713 = vrot.slane %v439, 2
    %v714 = vsel %vm680, %v711, %v713
    %v731 = vpack.c.bf16 %v685, %v683
    %v732 = vpack.c.bf16 %v689, %v687
    %v733 = vpack.c.bf16 %v693, %v691
    %v734 = vpack.c.bf16 %v697, %v695
    %v735 = vpack.c.bf16 %v702, %v700
    %v736 = vpack.c.bf16 %v706, %v704
    %v737 = vpack.c.bf16 %v710, %v708
    %v738 = vpack.c.bf16 %v714, %v712
    %v739 = vpack.c.bf16 %v421, %v421
    %v741 = vsel %vm383, %v731, 0
    %v744 = vsel %vm383, %v732, 0
    %v747 = vsel %vm383, %v733, 0
    %v750 = vsel %vm383, %v734, 0
    %v753 = vsel %vm383, %v735, 0
    %v756 = vsel %vm383, %v736, 0
    %v759 = vsel %vm383, %v737, 0
    %v762 = vsel %vm383, %v738, 0
    %v765 = vsel %vm551, %v739, 0
    %767 = vmatpush.bf16.msra.mxu0 0
    %768 = vmatpush.bf16.msra.mxu0 0
    %769 = vmatpush.bf16.msra.mxu0 0
    %770 = vmatpush.bf16.msra.mxu0 0
    %771 = vmatpush.bf16.msra.mxu0 0
    %772 = vmatpush.bf16.msra.mxu0 0
    %773 = vmatpush.bf16.msra.mxu0 0
    %774 = vmatpush.bf16.msra.mxu0 %v765
    %775 = vmatmul.bf16.gmra.mxu0 %v741
    %v776 = vpop.f32.mrf.mxu0
    %v777 = vadd.f32 0.0, %v776
    %v778 = vpop.f32.mrf.mxu0
    %v779 = vadd.f32 0.0, %v778
    %780 = vmatmul.bf16.gmra.mxu0 %v744
    %v781 = vpop.f32.mrf.mxu0
    %v782 = vadd.f32 0.0, %v781
    %v783 = vpop.f32.mrf.mxu0
    %v784 = vadd.f32 0.0, %v783
    %785 = vmatmul.bf16.gmra.mxu0 %v747
    %v786 = vpop.f32.mrf.mxu0
    %v787 = vadd.f32 0.0, %v786
    %v788 = vpop.f32.mrf.mxu0
    %v789 = vadd.f32 0.0, %v788
    %790 = vmatmul.bf16.gmra.mxu0 %v750
    %v791 = vpop.f32.mrf.mxu0
    %v792 = vadd.f32 0.0, %v791
    %v793 = vpop.f32.mrf.mxu0
    %v794 = vadd.f32 0.0, %v793
    %795 = vmatmul.bf16.gmra.mxu0 %v753
    %v796 = vpop.f32.mrf.mxu0
    %v797 = vadd.f32 0.0, %v796
    %v798 = vpop.f32.mrf.mxu0
    %v799 = vadd.f32 0.0, %v798
    %800 = vmatmul.bf16.gmra.mxu0 %v756
    %v801 = vpop.f32.mrf.mxu0
    %v802 = vadd.f32 0.0, %v801
    %v803 = vpop.f32.mrf.mxu0
    %v804 = vadd.f32 0.0, %v803
    %805 = vmatmul.bf16.gmra.mxu0 %v759
    %v806 = vpop.f32.mrf.mxu0
    %v807 = vadd.f32 0.0, %v806
    %v808 = vpop.f32.mrf.mxu0
    %v809 = vadd.f32 0.0, %v808
    %810 = vmatmul.bf16.gmra.mxu0 %v762
    %v811 = vpop.f32.mrf.mxu0
    %v812 = vadd.f32 0.0, %v811
    %v813 = vpop.f32.mrf.mxu0
    %v814 = vadd.f32 0.0, %v813
    %815 = vdwg.mxu0
    %v816 = vadd.f32 %v641, %v777
    %v817 = vadd.f32 %v643, %v779
    %v818 = vadd.f32 %v646, %v782
    %v819 = vadd.f32 %v648, %v784
    %v820 = vadd.f32 %v651, %v787
    %v821 = vadd.f32 %v653, %v789
    %v822 = vadd.f32 %v656, %v792
    %v823 = vadd.f32 %v658, %v794
    %v824 = vadd.f32 %v661, %v797
    %v825 = vadd.f32 %v663, %v799
    %v826 = vadd.f32 %v666, %v802
    %v827 = vadd.f32 %v668, %v804
    %v828 = vadd.f32 %v671, %v807
    %v829 = vadd.f32 %v673, %v809
    %v830 = vadd.f32 %v676, %v812
    %v831 = vadd.f32 %v678, %v814
    %v832 = vld [vmem:[#allocation9] sm:$0x1]
    %v834 = vperm.slane %v832, 0
    %v836 = vmul.f32 %v816, %v834
    %v837 = vmul.f32 %v817, %v834
    %v838 = vmul.f32 %v818, %v834
    %v839 = vmul.f32 %v819, %v834
    %v840 = vmul.f32 %v820, %v834
    %v841 = vmul.f32 %v821, %v834
    %v842 = vmul.f32 %v822, %v834
    %v843 = vmul.f32 %v823, %v834
    %v844 = vmul.f32 %v824, %v834
    %v845 = vmul.f32 %v825, %v834
    %v846 = vmul.f32 %v826, %v834
    %v847 = vmul.f32 %v827, %v834
    %v848 = vmul.f32 %v828, %v834
    %v849 = vmul.f32 %v829, %v834
    %v850 = vmul.f32 %v830, %v834
    %v851 = vmul.f32 %v831, %v834
    %v852 = vld [vmem:[#allocation11] sm:$0x1]
    %v854 = vperm.slane %v852, 0
    %v856 = vadd.f32 %v836, %v854
    %v857 = vadd.f32 %v837, %v854
    %v858 = vadd.f32 %v838, %v854
    %v859 = vadd.f32 %v839, %v854
    %v860 = vadd.f32 %v840, %v854
    %v861 = vadd.f32 %v841, %v854
    %v862 = vadd.f32 %v842, %v854
    %v863 = vadd.f32 %v843, %v854
    %v864 = vadd.f32 %v844, %v854
    %v865 = vadd.f32 %v845, %v854
    %v866 = vadd.f32 %v846, %v854
    %v867 = vadd.f32 %v847, %v854
    %v868 = vadd.f32 %v848, %v854
    %v869 = vadd.f32 %v849, %v854
    %v870 = vadd.f32 %v850, %v854
    %v871 = vadd.f32 %v851, %v854
    %v872 = vmax.f32 %v856, 0.0
    %v873 = vmax.f32 %v857, 0.0
    %v874 = vmax.f32 %v858, 0.0
    %v875 = vmax.f32 %v859, 0.0
    %v876 = vmax.f32 %v860, 0.0
    %v877 = vmax.f32 %v861, 0.0
    %v878 = vmax.f32 %v862, 0.0
    %v879 = vmax.f32 %v863, 0.0
    %v880 = vmax.f32 %v864, 0.0
    %v881 = vmax.f32 %v865, 0.0
    %v882 = vmax.f32 %v866, 0.0
    %v883 = vmax.f32 %v867, 0.0
    %v884 = vmax.f32 %v868, 0.0
    %v885 = vmax.f32 %v869, 0.0
    %v886 = vmax.f32 %v870, 0.0
    %v887 = vmax.f32 %v871, 0.0
    %v904 = vrot.slane %v872, 2
    %v905 = vrot.slane %v872, 4
    %v906 = vrot.slane %v872, 6
    %v907 = vrot.slane %v873, 2
    %v908 = vrot.slane %v873, 4
    %v909 = vrot.slane %v873, 6
    %v910 = vrot.slane %v874, 2
    %v911 = vrot.slane %v874, 4
    %v912 = vrot.slane %v874, 6
    %v913 = vrot.slane %v875, 2
    %v914 = vrot.slane %v875, 4
    %v915 = vrot.slane %v875, 6
    %v916 = vrot.slane %v876, 2
    %v917 = vrot.slane %v876, 4
    %v918 = vrot.slane %v876, 6
    %v919 = vrot.slane %v877, 2
    %v920 = vrot.slane %v877, 4
    %v921 = vrot.slane %v877, 6
    %v922 = vrot.slane %v878, 2
    %v923 = vrot.slane %v878, 4
    %v924 = vrot.slane %v878, 6
    %v925 = vrot.slane %v879, 2
    %v926 = vrot.slane %v879, 4
    %v927 = vrot.slane %v879, 6
    %v928 = vrot.slane %v880, 2
    %v929 = vrot.slane %v880, 4
    %v930 = vrot.slane %v880, 6
    %v931 = vrot.slane %v881, 2
    %v932 = vrot.slane %v881, 4
    %v933 = vrot.slane %v881, 6
    %v934 = vrot.slane %v882, 2
    %v935 = vrot.slane %v882, 4
    %v936 = vrot.slane %v882, 6
    %v937 = vrot.slane %v883, 2
    %v938 = vrot.slane %v883, 4
    %v939 = vrot.slane %v883, 6
    %v940 = vrot.slane %v884, 2
    %v941 = vrot.slane %v884, 4
    %v942 = vrot.slane %v884, 6
    %v943 = vrot.slane %v885, 2
    %v944 = vrot.slane %v885, 4
    %v945 = vrot.slane %v885, 6
    %v946 = vrot.slane %v886, 2
    %v947 = vrot.slane %v886, 4
    %v948 = vrot.slane %v886, 6
    %v949 = vrot.slane %v887, 2
    %v950 = vrot.slane %v887, 4
    %v951 = vrot.slane %v887, 6
    %vm1000 = vcmask 58368
    %v1001 = vsel %vm1000, %v872, -inf
    %v1002 = vrot.slane %v1001, 4
    %v1003 = vmax.f32 %v1001, %v1002
    %v1004 = vrot.slane %v1003, 2
    %v1005 = vmax.f32 %v1003, %v1004
    %v1006 = vrot.slane %v1005, 1
    %v1007 = vmax.f32 %v1005, %v1006
    %v1008 = vsel %vm1000, %v904, -inf
    %v1009 = vrot.slane %v1008, 4
    %v1010 = vmax.f32 %v1008, %v1009
    %v1011 = vrot.slane %v1010, 2
    %v1012 = vmax.f32 %v1010, %v1011
    %v1013 = vrot.slane %v1012, 1
    %v1014 = vmax.f32 %v1012, %v1013
    %v1015 = vsel %vm1000, %v905, -inf
    %v1016 = vrot.slane %v1015, 4
    %v1017 = vmax.f32 %v1015, %v1016
    %v1018 = vrot.slane %v1017, 2
    %v1019 = vmax.f32 %v1017, %v1018
    %v1020 = vrot.slane %v1019, 1
    %v1021 = vmax.f32 %v1019, %v1020
    %v1022 = vsel %vm1000, %v906, -inf
    %v1023 = vrot.slane %v1022, 4
    %v1024 = vmax.f32 %v1022, %v1023
    %v1025 = vrot.slane %v1024, 2
    %v1026 = vmax.f32 %v1024, %v1025
    %v1027 = vrot.slane %v1026, 1
    %v1028 = vmax.f32 %v1026, %v1027
    %v1029 = vsel %vm1000, %v873, -inf
    %v1030 = vrot.slane %v1029, 4
    %v1031 = vmax.f32 %v1029, %v1030
    %v1032 = vrot.slane %v1031, 2
    %v1033 = vmax.f32 %v1031, %v1032
    %v1034 = vrot.slane %v1033, 1
    %v1035 = vmax.f32 %v1033, %v1034
    %v1036 = vsel %vm1000, %v907, -inf
    %v1037 = vrot.slane %v1036, 4
    %v1038 = vmax.f32 %v1036, %v1037
    %v1039 = vrot.slane %v1038, 2
    %v1040 = vmax.f32 %v1038, %v1039
    %v1041 = vrot.slane %v1040, 1
    %v1042 = vmax.f32 %v1040, %v1041
    %v1043 = vsel %vm1000, %v908, -inf
    %v1044 = vrot.slane %v1043, 4
    %v1045 = vmax.f32 %v1043, %v1044
    %v1046 = vrot.slane %v1045, 2
    %v1047 = vmax.f32 %v1045, %v1046
    %v1048 = vrot.slane %v1047, 1
    %v1049 = vmax.f32 %v1047, %v1048
    %v1050 = vsel %vm1000, %v909, -inf
    %v1051 = vrot.slane %v1050, 4
    %v1052 = vmax.f32 %v1050, %v1051
    %v1053 = vrot.slane %v1052, 2
    %v1054 = vmax.f32 %v1052, %v1053
    %v1055 = vrot.slane %v1054, 1
    %v1056 = vmax.f32 %v1054, %v1055
    %v1057 = vsel %vm1000, %v874, -inf
    %v1058 = vrot.slane %v1057, 4
    %v1059 = vmax.f32 %v1057, %v1058
    %v1060 = vrot.slane %v1059, 2
    %v1061 = vmax.f32 %v1059, %v1060
    %v1062 = vrot.slane %v1061, 1
    %v1063 = vmax.f32 %v1061, %v1062
    %v1064 = vsel %vm1000, %v910, -inf
    %v1065 = vrot.slane %v1064, 4
    %v1066 = vmax.f32 %v1064, %v1065
    %v1067 = vrot.slane %v1066, 2
    %v1068 = vmax.f32 %v1066, %v1067
    %v1069 = vrot.slane %v1068, 1
    %v1070 = vmax.f32 %v1068, %v1069
    %v1071 = vsel %vm1000, %v911, -inf
    %v1072 = vrot.slane %v1071, 4
    %v1073 = vmax.f32 %v1071, %v1072
    %v1074 = vrot.slane %v1073, 2
    %v1075 = vmax.f32 %v1073, %v1074
    %v1076 = vrot.slane %v1075, 1
    %v1077 = vmax.f32 %v1075, %v1076
    %v1078 = vsel %vm1000, %v912, -inf
    %v1079 = vrot.slane %v1078, 4
    %v1080 = vmax.f32 %v1078, %v1079
    %v1081 = vrot.slane %v1080, 2
    %v1082 = vmax.f32 %v1080, %v1081
    %v1083 = vrot.slane %v1082, 1
    %v1084 = vmax.f32 %v1082, %v1083
    %v1085 = vsel %vm1000, %v875, -inf
    %v1086 = vrot.slane %v1085, 4
    %v1087 = vmax.f32 %v1085, %v1086
    %v1088 = vrot.slane %v1087, 2
    %v1089 = vmax.f32 %v1087, %v1088
    %v1090 = vrot.slane %v1089, 1
    %v1091 = vmax.f32 %v1089, %v1090
    %v1092 = vsel %vm1000, %v913, -inf
    %v1093 = vrot.slane %v1092, 4
    %v1094 = vmax.f32 %v1092, %v1093
    %v1095 = vrot.slane %v1094, 2
    %v1096 = vmax.f32 %v1094, %v1095
    %v1097 = vrot.slane %v1096, 1
    %v1098 = vmax.f32 %v1096, %v1097
    %v1099 = vsel %vm1000, %v914, -inf
    %v1100 = vrot.slane %v1099, 4
    %v1101 = vmax.f32 %v1099, %v1100
    %v1102 = vrot.slane %v1101, 2
    %v1103 = vmax.f32 %v1101, %v1102
    %v1104 = vrot.slane %v1103, 1
    %v1105 = vmax.f32 %v1103, %v1104
    %v1106 = vsel %vm1000, %v915, -inf
    %v1107 = vrot.slane %v1106, 4
    %v1108 = vmax.f32 %v1106, %v1107
    %v1109 = vrot.slane %v1108, 2
    %v1110 = vmax.f32 %v1108, %v1109
    %v1111 = vrot.slane %v1110, 1
    %v1112 = vmax.f32 %v1110, %v1111
    %v1113 = vsel %vm1000, %v876, -inf
    %v1114 = vrot.slane %v1113, 4
    %v1115 = vmax.f32 %v1113, %v1114
    %v1116 = vrot.slane %v1115, 2
    %v1117 = vmax.f32 %v1115, %v1116
    %v1118 = vrot.slane %v1117, 1
    %v1119 = vmax.f32 %v1117, %v1118
    %v1120 = vsel %vm1000, %v916, -inf
    %v1121 = vrot.slane %v1120, 4
    %v1122 = vmax.f32 %v1120, %v1121
    %v1123 = vrot.slane %v1122, 2
    %v1124 = vmax.f32 %v1122, %v1123
    %v1125 = vrot.slane %v1124, 1
    %v1126 = vmax.f32 %v1124, %v1125
    %v1127 = vsel %vm1000, %v917, -inf
    %v1128 = vrot.slane %v1127, 4
    %v1129 = vmax.f32 %v1127, %v1128
    %v1130 = vrot.slane %v1129, 2
    %v1131 = vmax.f32 %v1129, %v1130
    %v1132 = vrot.slane %v1131, 1
    %v1133 = vmax.f32 %v1131, %v1132
    %v1134 = vsel %vm1000, %v918, -inf
    %v1135 = vrot.slane %v1134, 4
    %v1136 = vmax.f32 %v1134, %v1135
    %v1137 = vrot.slane %v1136, 2
    %v1138 = vmax.f32 %v1136, %v1137
    %v1139 = vrot.slane %v1138, 1
    %v1140 = vmax.f32 %v1138, %v1139
    %v1141 = vsel %vm1000, %v877, -inf
    %v1142 = vrot.slane %v1141, 4
    %v1143 = vmax.f32 %v1141, %v1142
    %v1144 = vrot.slane %v1143, 2
    %v1145 = vmax.f32 %v1143, %v1144
    %v1146 = vrot.slane %v1145, 1
    %v1147 = vmax.f32 %v1145, %v1146
    %v1148 = vsel %vm1000, %v919, -inf
    %v1149 = vrot.slane %v1148, 4
    %v1150 = vmax.f32 %v1148, %v1149
    %v1151 = vrot.slane %v1150, 2
    %v1152 = vmax.f32 %v1150, %v1151
    %v1153 = vrot.slane %v1152, 1
    %v1154 = vmax.f32 %v1152, %v1153
    %v1155 = vsel %vm1000, %v920, -inf
    %v1156 = vrot.slane %v1155, 4
    %v1157 = vmax.f32 %v1155, %v1156
    %v1158 = vrot.slane %v1157, 2
    %v1159 = vmax.f32 %v1157, %v1158
    %v1160 = vrot.slane %v1159, 1
    %v1161 = vmax.f32 %v1159, %v1160
    %v1162 = vsel %vm1000, %v921, -inf
    %v1163 = vrot.slane %v1162, 4
    %v1164 = vmax.f32 %v1162, %v1163
    %v1165 = vrot.slane %v1164, 2
    %v1166 = vmax.f32 %v1164, %v1165
    %v1167 = vrot.slane %v1166, 1
    %v1168 = vmax.f32 %v1166, %v1167
    %v1169 = vsel %vm1000, %v878, -inf
    %v1170 = vrot.slane %v1169, 4
    %v1171 = vmax.f32 %v1169, %v1170
    %v1172 = vrot.slane %v1171, 2
    %v1173 = vmax.f32 %v1171, %v1172
    %v1174 = vrot.slane %v1173, 1
    %v1175 = vmax.f32 %v1173, %v1174
    %v1176 = vsel %vm1000, %v922, -inf
    %v1177 = vrot.slane %v1176, 4
    %v1178 = vmax.f32 %v1176, %v1177
    %v1179 = vrot.slane %v1178, 2
    %v1180 = vmax.f32 %v1178, %v1179
    %v1181 = vrot.slane %v1180, 1
    %v1182 = vmax.f32 %v1180, %v1181
    %v1183 = vsel %vm1000, %v923, -inf
    %v1184 = vrot.slane %v1183, 4
    %v1185 = vmax.f32 %v1183, %v1184
    %v1186 = vrot.slane %v1185, 2
    %v1187 = vmax.f32 %v1185, %v1186
    %v1188 = vrot.slane %v1187, 1
    %v1189 = vmax.f32 %v1187, %v1188
    %v1190 = vsel %vm1000, %v924, -inf
    %v1191 = vrot.slane %v1190, 4
    %v1192 = vmax.f32 %v1190, %v1191
    %v1193 = vrot.slane %v1192, 2
    %v1194 = vmax.f32 %v1192, %v1193
    %v1195 = vrot.slane %v1194, 1
    %v1196 = vmax.f32 %v1194, %v1195
    %v1197 = vsel %vm1000, %v879, -inf
    %v1198 = vrot.slane %v1197, 4
    %v1199 = vmax.f32 %v1197, %v1198
    %v1200 = vrot.slane %v1199, 2
    %v1201 = vmax.f32 %v1199, %v1200
    %v1202 = vrot.slane %v1201, 1
    %v1203 = vmax.f32 %v1201, %v1202
    %v1204 = vsel %vm1000, %v925, -inf
    %v1205 = vrot.slane %v1204, 4
    %v1206 = vmax.f32 %v1204, %v1205
    %v1207 = vrot.slane %v1206, 2
    %v1208 = vmax.f32 %v1206, %v1207
    %v1209 = vrot.slane %v1208, 1
    %v1210 = vmax.f32 %v1208, %v1209
    %v1211 = vsel %vm1000, %v926, -inf
    %v1212 = vrot.slane %v1211, 4
    %v1213 = vmax.f32 %v1211, %v1212
    %v1214 = vrot.slane %v1213, 2
    %v1215 = vmax.f32 %v1213, %v1214
    %v1216 = vrot.slane %v1215, 1
    %v1217 = vmax.f32 %v1215, %v1216
    %v1218 = vsel %vm1000, %v927, -inf
    %v1219 = vrot.slane %v1218, 4
    %v1220 = vmax.f32 %v1218, %v1219
    %v1221 = vrot.slane %v1220, 2
    %v1222 = vmax.f32 %v1220, %v1221
    %v1223 = vrot.slane %v1222, 1
    %v1224 = vmax.f32 %v1222, %v1223
    %v1225 = vsel %vm1000, %v880, -inf
    %v1226 = vrot.slane %v1225, 4
    %v1227 = vmax.f32 %v1225, %v1226
    %v1228 = vrot.slane %v1227, 2
    %v1229 = vmax.f32 %v1227, %v1228
    %v1230 = vrot.slane %v1229, 1
    %v1231 = vmax.f32 %v1229, %v1230
    %v1232 = vsel %vm1000, %v928, -inf
    %v1233 = vrot.slane %v1232, 4
    %v1234 = vmax.f32 %v1232, %v1233
    %v1235 = vrot.slane %v1234, 2
    %v1236 = vmax.f32 %v1234, %v1235
    %v1237 = vrot.slane %v1236, 1
    %v1238 = vmax.f32 %v1236, %v1237
    %v1239 = vsel %vm1000, %v929, -inf
    %v1240 = vrot.slane %v1239, 4
    %v1241 = vmax.f32 %v1239, %v1240
    %v1242 = vrot.slane %v1241, 2
    %v1243 = vmax.f32 %v1241, %v1242
    %v1244 = vrot.slane %v1243, 1
    %v1245 = vmax.f32 %v1243, %v1244
    %v1246 = vsel %vm1000, %v930, -inf
    %v1247 = vrot.slane %v1246, 4
    %v1248 = vmax.f32 %v1246, %v1247
    %v1249 = vrot.slane %v1248, 2
    %v1250 = vmax.f32 %v1248, %v1249
    %v1251 = vrot.slane %v1250, 1
    %v1252 = vmax.f32 %v1250, %v1251
    %v1253 = vsel %vm1000, %v881, -inf
    %v1254 = vrot.slane %v1253, 4
    %v1255 = vmax.f32 %v1253, %v1254
    %v1256 = vrot.slane %v1255, 2
    %v1257 = vmax.f32 %v1255, %v1256
    %v1258 = vrot.slane %v1257, 1
    %v1259 = vmax.f32 %v1257, %v1258
    %v1260 = vsel %vm1000, %v931, -inf
    %v1261 = vrot.slane %v1260, 4
    %v1262 = vmax.f32 %v1260, %v1261
    %v1263 = vrot.slane %v1262, 2
    %v1264 = vmax.f32 %v1262, %v1263
    %v1265 = vrot.slane %v1264, 1
    %v1266 = vmax.f32 %v1264, %v1265
    %v1267 = vsel %vm1000, %v932, -inf
    %v1268 = vrot.slane %v1267, 4
    %v1269 = vmax.f32 %v1267, %v1268
    %v1270 = vrot.slane %v1269, 2
    %v1271 = vmax.f32 %v1269, %v1270
    %v1272 = vrot.slane %v1271, 1
    %v1273 = vmax.f32 %v1271, %v1272
    %v1274 = vsel %vm1000, %v933, -inf
    %v1275 = vrot.slane %v1274, 4
    %v1276 = vmax.f32 %v1274, %v1275
    %v1277 = vrot.slane %v1276, 2
    %v1278 = vmax.f32 %v1276, %v1277
    %v1279 = vrot.slane %v1278, 1
    %v1280 = vmax.f32 %v1278, %v1279
    %v1281 = vsel %vm1000, %v882, -inf
    %v1282 = vrot.slane %v1281, 4
    %v1283 = vmax.f32 %v1281, %v1282
    %v1284 = vrot.slane %v1283, 2
    %v1285 = vmax.f32 %v1283, %v1284
    %v1286 = vrot.slane %v1285, 1
    %v1287 = vmax.f32 %v1285, %v1286
    %v1288 = vsel %vm1000, %v934, -inf
    %v1289 = vrot.slane %v1288, 4
    %v1290 = vmax.f32 %v1288, %v1289
    %v1291 = vrot.slane %v1290, 2
    %v1292 = vmax.f32 %v1290, %v1291
    %v1293 = vrot.slane %v1292, 1
    %v1294 = vmax.f32 %v1292, %v1293
    %v1295 = vsel %vm1000, %v935, -inf
    %v1296 = vrot.slane %v1295, 4
    %v1297 = vmax.f32 %v1295, %v1296
    %v1298 = vrot.slane %v1297, 2
    %v1299 = vmax.f32 %v1297, %v1298
    %v1300 = vrot.slane %v1299, 1
    %v1301 = vmax.f32 %v1299, %v1300
    %v1302 = vsel %vm1000, %v936, -inf
    %v1303 = vrot.slane %v1302, 4
    %v1304 = vmax.f32 %v1302, %v1303
    %v1305 = vrot.slane %v1304, 2
    %v1306 = vmax.f32 %v1304, %v1305
    %v1307 = vrot.slane %v1306, 1
    %v1308 = vmax.f32 %v1306, %v1307
    %v1309 = vsel %vm1000, %v883, -inf
    %v1310 = vrot.slane %v1309, 4
    %v1311 = vmax.f32 %v1309, %v1310
    %v1312 = vrot.slane %v1311, 2
    %v1313 = vmax.f32 %v1311, %v1312
    %v1314 = vrot.slane %v1313, 1
    %v1315 = vmax.f32 %v1313, %v1314
    %v1316 = vsel %vm1000, %v937, -inf
    %v1317 = vrot.slane %v1316, 4
    %v1318 = vmax.f32 %v1316, %v1317
    %v1319 = vrot.slane %v1318, 2
    %v1320 = vmax.f32 %v1318, %v1319
    %v1321 = vrot.slane %v1320, 1
    %v1322 = vmax.f32 %v1320, %v1321
    %v1323 = vsel %vm1000, %v938, -inf
    %v1324 = vrot.slane %v1323, 4
    %v1325 = vmax.f32 %v1323, %v1324
    %v1326 = vrot.slane %v1325, 2
    %v1327 = vmax.f32 %v1325, %v1326
    %v1328 = vrot.slane %v1327, 1
    %v1329 = vmax.f32 %v1327, %v1328
    %v1330 = vsel %vm1000, %v939, -inf
    %v1331 = vrot.slane %v1330, 4
    %v1332 = vmax.f32 %v1330, %v1331
    %v1333 = vrot.slane %v1332, 2
    %v1334 = vmax.f32 %v1332, %v1333
    %v1335 = vrot.slane %v1334, 1
    %v1336 = vmax.f32 %v1334, %v1335
    %v1337 = vsel %vm1000, %v884, -inf
    %v1338 = vrot.slane %v1337, 4
    %v1339 = vmax.f32 %v1337, %v1338
    %v1340 = vrot.slane %v1339, 2
    %v1341 = vmax.f32 %v1339, %v1340
    %v1342 = vrot.slane %v1341, 1
    %v1343 = vmax.f32 %v1341, %v1342
    %v1344 = vsel %vm1000, %v940, -inf
    %v1345 = vrot.slane %v1344, 4
    %v1346 = vmax.f32 %v1344, %v1345
    %v1347 = vrot.slane %v1346, 2
    %v1348 = vmax.f32 %v1346, %v1347
    %v1349 = vrot.slane %v1348, 1
    %v1350 = vmax.f32 %v1348, %v1349
    %v1351 = vsel %vm1000, %v941, -inf
    %v1352 = vrot.slane %v1351, 4
    %v1353 = vmax.f32 %v1351, %v1352
    %v1354 = vrot.slane %v1353, 2
    %v1355 = vmax.f32 %v1353, %v1354
    %v1356 = vrot.slane %v1355, 1
    %v1357 = vmax.f32 %v1355, %v1356
    %v1358 = vsel %vm1000, %v942, -inf
    %v1359 = vrot.slane %v1358, 4
    %v1360 = vmax.f32 %v1358, %v1359
    %v1361 = vrot.slane %v1360, 2
    %v1362 = vmax.f32 %v1360, %v1361
    %v1363 = vrot.slane %v1362, 1
    %v1364 = vmax.f32 %v1362, %v1363
    %v1365 = vsel %vm1000, %v885, -inf
    %v1366 = vrot.slane %v1365, 4
    %v1367 = vmax.f32 %v1365, %v1366
    %v1368 = vrot.slane %v1367, 2
    %v1369 = vmax.f32 %v1367, %v1368
    %v1370 = vrot.slane %v1369, 1
    %v1371 = vmax.f32 %v1369, %v1370
    %v1372 = vsel %vm1000, %v943, -inf
    %v1373 = vrot.slane %v1372, 4
    %v1374 = vmax.f32 %v1372, %v1373
    %v1375 = vrot.slane %v1374, 2
    %v1376 = vmax.f32 %v1374, %v1375
    %v1377 = vrot.slane %v1376, 1
    %v1378 = vmax.f32 %v1376, %v1377
    %v1379 = vsel %vm1000, %v944, -inf
    %v1380 = vrot.slane %v1379, 4
    %v1381 = vmax.f32 %v1379, %v1380
    %v1382 = vrot.slane %v1381, 2
    %v1383 = vmax.f32 %v1381, %v1382
    %v1384 = vrot.slane %v1383, 1
    %v1385 = vmax.f32 %v1383, %v1384
    %v1386 = vsel %vm1000, %v945, -inf
    %v1387 = vrot.slane %v1386, 4
    %v1388 = vmax.f32 %v1386, %v1387
    %v1389 = vrot.slane %v1388, 2
    %v1390 = vmax.f32 %v1388, %v1389
    %v1391 = vrot.slane %v1390, 1
    %v1392 = vmax.f32 %v1390, %v1391
    %v1393 = vsel %vm1000, %v886, -inf
    %v1394 = vrot.slane %v1393, 4
    %v1395 = vmax.f32 %v1393, %v1394
    %v1396 = vrot.slane %v1395, 2
    %v1397 = vmax.f32 %v1395, %v1396
    %v1398 = vrot.slane %v1397, 1
    %v1399 = vmax.f32 %v1397, %v1398
    %v1400 = vsel %vm1000, %v946, -inf
    %v1401 = vrot.slane %v1400, 4
    %v1402 = vmax.f32 %v1400, %v1401
    %v1403 = vrot.slane %v1402, 2
    %v1404 = vmax.f32 %v1402, %v1403
    %v1405 = vrot.slane %v1404, 1
    %v1406 = vmax.f32 %v1404, %v1405
    %v1407 = vsel %vm1000, %v947, -inf
    %v1408 = vrot.slane %v1407, 4
    %v1409 = vmax.f32 %v1407, %v1408
    %v1410 = vrot.slane %v1409, 2
    %v1411 = vmax.f32 %v1409, %v1410
    %v1412 = vrot.slane %v1411, 1
    %v1413 = vmax.f32 %v1411, %v1412
    %v1414 = vsel %vm1000, %v948, -inf
    %v1415 = vrot.slane %v1414, 4
    %v1416 = vmax.f32 %v1414, %v1415
    %v1417 = vrot.slane %v1416, 2
    %v1418 = vmax.f32 %v1416, %v1417
    %v1419 = vrot.slane %v1418, 1
    %v1420 = vmax.f32 %v1418, %v1419
    %v1421 = vsel %vm1000, %v887, -inf
    %v1422 = vrot.slane %v1421, 4
    %v1423 = vmax.f32 %v1421, %v1422
    %v1424 = vrot.slane %v1423, 2
    %v1425 = vmax.f32 %v1423, %v1424
    %v1426 = vrot.slane %v1425, 1
    %v1427 = vmax.f32 %v1425, %v1426
    %v1428 = vsel %vm1000, %v949, -inf
    %v1429 = vrot.slane %v1428, 4
    %v1430 = vmax.f32 %v1428, %v1429
    %v1431 = vrot.slane %v1430, 2
    %v1432 = vmax.f32 %v1430, %v1431
    %v1433 = vrot.slane %v1432, 1
    %v1434 = vmax.f32 %v1432, %v1433
    %v1435 = vsel %vm1000, %v950, -inf
    %v1436 = vrot.slane %v1435, 4
    %v1437 = vmax.f32 %v1435, %v1436
    %v1438 = vrot.slane %v1437, 2
    %v1439 = vmax.f32 %v1437, %v1438
    %v1440 = vrot.slane %v1439, 1
    %v1441 = vmax.f32 %v1439, %v1440
    %v1442 = vsel %vm1000, %v951, -inf
    %v1443 = vrot.slane %v1442, 4
    %v1444 = vmax.f32 %v1442, %v1443
    %v1445 = vrot.slane %v1444, 2
    %v1446 = vmax.f32 %v1444, %v1445
    %v1447 = vrot.slane %v1446, 1
    %v1448 = vmax.f32 %v1446, %v1447
    %vm1449 = vcmask 64512
    %1450 = vst.msk [vmem:[#allocation3] sm:$0xff] %vm1449, 0.0
    %1451 = vst.msk [vmem:[#allocation3 + $0x8] sm:$0xff] %vm1449, 0.0
    %1452 = vst.msk [vmem:[#allocation3 + $0x10] sm:$0xff] %vm1449, 0.0
    %1453 = vst.msk [vmem:[#allocation3 + $0x18] sm:$0xff] %vm1449, 0.0
    %1454 = vst.msk [vmem:[#allocation3 + $0x20] sm:$0x3] %vm1000, 0.0
    %1455 = vst.msk [vmem:[#allocation3 + $0x28] sm:$0xff] %vm1449, 0.0
    %1456 = vst.msk [vmem:[#allocation3 + $0x30] sm:$0xff] %vm1449, 0.0
    %1457 = vst.msk [vmem:[#allocation3 + $0x38] sm:$0xff] %vm1449, 0.0
    %1458 = vst.msk [vmem:[#allocation3 + $0x40] sm:$0xff] %vm1449, 0.0
    %1459 = vst.msk [vmem:[#allocation3 + $0x48] sm:$0x3] %vm1000, 0.0
    %vm1524 = vcmask 1041409
    %v1525 = vsel %vm1524, %v1014, %v1007
    %vm1526 = vcmask 1042434
    %v1527 = vsel %vm1526, %v1021, %v1525
    %vm1528 = vcmask 1043459
    %v1529 = vsel %vm1528, %v1028, %v1527
    %vm1530 = vcmask 1044484
    %v1531 = vsel %vm1530, %v1035, %v1529
    %vm1532 = vcmask 1045509
    %v1533 = vsel %vm1532, %v1042, %v1531
    %vm1534 = vcmask 1046534
    %v1535 = vsel %vm1534, %v1049, %v1533
    %vm1536 = vcmask 1047559
    %v1537 = vsel %vm1536, %v1056, %v1535
    %v1538 = vsel %vm1524, %v1070, %v1063
    %v1539 = vsel %vm1526, %v1077, %v1538
    %v1540 = vsel %vm1528, %v1084, %v1539
    %v1541 = vsel %vm1530, %v1091, %v1540
    %v1542 = vsel %vm1532, %v1098, %v1541
    %v1543 = vsel %vm1534, %v1105, %v1542
    %v1544 = vsel %vm1536, %v1112, %v1543
    %v1545 = vsel %vm1524, %v1126, %v1119
    %v1546 = vsel %vm1526, %v1133, %v1545
    %v1547 = vsel %vm1528, %v1140, %v1546
    %v1548 = vsel %vm1530, %v1147, %v1547
    %v1549 = vsel %vm1532, %v1154, %v1548
    %v1550 = vsel %vm1534, %v1161, %v1549
    %v1551 = vsel %vm1536, %v1168, %v1550
    %v1552 = vsel %vm1524, %v1182, %v1175
    %v1553 = vsel %vm1526, %v1189, %v1552
    %v1554 = vsel %vm1528, %v1196, %v1553
    %v1555 = vsel %vm1530, %v1203, %v1554
    %v1556 = vsel %vm1532, %v1210, %v1555
    %v1557 = vsel %vm1534, %v1217, %v1556
    %v1558 = vsel %vm1536, %v1224, %v1557
    %v1559 = vsel %vm1524, %v1238, %v1231
    %v1560 = vsel %vm1526, %v1245, %v1559
    %v1561 = vsel %vm1528, %v1252, %v1560
    %v1562 = vsel %vm1530, %v1259, %v1561
    %v1563 = vsel %vm1532, %v1266, %v1562
    %v1564 = vsel %vm1534, %v1273, %v1563
    %v1565 = vsel %vm1536, %v1280, %v1564
    %v1566 = vsel %vm1524, %v1294, %v1287
    %v1567 = vsel %vm1526, %v1301, %v1566
    %v1568 = vsel %vm1528, %v1308, %v1567
    %v1569 = vsel %vm1530, %v1315, %v1568
    %v1570 = vsel %vm1532, %v1322, %v1569
    %v1571 = vsel %vm1534, %v1329, %v1570
    %v1572 = vsel %vm1536, %v1336, %v1571
    %v1573 = vsel %vm1524, %v1350, %v1343
    %v1574 = vsel %vm1526, %v1357, %v1573
    %v1575 = vsel %vm1528, %v1364, %v1574
    %v1576 = vsel %vm1530, %v1371, %v1575
    %v1577 = vsel %vm1532, %v1378, %v1576
    %v1578 = vsel %vm1534, %v1385, %v1577
    %v1579 = vsel %vm1536, %v1392, %v1578
    %v1580 = vsel %vm1524, %v1406, %v1399
    %v1581 = vsel %vm1526, %v1413, %v1580
    %v1582 = vsel %vm1528, %v1420, %v1581
    %v1583 = vsel %vm1530, %v1427, %v1582
    %v1584 = vsel %vm1532, %v1434, %v1583
    %v1585 = vsel %vm1534, %v1441, %v1584
    %v1586 = vsel %vm1536, %v1448, %v1585
    %1595 = vst.msk [vmem:[#allocation3 + $0x1] sm:$0xff] %vm1449, %v1537
    %1596 = vst.msk [vmem:[#allocation3 + $0x9] sm:$0xff] %vm1449, %v1544
    %1597 = vst.msk [vmem:[#allocation3 + $0x11] sm:$0xff] %vm1449, %v1551
    %1598 = vst.msk [vmem:[#allocation3 + $0x19] sm:$0xff] %vm1449, %v1558
    %1599 = vst.msk [vmem:[#allocation3 + $0x29] sm:$0xff] %vm1449, %v1565
    %1600 = vst.msk [vmem:[#allocation3 + $0x31] sm:$0xff] %vm1449, %v1572
    %1601 = vst.msk [vmem:[#allocation3 + $0x39] sm:$0xff] %vm1449, %v1579
    %1602 = vst.msk [vmem:[#allocation3 + $0x41] sm:$0xff] %vm1449, %v1586
    %v1603 = vld [vmem:[#allocation12] sm:$0xff]
    %v1604 = vld [vmem:[#allocation12 + $0x8] sm:$0xff]
    %v1605 = vld [vmem:[#allocation12 + $0x10] sm:$0xff]
    %v1606 = vld [vmem:[#allocation3] sm:$0xff]
    %v1607 = vld [vmem:[#allocation3 + $0x8] sm:$0xff]
    %v1608 = vld [vmem:[#allocation3 + $0x10] sm:$0xff]
    %v1609 = vld [vmem:[#allocation3 + $0x18] sm:$0xff]
    %v1610 = vld [vmem:[#allocation3 + $0x20] sm:$0x3]
    %v1611 = vld [vmem:[#allocation3 + $0x28] sm:$0xff]
    %v1612 = vld [vmem:[#allocation3 + $0x30] sm:$0xff]
    %v1613 = vld [vmem:[#allocation3 + $0x38] sm:$0xff]
    %v1614 = vld [vmem:[#allocation3 + $0x40] sm:$0xff]
    %v1615 = vld [vmem:[#allocation3 + $0x48] sm:$0x3]
    %v1616 = vpack.c.bf16 %v1607, %v1606
    %v1617 = vpack.c.bf16 %v1609, %v1608
    %v1618 = vpack.c.bf16 %v1612, %v1611
    %v1619 = vpack.c.bf16 %v1614, %v1613
    %v1620 = vpack.c.bf16 %v1603, %v1603
    %v1631 = vrot.slane %v1606, 1
    %v1632 = vrot.slane %v1607, 1
    %v1633 = vsel %vm467, %v1631, %v1632
    %v1634 = vrot.slane %v1608, 1
    %v1635 = vsel %vm467, %v1632, %v1634
    %v1636 = vrot.slane %v1609, 1
    %v1637 = vsel %vm467, %v1634, %v1636
    %v1638 = vrot.slane %v1610, 1
    %v1639 = vsel %vm467, %v1636, %v1638
    %v1640 = vrot.slane %v1611, 1
    %v1641 = vrot.slane %v1612, 1
    %v1642 = vsel %vm467, %v1640, %v1641
    %v1643 = vrot.slane %v1613, 1
    %v1644 = vsel %vm467, %v1641, %v1643
    %v1645 = vrot.slane %v1614, 1
    %v1646 = vsel %vm467, %v1643, %v1645
    %v1647 = vrot.slane %v1615, 1
    %v1648 = vsel %vm467, %v1645, %v1647
    %v1657 = vpack.c.bf16 %v1635, %v1633
    %v1658 = vpack.c.bf16 %v1639, %v1637
    %v1659 = vpack.c.bf16 %v1644, %v1642
    %v1660 = vpack.c.bf16 %v1648, %v1646
    %v1661 = vpack.c.bf16 %v1604, %v1604
    %v1663 = vsel %vm1449, %v1657, 0
    %v1666 = vsel %vm1449, %v1658, 0
    %v1669 = vsel %vm1449, %v1659, 0
    %v1672 = vsel %vm1449, %v1660, 0
    %vm1674 = vcmask 1043456
    %v1676 = vsel %vm1674, %v1661, 0
    %1678 = vmatpush.bf16.msra.mxu0 0
    %1679 = vmatpush.bf16.msra.mxu0 0
    %1680 = vmatpush.bf16.msra.mxu0 0
    %1681 = vmatpush.bf16.msra.mxu0 0
    %1682 = vmatpush.bf16.msra.mxu0 0
    %1683 = vmatpush.bf16.msra.mxu0 0
    %1684 = vmatpush.bf16.msra.mxu0 0
    %1685 = vmatpush.bf16.msra.mxu0 %v1676
    %1686 = vmatmul.bf16.gmra.mxu0 %v1663
    %v1687 = vpop.f32.mrf.mxu0
    %v1688 = vadd.f32 0.0, %v1687
    %v1689 = vpop.f32.mrf.mxu0
    %v1690 = vadd.f32 0.0, %v1689
    %1691 = vmatmul.bf16.gmra.mxu0 %v1666
    %v1692 = vpop.f32.mrf.mxu0
    %v1693 = vadd.f32 0.0, %v1692
    %v1694 = vpop.f32.mrf.mxu0
    %v1695 = vadd.f32 0.0, %v1694
    %1696 = vmatmul.bf16.gmra.mxu0 %v1669
    %v1697 = vpop.f32.mrf.mxu0
    %v1698 = vadd.f32 0.0, %v1697
    %v1699 = vpop.f32.mrf.mxu0
    %v1700 = vadd.f32 0.0, %v1699
    %1701 = vmatmul.bf16.gmra.mxu0 %v1672
    %v1702 = vpop.f32.mrf.mxu0
    %v1703 = vadd.f32 0.0, %v1702
    %v1704 = vpop.f32.mrf.mxu0
    %v1705 = vadd.f32 0.0, %v1704
    %1706 = vdwg.mxu0
    %v1708 = vsel %vm1449, %v1616, 0
    %v1711 = vsel %vm1449, %v1617, 0
    %v1714 = vsel %vm1449, %v1618, 0
    %v1717 = vsel %vm1449, %v1619, 0
    %v1720 = vsel %vm1674, %v1620, 0
    %1722 = vmatpush.bf16.msra.mxu0 0
    %1723 = vmatpush.bf16.msra.mxu0 0
    %1724 = vmatpush.bf16.msra.mxu0 0
    %1725 = vmatpush.bf16.msra.mxu0 0
    %1726 = vmatpush.bf16.msra.mxu0 0
    %1727 = vmatpush.bf16.msra.mxu0 0
    %1728 = vmatpush.bf16.msra.mxu0 0
    %1729 = vmatpush.bf16.msra.mxu0 %v1720
    %1730 = vmatmul.bf16.gmra.mxu0 %v1708
    %v1731 = vpop.f32.mrf.mxu0
    %v1732 = vadd.f32 %v1688, %v1731
    %v1733 = vpop.f32.mrf.mxu0
    %v1734 = vadd.f32 %v1690, %v1733
    %1735 = vmatmul.bf16.gmra.mxu0 %v1711
    %v1736 = vpop.f32.mrf.mxu0
    %v1737 = vadd.f32 %v1693, %v1736
    %v1738 = vpop.f32.mrf.mxu0
    %v1739 = vadd.f32 %v1695, %v1738
    %1740 = vmatmul.bf16.gmra.mxu0 %v1714
    %v1741 = vpop.f32.mrf.mxu0
    %v1742 = vadd.f32 %v1698, %v1741
    %v1743 = vpop.f32.mrf.mxu0
    %v1744 = vadd.f32 %v1700, %v1743
    %1745 = vmatmul.bf16.gmra.mxu0 %v1717
    %v1746 = vpop.f32.mrf.mxu0
    %v1747 = vadd.f32 %v1703, %v1746
    %v1748 = vpop.f32.mrf.mxu0
    %v1749 = vadd.f32 %v1705, %v1748
    %1750 = vdwg.mxu0
    %v1751 = vrot.slane %v1606, 2
    %v1752 = vrot.slane %v1607, 2
    %v1753 = vsel %vm680, %v1751, %v1752
    %v1754 = vrot.slane %v1608, 2
    %v1755 = vsel %vm680, %v1752, %v1754
    %v1756 = vrot.slane %v1609, 2
    %v1757 = vsel %vm680, %v1754, %v1756
    %v1758 = vrot.slane %v1610, 2
    %v1759 = vsel %vm680, %v1756, %v1758
    %v1760 = vrot.slane %v1611, 2
    %v1761 = vrot.slane %v1612, 2
    %v1762 = vsel %vm680, %v1760, %v1761
    %v1763 = vrot.slane %v1613, 2
    %v1764 = vsel %vm680, %v1761, %v1763
    %v1765 = vrot.slane %v1614, 2
    %v1766 = vsel %vm680, %v1763, %v1765
    %v1767 = vrot.slane %v1615, 2
    %v1768 = vsel %vm680, %v1765, %v1767
    %v1777 = vpack.c.bf16 %v1755, %v1753
    %v1778 = vpack.c.bf16 %v1759, %v1757
    %v1779 = vpack.c.bf16 %v1764, %v1762
    %v1780 = vpack.c.bf16 %v1768, %v1766
    %v1781 = vpack.c.bf16 %v1605, %v1605
    %v1783 = vsel %vm1449, %v1777, 0
    %v1786 = vsel %vm1449, %v1778, 0
    %v1789 = vsel %vm1449, %v1779, 0
    %v1792 = vsel %vm1449, %v1780, 0
    %v1795 = vsel %vm1674, %v1781, 0
    %1797 = vmatpush.bf16.msra.mxu0 0
    %1798 = vmatpush.bf16.msra.mxu0 0
    %1799 = vmatpush.bf16.msra.mxu0 0
    %1800 = vmatpush.bf16.msra.mxu0 0
    %1801 = vmatpush.bf16.msra.mxu0 0
    %1802 = vmatpush.bf16.msra.mxu0 0
    %1803 = vmatpush.bf16.msra.mxu0 0
    %1804 = vmatpush.bf16.msra.mxu0 %v1795
    %1805 = vmatmul.bf16.gmra.mxu0 %v1783
    %v1806 = vpop.f32.mrf.mxu0
    %v1807 = vadd.f32 0.0, %v1806
    %v1808 = vpop.f32.mrf.mxu0
    %v1809 = vadd.f32 0.0, %v1808
    %1810 = vmatmul.bf16.gmra.mxu0 %v1786
    %v1811 = vpop.f32.mrf.mxu0
    %v1812 = vadd.f32 0.0, %v1811
    %v1813 = vpop.f32.mrf.mxu0
    %v1814 = vadd.f32 0.0, %v1813
    %1815 = vmatmul.bf16.gmra.mxu0 %v1789
    %v1816 = vpop.f32.mrf.mxu0
    %v1817 = vadd.f32 0.0, %v1816
    %v1818 = vpop.f32.mrf.mxu0
    %v1819 = vadd.f32 0.0, %v1818
    %1820 = vmatmul.bf16.gmra.mxu0 %v1792
    %v1821 = vpop.f32.mrf.mxu0
    %v1822 = vadd.f32 0.0, %v1821
    %v1823 = vpop.f32.mrf.mxu0
    %v1824 = vadd.f32 0.0, %v1823
    %1825 = vdwg.mxu0
    %v1826 = vadd.f32 %v1732, %v1807
    %v1827 = vadd.f32 %v1734, %v1809
    %v1828 = vadd.f32 %v1737, %v1812
    %v1829 = vadd.f32 %v1739, %v1814
    %v1830 = vadd.f32 %v1742, %v1817
    %v1831 = vadd.f32 %v1744, %v1819
    %v1832 = vadd.f32 %v1747, %v1822
    %v1833 = vadd.f32 %v1749, %v1824
    %v1834 = vld [vmem:[#allocation14] sm:$0x1]
    %v1836 = vperm.slane %v1834, 0
    %v1838 = vmul.f32 %v1826, %v1836
    %v1839 = vmul.f32 %v1827, %v1836
    %v1840 = vmul.f32 %v1828, %v1836
    %v1841 = vmul.f32 %v1829, %v1836
    %v1842 = vmul.f32 %v1830, %v1836
    %v1843 = vmul.f32 %v1831, %v1836
    %v1844 = vmul.f32 %v1832, %v1836
    %v1845 = vmul.f32 %v1833, %v1836
    %v1846 = vld [vmem:[#allocation15] sm:$0x1]
    %v1848 = vperm.slane %v1846, 0
    %v1850 = vadd.f32 %v1838, %v1848
    %v1851 = vadd.f32 %v1839, %v1848
    %v1852 = vadd.f32 %v1840, %v1848
    %v1853 = vadd.f32 %v1841, %v1848
    %v1854 = vadd.f32 %v1842, %v1848
    %v1855 = vadd.f32 %v1843, %v1848
    %v1856 = vadd.f32 %v1844, %v1848
    %v1857 = vadd.f32 %v1845, %v1848
    %v1858 = vmax.f32 %v1850, 0.0
    %v1859 = vmax.f32 %v1851, 0.0
    %v1860 = vmax.f32 %v1852, 0.0
    %v1861 = vmax.f32 %v1853, 0.0
    %v1862 = vmax.f32 %v1854, 0.0
    %v1863 = vmax.f32 %v1855, 0.0
    %v1864 = vmax.f32 %v1856, 0.0
    %v1865 = vmax.f32 %v1857, 0.0
    %v1874 = vrot.slane %v1858, 2
    %v1875 = vrot.slane %v1858, 4
    %v1876 = vrot.slane %v1858, 6
    %v1877 = vrot.slane %v1859, 2
    %v1878 = vrot.slane %v1859, 4
    %v1879 = vrot.slane %v1859, 6
    %v1880 = vrot.slane %v1860, 2
    %v1881 = vrot.slane %v1860, 4
    %v1882 = vrot.slane %v1860, 6
    %v1883 = vrot.slane %v1861, 2
    %v1884 = vrot.slane %v1861, 4
    %v1885 = vrot.slane %v1861, 6
    %v1886 = vrot.slane %v1862, 2
    %v1887 = vrot.slane %v1862, 4
    %v1888 = vrot.slane %v1862, 6
    %v1889 = vrot.slane %v1863, 2
    %v1890 = vrot.slane %v1863, 4
    %v1891 = vrot.slane %v1863, 6
    %v1892 = vrot.slane %v1864, 2
    %v1893 = vrot.slane %v1864, 4
    %v1894 = vrot.slane %v1864, 6
    %v1895 = vrot.slane %v1865, 2
    %v1896 = vrot.slane %v1865, 4
    %v1897 = vrot.slane %v1865, 6
    %vm1922 = vcmask 123904
    %v1923 = vsel %vm1922, %v1858, -inf
    %v1924 = vrot.slane %v1923, 4
    %v1925 = vmax.f32 %v1923, %v1924
    %v1926 = vrot.slane %v1925, 2
    %v1927 = vmax.f32 %v1925, %v1926
    %v1928 = vrot.slane %v1927, 1
    %v1929 = vmax.f32 %v1927, %v1928
    %v1930 = vsel %vm1922, %v1874, -inf
    %v1931 = vrot.slane %v1930, 4
    %v1932 = vmax.f32 %v1930, %v1931
    %v1933 = vrot.slane %v1932, 2
    %v1934 = vmax.f32 %v1932, %v1933
    %v1935 = vrot.slane %v1934, 1
    %v1936 = vmax.f32 %v1934, %v1935
    %v1937 = vsel %vm1922, %v1875, -inf
    %v1938 = vrot.slane %v1937, 4
    %v1939 = vmax.f32 %v1937, %v1938
    %v1940 = vrot.slane %v1939, 2
    %v1941 = vmax.f32 %v1939, %v1940
    %v1942 = vrot.slane %v1941, 1
    %v1943 = vmax.f32 %v1941, %v1942
    %v1944 = vsel %vm1922, %v1876, -inf
    %v1945 = vrot.slane %v1944, 4
    %v1946 = vmax.f32 %v1944, %v1945
    %v1947 = vrot.slane %v1946, 2
    %v1948 = vmax.f32 %v1946, %v1947
    %v1949 = vrot.slane %v1948, 1
    %v1950 = vmax.f32 %v1948, %v1949
    %v1951 = vsel %vm1922, %v1859, -inf
    %v1952 = vrot.slane %v1951, 4
    %v1953 = vmax.f32 %v1951, %v1952
    %v1954 = vrot.slane %v1953, 2
    %v1955 = vmax.f32 %v1953, %v1954
    %v1956 = vrot.slane %v1955, 1
    %v1957 = vmax.f32 %v1955, %v1956
    %v1958 = vsel %vm1922, %v1877, -inf
    %v1959 = vrot.slane %v1958, 4
    %v1960 = vmax.f32 %v1958, %v1959
    %v1961 = vrot.slane %v1960, 2
    %v1962 = vmax.f32 %v1960, %v1961
    %v1963 = vrot.slane %v1962, 1
    %v1964 = vmax.f32 %v1962, %v1963
    %v1965 = vsel %vm1922, %v1878, -inf
    %v1966 = vrot.slane %v1965, 4
    %v1967 = vmax.f32 %v1965, %v1966
    %v1968 = vrot.slane %v1967, 2
    %v1969 = vmax.f32 %v1967, %v1968
    %v1970 = vrot.slane %v1969, 1
    %v1971 = vmax.f32 %v1969, %v1970
    %v1972 = vsel %vm1922, %v1879, -inf
    %v1973 = vrot.slane %v1972, 4
    %v1974 = vmax.f32 %v1972, %v1973
    %v1975 = vrot.slane %v1974, 2
    %v1976 = vmax.f32 %v1974, %v1975
    %v1977 = vrot.slane %v1976, 1
    %v1978 = vmax.f32 %v1976, %v1977
    %v1979 = vsel %vm1922, %v1860, -inf
    %v1980 = vrot.slane %v1979, 4
    %v1981 = vmax.f32 %v1979, %v1980
    %v1982 = vrot.slane %v1981, 2
    %v1983 = vmax.f32 %v1981, %v1982
    %v1984 = vrot.slane %v1983, 1
    %v1985 = vmax.f32 %v1983, %v1984
    %v1986 = vsel %vm1922, %v1880, -inf
    %v1987 = vrot.slane %v1986, 4
    %v1988 = vmax.f32 %v1986, %v1987
    %v1989 = vrot.slane %v1988, 2
    %v1990 = vmax.f32 %v1988, %v1989
    %v1991 = vrot.slane %v1990, 1
    %v1992 = vmax.f32 %v1990, %v1991
    %v1993 = vsel %vm1922, %v1881, -inf
    %v1994 = vrot.slane %v1993, 4
    %v1995 = vmax.f32 %v1993, %v1994
    %v1996 = vrot.slane %v1995, 2
    %v1997 = vmax.f32 %v1995, %v1996
    %v1998 = vrot.slane %v1997, 1
    %v1999 = vmax.f32 %v1997, %v1998
    %v2000 = vsel %vm1922, %v1882, -inf
    %v2001 = vrot.slane %v2000, 4
    %v2002 = vmax.f32 %v2000, %v2001
    %v2003 = vrot.slane %v2002, 2
    %v2004 = vmax.f32 %v2002, %v2003
    %v2005 = vrot.slane %v2004, 1
    %v2006 = vmax.f32 %v2004, %v2005
    %v2007 = vsel %vm1922, %v1861, -inf
    %v2008 = vrot.slane %v2007, 4
    %v2009 = vmax.f32 %v2007, %v2008
    %v2010 = vrot.slane %v2009, 2
    %v2011 = vmax.f32 %v2009, %v2010
    %v2012 = vrot.slane %v2011, 1
    %v2013 = vmax.f32 %v2011, %v2012
    %v2014 = vsel %vm1922, %v1883, -inf
    %v2015 = vrot.slane %v2014, 4
    %v2016 = vmax.f32 %v2014, %v2015
    %v2017 = vrot.slane %v2016, 2
    %v2018 = vmax.f32 %v2016, %v2017
    %v2019 = vrot.slane %v2018, 1
    %v2020 = vmax.f32 %v2018, %v2019
    %v2021 = vsel %vm1922, %v1884, -inf
    %v2022 = vrot.slane %v2021, 4
    %v2023 = vmax.f32 %v2021, %v2022
    %v2024 = vrot.slane %v2023, 2
    %v2025 = vmax.f32 %v2023, %v2024
    %v2026 = vrot.slane %v2025, 1
    %v2027 = vmax.f32 %v2025, %v2026
    %v2028 = vsel %vm1922, %v1885, -inf
    %v2029 = vrot.slane %v2028, 4
    %v2030 = vmax.f32 %v2028, %v2029
    %v2031 = vrot.slane %v2030, 2
    %v2032 = vmax.f32 %v2030, %v2031
    %v2033 = vrot.slane %v2032, 1
    %v2034 = vmax.f32 %v2032, %v2033
    %v2035 = vsel %vm1922, %v1862, -inf
    %v2036 = vrot.slane %v2035, 4
    %v2037 = vmax.f32 %v2035, %v2036
    %v2038 = vrot.slane %v2037, 2
    %v2039 = vmax.f32 %v2037, %v2038
    %v2040 = vrot.slane %v2039, 1
    %v2041 = vmax.f32 %v2039, %v2040
    %v2042 = vsel %vm1922, %v1886, -inf
    %v2043 = vrot.slane %v2042, 4
    %v2044 = vmax.f32 %v2042, %v2043
    %v2045 = vrot.slane %v2044, 2
    %v2046 = vmax.f32 %v2044, %v2045
    %v2047 = vrot.slane %v2046, 1
    %v2048 = vmax.f32 %v2046, %v2047
    %v2049 = vsel %vm1922, %v1887, -inf
    %v2050 = vrot.slane %v2049, 4
    %v2051 = vmax.f32 %v2049, %v2050
    %v2052 = vrot.slane %v2051, 2
    %v2053 = vmax.f32 %v2051, %v2052
    %v2054 = vrot.slane %v2053, 1
    %v2055 = vmax.f32 %v2053, %v2054
    %v2056 = vsel %vm1922, %v1888, -inf
    %v2057 = vrot.slane %v2056, 4
    %v2058 = vmax.f32 %v2056, %v2057
    %v2059 = vrot.slane %v2058, 2
    %v2060 = vmax.f32 %v2058, %v2059
    %v2061 = vrot.slane %v2060, 1
    %v2062 = vmax.f32 %v2060, %v2061
    %v2063 = vsel %vm1922, %v1863, -inf
    %v2064 = vrot.slane %v2063, 4
    %v2065 = vmax.f32 %v2063, %v2064
    %v2066 = vrot.slane %v2065, 2
    %v2067 = vmax.f32 %v2065, %v2066
    %v2068 = vrot.slane %v2067, 1
    %v2069 = vmax.f32 %v2067, %v2068
    %v2070 = vsel %vm1922, %v1889, -inf
    %v2071 = vrot.slane %v2070, 4
    %v2072 = vmax.f32 %v2070, %v2071
    %v2073 = vrot.slane %v2072, 2
    %v2074 = vmax.f32 %v2072, %v2073
    %v2075 = vrot.slane %v2074, 1
    %v2076 = vmax.f32 %v2074, %v2075
    %v2077 = vsel %vm1922, %v1890, -inf
    %v2078 = vrot.slane %v2077, 4
    %v2079 = vmax.f32 %v2077, %v2078
    %v2080 = vrot.slane %v2079, 2
    %v2081 = vmax.f32 %v2079, %v2080
    %v2082 = vrot.slane %v2081, 1
    %v2083 = vmax.f32 %v2081, %v2082
    %v2084 = vsel %vm1922, %v1891, -inf
    %v2085 = vrot.slane %v2084, 4
    %v2086 = vmax.f32 %v2084, %v2085
    %v2087 = vrot.slane %v2086, 2
    %v2088 = vmax.f32 %v2086, %v2087
    %v2089 = vrot.slane %v2088, 1
    %v2090 = vmax.f32 %v2088, %v2089
    %v2091 = vsel %vm1922, %v1864, -inf
    %v2092 = vrot.slane %v2091, 4
    %v2093 = vmax.f32 %v2091, %v2092
    %v2094 = vrot.slane %v2093, 2
    %v2095 = vmax.f32 %v2093, %v2094
    %v2096 = vrot.slane %v2095, 1
    %v2097 = vmax.f32 %v2095, %v2096
    %v2098 = vsel %vm1922, %v1892, -inf
    %v2099 = vrot.slane %v2098, 4
    %v2100 = vmax.f32 %v2098, %v2099
    %v2101 = vrot.slane %v2100, 2
    %v2102 = vmax.f32 %v2100, %v2101
    %v2103 = vrot.slane %v2102, 1
    %v2104 = vmax.f32 %v2102, %v2103
    %v2105 = vsel %vm1922, %v1893, -inf
    %v2106 = vrot.slane %v2105, 4
    %v2107 = vmax.f32 %v2105, %v2106
    %v2108 = vrot.slane %v2107, 2
    %v2109 = vmax.f32 %v2107, %v2108
    %v2110 = vrot.slane %v2109, 1
    %v2111 = vmax.f32 %v2109, %v2110
    %v2112 = vsel %vm1922, %v1894, -inf
    %v2113 = vrot.slane %v2112, 4
    %v2114 = vmax.f32 %v2112, %v2113
    %v2115 = vrot.slane %v2114, 2
    %v2116 = vmax.f32 %v2114, %v2115
    %v2117 = vrot.slane %v2116, 1
    %v2118 = vmax.f32 %v2116, %v2117
    %v2119 = vsel %vm1922, %v1865, -inf
    %v2120 = vrot.slane %v2119, 4
    %v2121 = vmax.f32 %v2119, %v2120
    %v2122 = vrot.slane %v2121, 2
    %v2123 = vmax.f32 %v2121, %v2122
    %v2124 = vrot.slane %v2123, 1
    %v2125 = vmax.f32 %v2123, %v2124
    %v2126 = vsel %vm1922, %v1895, -inf
    %v2127 = vrot.slane %v2126, 4
    %v2128 = vmax.f32 %v2126, %v2127
    %v2129 = vrot.slane %v2128, 2
    %v2130 = vmax.f32 %v2128, %v2129
    %v2131 = vrot.slane %v2130, 1
    %v2132 = vmax.f32 %v2130, %v2131
    %v2133 = vsel %vm1922, %v1896, -inf
    %v2134 = vrot.slane %v2133, 4
    %v2135 = vmax.f32 %v2133, %v2134
    %v2136 = vrot.slane %v2135, 2
    %v2137 = vmax.f32 %v2135, %v2136
    %v2138 = vrot.slane %v2137, 1
    %v2139 = vmax.f32 %v2137, %v2138
    %v2140 = vsel %vm1922, %v1897, -inf
    %v2141 = vrot.slane %v2140, 4
    %v2142 = vmax.f32 %v2140, %v2141
    %v2143 = vrot.slane %v2142, 2
    %v2144 = vmax.f32 %v2142, %v2143
    %v2145 = vrot.slane %v2144, 1
    %v2146 = vmax.f32 %v2144, %v2145
    %vm2147 = vcmask 130048
    %2148 = vst.msk [vmem:[#allocation4] sm:$0xff] %vm2147, 0.0
    %2149 = vst.msk [vmem:[#allocation4 + $0x8] sm:$0xff] %vm2147, 0.0
    %2150 = vst.msk [vmem:[#allocation4 + $0x10] sm:$0x3] %vm1922, 0.0
    %2151 = vst.msk [vmem:[#allocation4 + $0x18] sm:$0xff] %vm2147, 0.0
    %2152 = vst.msk [vmem:[#allocation4 + $0x20] sm:$0xff] %vm2147, 0.0
    %2153 = vst.msk [vmem:[#allocation4 + $0x28] sm:$0x3] %vm1922, 0.0
    %v2186 = vsel %vm1524, %v1936, %v1929
    %v2187 = vsel %vm1526, %v1943, %v2186
    %v2188 = vsel %vm1528, %v1950, %v2187
    %v2189 = vsel %vm1530, %v1957, %v2188
    %v2190 = vsel %vm1532, %v1964, %v2189
    %v2191 = vsel %vm1534, %v1971, %v2190
    %v2192 = vsel %vm1536, %v1978, %v2191
    %v2193 = vsel %vm1524, %v1992, %v1985
    %v2194 = vsel %vm1526, %v1999, %v2193
    %v2195 = vsel %vm1528, %v2006, %v2194
    %v2196 = vsel %vm1530, %v2013, %v2195
    %v2197 = vsel %vm1532, %v2020, %v2196
    %v2198 = vsel %vm1534, %v2027, %v2197
    %v2199 = vsel %vm1536, %v2034, %v2198
    %v2200 = vsel %vm1524, %v2048, %v2041
    %v2201 = vsel %vm1526, %v2055, %v2200
    %v2202 = vsel %vm1528, %v2062, %v2201
    %v2203 = vsel %vm1530, %v2069, %v2202
    %v2204 = vsel %vm1532, %v2076, %v2203
    %v2205 = vsel %vm1534, %v2083, %v2204
    %v2206 = vsel %vm1536, %v2090, %v2205
    %v2207 = vsel %vm1524, %v2104, %v2097
    %v2208 = vsel %vm1526, %v2111, %v2207
    %v2209 = vsel %vm1528, %v2118, %v2208
    %v2210 = vsel %vm1530, %v2125, %v2209
    %v2211 = vsel %vm1532, %v2132, %v2210
    %v2212 = vsel %vm1534, %v2139, %v2211
    %v2213 = vsel %vm1536, %v2146, %v2212
    %2218 = vst.msk [vmem:[#allocation4 + $0x1] sm:$0xff] %vm2147, %v2192
    %2219 = vst.msk [vmem:[#allocation4 + $0x9] sm:$0xff] %vm2147, %v2199
    %2220 = vst.msk [vmem:[#allocation4 + $0x19] sm:$0xff] %vm2147, %v2206
    %2221 = vst.msk [vmem:[#allocation4 + $0x21] sm:$0xff] %vm2147, %v2213
    %v2222 = vld [vmem:[#allocation17] sm:$0xff]
    %v2223 = vld [vmem:[#allocation17 + $0x8] sm:$0xff]
    %v2224 = vld [vmem:[#allocation17 + $0x10] sm:$0xff]
    %v2225 = vld [vmem:[#allocation17 + $0x18] sm:$0xff]
    %v2226 = vld [vmem:[#allocation17 + $0x20] sm:$0xff]
    %v2227 = vld [vmem:[#allocation17 + $0x28] sm:$0xff]
    %v2228 = vld [vmem:[#allocation4] sm:$0xff]
    %v2229 = vld [vmem:[#allocation4 + $0x8] sm:$0xff]
    %v2230 = vld [vmem:[#allocation4 + $0x10] sm:$0x3]
    %v2231 = vld [vmem:[#allocation4 + $0x18] sm:$0xff]
    %v2232 = vld [vmem:[#allocation4 + $0x20] sm:$0xff]
    %v2233 = vld [vmem:[#allocation4 + $0x28] sm:$0x3]
    %v2234 = vpack.c.bf16 %v2229, %v2228
    %v2235 = vpack.c.bf16 %v2232, %v2231
    %v2236 = vpack.c.bf16 %v2223, %v2222
    %v2243 = vrot.slane %v2228, 1
    %v2244 = vrot.slane %v2229, 1
    %v2245 = vsel %vm467, %v2243, %v2244
    %v2246 = vrot.slane %v2230, 1
    %v2247 = vsel %vm467, %v2244, %v2246
    %v2248 = vrot.slane %v2231, 1
    %v2249 = vrot.slane %v2232, 1
    %v2250 = vsel %vm467, %v2248, %v2249
    %v2251 = vrot.slane %v2233, 1
    %v2252 = vsel %vm467, %v2249, %v2251
    %v2257 = vpack.c.bf16 %v2247, %v2245
    %v2258 = vpack.c.bf16 %v2252, %v2250
    %v2259 = vpack.c.bf16 %v2225, %v2224
    %v2261 = vsel %vm2147, %v2257, 0
    %v2264 = vsel %vm2147, %v2258, 0
    %2266 = vmatpush.bf16.msra.mxu0 0
    %2267 = vmatpush.bf16.msra.mxu0 0
    %2268 = vmatpush.bf16.msra.mxu0 0
    %2269 = vmatpush.bf16.msra.mxu0 0
    %2270 = vmatpush.bf16.msra.mxu0 0
    %2271 = vmatpush.bf16.msra.mxu0 0
    %2272 = vmatpush.bf16.msra.mxu0 0
    %2273 = vmatpush.bf16.msra.mxu0 %v2259
    %2274 = vmatmul.bf16.gmra.mxu0 %v2261
    %v2275 = vpop.f32.mrf.mxu0
    %v2276 = vadd.f32 0.0, %v2275
    %v2277 = vpop.f32.mrf.mxu0
    %v2278 = vadd.f32 0.0, %v2277
    %2279 = vmatmul.bf16.gmra.mxu0 %v2264
    %v2280 = vpop.f32.mrf.mxu0
    %v2281 = vadd.f32 0.0, %v2280
    %v2282 = vpop.f32.mrf.mxu0
    %v2283 = vadd.f32 0.0, %v2282
    %2284 = vdwg.mxu0
    %v2286 = vsel %vm2147, %v2234, 0
    %v2289 = vsel %vm2147, %v2235, 0
    %2291 = vmatpush.bf16.msra.mxu0 0
    %2292 = vmatpush.bf16.msra.mxu0 0
    %2293 = vmatpush.bf16.msra.mxu0 0
    %2294 = vmatpush.bf16.msra.mxu0 0
    %2295 = vmatpush.bf16.msra.mxu0 0
    %2296 = vmatpush.bf16.msra.mxu0 0
    %2297 = vmatpush.bf16.msra.mxu0 0
    %2298 = vmatpush.bf16.msra.mxu0 %v2236
    %2299 = vmatmul.bf16.gmra.mxu0 %v2286
    %v2300 = vpop.f32.mrf.mxu0
    %v2301 = vadd.f32 %v2276, %v2300
    %v2302 = vpop.f32.mrf.mxu0
    %v2303 = vadd.f32 %v2278, %v2302
    %2304 = vmatmul.bf16.gmra.mxu0 %v2289
    %v2305 = vpop.f32.mrf.mxu0
    %v2306 = vadd.f32 %v2281, %v2305
    %v2307 = vpop.f32.mrf.mxu0
    %v2308 = vadd.f32 %v2283, %v2307
    %2309 = vdwg.mxu0
    %v2310 = vrot.slane %v2228, 2
    %v2311 = vrot.slane %v2229, 2
    %v2312 = vsel %vm680, %v2310, %v2311
    %v2313 = vrot.slane %v2230, 2
    %v2314 = vsel %vm680, %v2311, %v2313
    %v2315 = vrot.slane %v2231, 2
    %v2316 = vrot.slane %v2232, 2
    %v2317 = vsel %vm680, %v2315, %v2316
    %v2318 = vrot.slane %v2233, 2
    %v2319 = vsel %vm680, %v2316, %v2318
    %v2324 = vpack.c.bf16 %v2314, %v2312
    %v2325 = vpack.c.bf16 %v2319, %v2317
    %v2326 = vpack.c.bf16 %v2227, %v2226
    %v2328 = vsel %vm2147, %v2324, 0
    %v2331 = vsel %vm2147, %v2325, 0
    %2333 = vmatpush.bf16.msra.mxu0 0
    %2334 = vmatpush.bf16.msra.mxu0 0
    %2335 = vmatpush.bf16.msra.mxu0 0
    %2336 = vmatpush.bf16.msra.mxu0 0
    %2337 = vmatpush.bf16.msra.mxu0 0
    %2338 = vmatpush.bf16.msra.mxu0 0
    %2339 = vmatpush.bf16.msra.mxu0 0
    %2340 = vmatpush.bf16.msra.mxu0 %v2326
    %2341 = vmatmul.bf16.gmra.mxu0 %v2328
    %v2342 = vpop.f32.mrf.mxu0
    %v2343 = vadd.f32 0.0, %v2342
    %v2344 = vpop.f32.mrf.mxu0
    %v2345 = vadd.f32 0.0, %v2344
    %2346 = vmatmul.bf16.gmra.mxu0 %v2331
    %v2347 = vpop.f32.mrf.mxu0
    %v2348 = vadd.f32 0.0, %v2347
    %v2349 = vpop.f32.mrf.mxu0
    %v2350 = vadd.f32 0.0, %v2349
    %2351 = vdwg.mxu0
    %v2352 = vadd.f32 %v2301, %v2343
    %v2353 = vadd.f32 %v2303, %v2345
    %v2354 = vadd.f32 %v2306, %v2348
    %v2355 = vadd.f32 %v2308, %v2350
    %v2356 = vld [vmem:[#allocation18] sm:$0x1]
    %v2358 = vperm.slane %v2356, 0
    %v2360 = vmul.f32 %v2352, %v2358
    %v2361 = vmul.f32 %v2353, %v2358
    %v2362 = vmul.f32 %v2354, %v2358
    %v2363 = vmul.f32 %v2355, %v2358
    %v2364 = vld [vmem:[#allocation20] sm:$0x1]
    %v2366 = vperm.slane %v2364, 0
    %v2368 = vadd.f32 %v2360, %v2366
    %v2369 = vadd.f32 %v2361, %v2366
    %v2370 = vadd.f32 %v2362, %v2366
    %v2371 = vadd.f32 %v2363, %v2366
    %v2372 = vmax.f32 %v2368, 0.0
    %v2373 = vmax.f32 %v2369, 0.0
    %v2374 = vmax.f32 %v2370, 0.0
    %v2375 = vmax.f32 %v2371, 0.0
    %v2380 = vrot.slane %v2372, 2
    %v2381 = vrot.slane %v2372, 4
    %v2382 = vrot.slane %v2372, 6
    %v2383 = vrot.slane %v2373, 2
    %v2384 = vrot.slane %v2373, 4
    %v2385 = vrot.slane %v2373, 6
    %v2386 = vrot.slane %v2374, 2
    %v2387 = vrot.slane %v2374, 4
    %v2388 = vrot.slane %v2374, 6
    %v2389 = vrot.slane %v2375, 2
    %v2390 = vrot.slane %v2375, 4
    %v2391 = vrot.slane %v2375, 6
    %vm2404 = vcmask 254976
    %v2405 = vsel %vm2404, %v2372, -inf
    %v2406 = vrot.slane %v2405, 4
    %v2407 = vmax.f32 %v2405, %v2406
    %v2408 = vrot.slane %v2407, 2
    %v2409 = vmax.f32 %v2407, %v2408
    %v2410 = vrot.slane %v2409, 1
    %v2411 = vmax.f32 %v2409, %v2410
    %v2412 = vsel %vm2404, %v2380, -inf
    %v2413 = vrot.slane %v2412, 4
    %v2414 = vmax.f32 %v2412, %v2413
    %v2415 = vrot.slane %v2414, 2
    %v2416 = vmax.f32 %v2414, %v2415
    %v2417 = vrot.slane %v2416, 1
    %v2418 = vmax.f32 %v2416, %v2417
    %v2419 = vsel %vm2404, %v2381, -inf
    %v2420 = vrot.slane %v2419, 4
    %v2421 = vmax.f32 %v2419, %v2420
    %v2422 = vrot.slane %v2421, 2
    %v2423 = vmax.f32 %v2421, %v2422
    %v2424 = vrot.slane %v2423, 1
    %v2425 = vmax.f32 %v2423, %v2424
    %v2426 = vsel %vm2404, %v2382, -inf
    %v2427 = vrot.slane %v2426, 4
    %v2428 = vmax.f32 %v2426, %v2427
    %v2429 = vrot.slane %v2428, 2
    %v2430 = vmax.f32 %v2428, %v2429
    %v2431 = vrot.slane %v2430, 1
    %v2432 = vmax.f32 %v2430, %v2431
    %v2433 = vsel %vm2404, %v2373, -inf
    %v2434 = vrot.slane %v2433, 4
    %v2435 = vmax.f32 %v2433, %v2434
    %v2436 = vrot.slane %v2435, 2
    %v2437 = vmax.f32 %v2435, %v2436
    %v2438 = vrot.slane %v2437, 1
    %v2439 = vmax.f32 %v2437, %v2438
    %v2440 = vsel %vm2404, %v2383, -inf
    %v2441 = vrot.slane %v2440, 4
    %v2442 = vmax.f32 %v2440, %v2441
    %v2443 = vrot.slane %v2442, 2
    %v2444 = vmax.f32 %v2442, %v2443
    %v2445 = vrot.slane %v2444, 1
    %v2446 = vmax.f32 %v2444, %v2445
    %v2447 = vsel %vm2404, %v2384, -inf
    %v2448 = vrot.slane %v2447, 4
    %v2449 = vmax.f32 %v2447, %v2448
    %v2450 = vrot.slane %v2449, 2
    %v2451 = vmax.f32 %v2449, %v2450
    %v2452 = vrot.slane %v2451, 1
    %v2453 = vmax.f32 %v2451, %v2452
    %v2454 = vsel %vm2404, %v2385, -inf
    %v2455 = vrot.slane %v2454, 4
    %v2456 = vmax.f32 %v2454, %v2455
    %v2457 = vrot.slane %v2456, 2
    %v2458 = vmax.f32 %v2456, %v2457
    %v2459 = vrot.slane %v2458, 1
    %v2460 = vmax.f32 %v2458, %v2459
    %v2461 = vsel %vm2404, %v2374, -inf
    %v2462 = vrot.slane %v2461, 4
    %v2463 = vmax.f32 %v2461, %v2462
    %v2464 = vrot.slane %v2463, 2
    %v2465 = vmax.f32 %v2463, %v2464
    %v2466 = vrot.slane %v2465, 1
    %v2467 = vmax.f32 %v2465, %v2466
    %v2468 = vsel %vm2404, %v2386, -inf
    %v2469 = vrot.slane %v2468, 4
    %v2470 = vmax.f32 %v2468, %v2469
    %v2471 = vrot.slane %v2470, 2
    %v2472 = vmax.f32 %v2470, %v2471
    %v2473 = vrot.slane %v2472, 1
    %v2474 = vmax.f32 %v2472, %v2473
    %v2475 = vsel %vm2404, %v2387, -inf
    %v2476 = vrot.slane %v2475, 4
    %v2477 = vmax.f32 %v2475, %v2476
    %v2478 = vrot.slane %v2477, 2
    %v2479 = vmax.f32 %v2477, %v2478
    %v2480 = vrot.slane %v2479, 1
    %v2481 = vmax.f32 %v2479, %v2480
    %v2482 = vsel %vm2404, %v2388, -inf
    %v2483 = vrot.slane %v2482, 4
    %v2484 = vmax.f32 %v2482, %v2483
    %v2485 = vrot.slane %v2484, 2
    %v2486 = vmax.f32 %v2484, %v2485
    %v2487 = vrot.slane %v2486, 1
    %v2488 = vmax.f32 %v2486, %v2487
    %v2489 = vsel %vm2404, %v2375, -inf
    %v2490 = vrot.slane %v2489, 4
    %v2491 = vmax.f32 %v2489, %v2490
    %v2492 = vrot.slane %v2491, 2
    %v2493 = vmax.f32 %v2491, %v2492
    %v2494 = vrot.slane %v2493, 1
    %v2495 = vmax.f32 %v2493, %v2494
    %v2496 = vsel %vm2404, %v2389, -inf
    %v2497 = vrot.slane %v2496, 4
    %v2498 = vmax.f32 %v2496, %v2497
    %v2499 = vrot.slane %v2498, 2
    %v2500 = vmax.f32 %v2498, %v2499
    %v2501 = vrot.slane %v2500, 1
    %v2502 = vmax.f32 %v2500, %v2501
    %v2503 = vsel %vm2404, %v2390, -inf
    %v2504 = vrot.slane %v2503, 4
    %v2505 = vmax.f32 %v2503, %v2504
    %v2506 = vrot.slane %v2505, 2
    %v2507 = vmax.f32 %v2505, %v2506
    %v2508 = vrot.slane %v2507, 1
    %v2509 = vmax.f32 %v2507, %v2508
    %v2510 = vsel %vm2404, %v2391, -inf
    %v2511 = vrot.slane %v2510, 4
    %v2512 = vmax.f32 %v2510, %v2511
    %v2513 = vrot.slane %v2512, 2
    %v2514 = vmax.f32 %v2512, %v2513
    %v2515 = vrot.slane %v2514, 1
    %v2516 = vmax.f32 %v2514, %v2515
    %vm2517 = vcmask 261120
    %2518 = vst.msk [vmem:[#allocation5] sm:$0xff] %vm2517, 0.0
    %2519 = vst.msk [vmem:[#allocation5 + $0x8] sm:$0x3] %vm2404, 0.0
    %2520 = vst.msk [vmem:[#allocation5 + $0x10] sm:$0xff] %vm2517, 0.0
    %2521 = vst.msk [vmem:[#allocation5 + $0x18] sm:$0x3] %vm2404, 0.0
    %v2538 = vsel %vm1524, %v2418, %v2411
    %v2539 = vsel %vm1526, %v2425, %v2538
    %v2540 = vsel %vm1528, %v2432, %v2539
    %v2541 = vsel %vm1530, %v2439, %v2540
    %v2542 = vsel %vm1532, %v2446, %v2541
    %v2543 = vsel %vm1534, %v2453, %v2542
    %v2544 = vsel %vm1536, %v2460, %v2543
    %v2545 = vsel %vm1524, %v2474, %v2467
    %v2546 = vsel %vm1526, %v2481, %v2545
    %v2547 = vsel %vm1528, %v2488, %v2546
    %v2548 = vsel %vm1530, %v2495, %v2547
    %v2549 = vsel %vm1532, %v2502, %v2548
    %v2550 = vsel %vm1534, %v2509, %v2549
    %v2551 = vsel %vm1536, %v2516, %v2550
    %2554 = vst.msk [vmem:[#allocation5 + $0x1] sm:$0xff] %vm2517, %v2544
    %2555 = vst.msk [vmem:[#allocation5 + $0x11] sm:$0xff] %vm2517, %v2551
    %v2556 = vld [vmem:[#allocation21] sm:$0xff]
    %v2557 = vld [vmem:[#allocation21 + $0x8] sm:$0xff]
    %v2558 = vld [vmem:[#allocation21 + $0x10] sm:$0xff]
    %v2559 = vld [vmem:[#allocation21 + $0x18] sm:$0xff]
    %v2560 = vld [vmem:[#allocation21 + $0x20] sm:$0xff]
    %v2561 = vld [vmem:[#allocation21 + $0x28] sm:$0xff]
    %v2562 = vld [vmem:[#allocation21 + $0x30] sm:$0xff]
    %v2563 = vld [vmem:[#allocation21 + $0x38] sm:$0xff]
    %v2564 = vld [vmem:[#allocation21 + $0x40] sm:$0xff]
    %v2565 = vld [vmem:[#allocation21 + $0x48] sm:$0xff]
    %v2566 = vld [vmem:[#allocation21 + $0x50] sm:$0xff]
    %v2567 = vld [vmem:[#allocation21 + $0x58] sm:$0xff]
    %v2568 = vld [vmem:[#allocation5] sm:$0xff]
    %v2569 = vld [vmem:[#allocation5 + $0x8] sm:$0x3]
    %v2570 = vld [vmem:[#allocation5 + $0x10] sm:$0xff]
    %v2571 = vld [vmem:[#allocation5 + $0x18] sm:$0x3]
    %v2572 = vpack.c.bf16 %v2570, %v2568
    %v2573 = vpack.c.bf16 %v2557, %v2556
    %v2574 = vpack.c.bf16 %v2559, %v2558
    %v2579 = vrot.slane %v2568, 1
    %v2580 = vrot.slane %v2569, 1
    %v2581 = vsel %vm467, %v2579, %v2580
    %v2582 = vrot.slane %v2570, 1
    %v2583 = vrot.slane %v2571, 1
    %v2584 = vsel %vm467, %v2582, %v2583
    %v2587 = vpack.c.bf16 %v2584, %v2581
    %v2588 = vpack.c.bf16 %v2561, %v2560
    %v2589 = vpack.c.bf16 %v2563, %v2562
    %v2591 = vsel %vm2517, %v2587, 0
    %2593 = vmatpush.bf16.msra.mxu0 0
    %2594 = vmatpush.bf16.msra.mxu0 0
    %2595 = vmatpush.bf16.msra.mxu0 0
    %2596 = vmatpush.bf16.msra.mxu0 0
    %2597 = vmatpush.bf16.msra.mxu0 0
    %2598 = vmatpush.bf16.msra.mxu0 0
    %2599 = vmatpush.bf16.msra.mxu0 %v2589
    %2600 = vmatpush.bf16.msra.mxu0 %v2588
    %2601 = vmatmul.bf16.gmra.mxu0 %v2591
    %v2602 = vpop.f32.mrf.mxu0
    %v2603 = vadd.f32 0.0, %v2602
    %v2604 = vpop.f32.mrf.mxu0
    %v2605 = vadd.f32 0.0, %v2604
    %2606 = vdwg.mxu0
    %v2608 = vsel %vm2517, %v2572, 0
    %2610 = vmatpush.bf16.msra.mxu0 0
    %2611 = vmatpush.bf16.msra.mxu0 0
    %2612 = vmatpush.bf16.msra.mxu0 0
    %2613 = vmatpush.bf16.msra.mxu0 0
    %2614 = vmatpush.bf16.msra.mxu0 0
    %2615 = vmatpush.bf16.msra.mxu0 0
    %2616 = vmatpush.bf16.msra.mxu0 %v2574
    %2617 = vmatpush.bf16.msra.mxu0 %v2573
    %2618 = vmatmul.bf16.gmra.mxu0 %v2608
    %v2619 = vpop.f32.mrf.mxu0
    %v2620 = vadd.f32 %v2603, %v2619
    %v2621 = vpop.f32.mrf.mxu0
    %v2622 = vadd.f32 %v2605, %v2621
    %2623 = vdwg.mxu0
    %v2624 = vrot.slane %v2568, 2
    %v2625 = vrot.slane %v2569, 2
    %v2626 = vsel %vm680, %v2624, %v2625
    %v2627 = vrot.slane %v2570, 2
    %v2628 = vrot.slane %v2571, 2
    %v2629 = vsel %vm680, %v2627, %v2628
    %v2632 = vpack.c.bf16 %v2629, %v2626
    %v2633 = vpack.c.bf16 %v2565, %v2564
    %v2634 = vpack.c.bf16 %v2567, %v2566
    %v2636 = vsel %vm2517, %v2632, 0
    %2638 = vmatpush.bf16.msra.mxu0 0
    %2639 = vmatpush.bf16.msra.mxu0 0
    %2640 = vmatpush.bf16.msra.mxu0 0
    %2641 = vmatpush.bf16.msra.mxu0 0
    %2642 = vmatpush.bf16.msra.mxu0 0
    %2643 = vmatpush.bf16.msra.mxu0 0
    %2644 = vmatpush.bf16.msra.mxu0 %v2634
    %2645 = vmatpush.bf16.msra.mxu0 %v2633
    %2646 = vmatmul.bf16.gmra.mxu0 %v2636
    %v2647 = vpop.f32.mrf.mxu0
    %v2648 = vadd.f32 0.0, %v2647
    %v2649 = vpop.f32.mrf.mxu0
    %v2650 = vadd.f32 0.0, %v2649
    %2651 = vdwg.mxu0
    %v2652 = vadd.f32 %v2620, %v2648
    %v2653 = vadd.f32 %v2622, %v2650
    %v2654 = vld [vmem:[%s25] sm:$0x1]
    %v2656 = vperm.slane %v2654, 0
    %v2658 = vmul.f32 %v2652, %v2656
    %v2659 = vmul.f32 %v2653, %v2656
    %v2660 = vld [vmem:[%s27] sm:$0x1]
    %v2662 = vperm.slane %v2660, 0
    %v2664 = vadd.f32 %v2658, %v2662
    %v2665 = vadd.f32 %v2659, %v2662
    %v2666 = vmax.f32 %v2664, 0.0
    %v2667 = vmax.f32 %v2665, 0.0
    %v2670 = vrot.slane %v2666, 2
    %v2671 = vrot.slane %v2666, 4
    %v2672 = vrot.slane %v2666, 6
    %v2673 = vrot.slane %v2667, 2
    %v2674 = vrot.slane %v2667, 4
    %v2675 = vrot.slane %v2667, 6
    %v2682 = vsel %vm2404, %v2666, -inf
    %v2683 = vrot.slane %v2682, 4
    %v2684 = vmax.f32 %v2682, %v2683
    %v2685 = vrot.slane %v2684, 2
    %v2686 = vmax.f32 %v2684, %v2685
    %v2687 = vrot.slane %v2686, 1
    %v2688 = vmax.f32 %v2686, %v2687
    %v2689 = vsel %vm2404, %v2670, -inf
    %v2690 = vrot.slane %v2689, 4
    %v2691 = vmax.f32 %v2689, %v2690
    %v2692 = vrot.slane %v2691, 2
    %v2693 = vmax.f32 %v2691, %v2692
    %v2694 = vrot.slane %v2693, 1
    %v2695 = vmax.f32 %v2693, %v2694
    %v2696 = vsel %vm2404, %v2671, -inf
    %v2697 = vrot.slane %v2696, 4
    %v2698 = vmax.f32 %v2696, %v2697
    %v2699 = vrot.slane %v2698, 2
    %v2700 = vmax.f32 %v2698, %v2699
    %v2701 = vrot.slane %v2700, 1
    %v2702 = vmax.f32 %v2700, %v2701
    %v2703 = vsel %vm2404, %v2672, -inf
    %v2704 = vrot.slane %v2703, 4
    %v2705 = vmax.f32 %v2703, %v2704
    %v2706 = vrot.slane %v2705, 2
    %v2707 = vmax.f32 %v2705, %v2706
    %v2708 = vrot.slane %v2707, 1
    %v2709 = vmax.f32 %v2707, %v2708
    %v2710 = vsel %vm2404, %v2667, -inf
    %v2711 = vrot.slane %v2710, 4
    %v2712 = vmax.f32 %v2710, %v2711
    %v2713 = vrot.slane %v2712, 2
    %v2714 = vmax.f32 %v2712, %v2713
    %v2715 = vrot.slane %v2714, 1
    %v2716 = vmax.f32 %v2714, %v2715
    %v2717 = vsel %vm2404, %v2673, -inf
    %v2718 = vrot.slane %v2717, 4
    %v2719 = vmax.f32 %v2717, %v2718
    %v2720 = vrot.slane %v2719, 2
    %v2721 = vmax.f32 %v2719, %v2720
    %v2722 = vrot.slane %v2721, 1
    %v2723 = vmax.f32 %v2721, %v2722
    %v2724 = vsel %vm2404, %v2674, -inf
    %v2725 = vrot.slane %v2724, 4
    %v2726 = vmax.f32 %v2724, %v2725
    %v2727 = vrot.slane %v2726, 2
    %v2728 = vmax.f32 %v2726, %v2727
    %v2729 = vrot.slane %v2728, 1
    %v2730 = vmax.f32 %v2728, %v2729
    %v2731 = vsel %vm2404, %v2675, -inf
    %v2732 = vrot.slane %v2731, 4
    %v2733 = vmax.f32 %v2731, %v2732
    %v2734 = vrot.slane %v2733, 2
    %v2735 = vmax.f32 %v2733, %v2734
    %v2736 = vrot.slane %v2735, 1
    %v2737 = vmax.f32 %v2735, %v2736
    %v2738 = vpack.c.bf16 %v2688, %v2688
    %v2739 = vpack.c.bf16 %v2695, %v2695
    %v2740 = vpack.c.bf16 %v2702, %v2702
    %v2741 = vpack.c.bf16 %v2709, %v2709
    %v2742 = vpack.c.bf16 %v2716, %v2716
    %v2743 = vpack.c.bf16 %v2723, %v2723
    %v2744 = vpack.c.bf16 %v2730, %v2730
    %v2745 = vpack.c.bf16 %v2737, %v2737
    %v2746 = vld [vmem:[#allocation23] sm:$0xff]
    %v2747 = vld [vmem:[#allocation23 + $0x8] sm:$0xff]
    %v2748 = vld [vmem:[#allocation23 + $0x10] sm:$0xff]
    %v2749 = vld [vmem:[#allocation23 + $0x18] sm:$0xff]
    %v2750 = vpack.c.bf16 %v2747, %v2746
    %v2751 = vpack.c.bf16 %v2749, %v2748
    %v2752 = vld [vmem:[%s31] sm:$0x1]
    %v2754 = vperm.slane %v2752, 0
    %v2764 = vunpack.c.l.b16 %v2738
    %v2765 = vunpack.c.l.b16 %v2739
    %v2766 = vunpack.c.l.b16 %v2740
    %v2767 = vunpack.c.l.b16 %v2741
    %v2768 = vunpack.c.l.b16 %v2742
    %v2769 = vunpack.c.l.b16 %v2743
    %v2770 = vunpack.c.l.b16 %v2744
    %v2771 = vunpack.c.l.b16 %v2745
    %v2772 = vsel %vm1524, %v2765, %v2764
    %v2773 = vsel %vm1526, %v2766, %v2772
    %v2774 = vsel %vm1528, %v2767, %v2773
    %v2775 = vsel %vm1530, %v2768, %v2774
    %v2776 = vsel %vm1532, %v2769, %v2775
    %v2777 = vsel %vm1534, %v2770, %v2776
    %v2778 = vsel %vm1536, %v2771, %v2777
    %v2779 = vpack.c.b16 %v2778, %v2778
    %v2781 = vsel %vm2517, %v2779, 0
    %2783 = vmatpush.bf16.msra.mxu0 0
    %2784 = vmatpush.bf16.msra.mxu0 0
    %2785 = vmatpush.bf16.msra.mxu0 0
    %2786 = vmatpush.bf16.msra.mxu0 0
    %2787 = vmatpush.bf16.msra.mxu0 0
    %2788 = vmatpush.bf16.msra.mxu0 0
    %2789 = vmatpush.bf16.msra.mxu0 %v2751
    %2790 = vmatpush.bf16.msra.mxu0 %v2750
    %2791 = vmatmul.bf16.gmra.mxu0 %v2781
    %v2792 = vpop.f32.mrf.mxu0
    %v2793 = vadd.f32 %v2754, %v2792
    %v2794 = vpop.f32.mrf.mxu0
    %2795 = vdwg.mxu0
    %v2796 = vld [vmem:[#allocation24] sm:$0xff]
    %v2797 = vld [vmem:[#allocation24 + $0x8] sm:$0xff]
    %v2798 = vld [vmem:[#allocation24 + $0x10] sm:$0xff]
    %v2799 = vld [vmem:[#allocation24 + $0x18] sm:$0xff]
    %v2801 = vrot.slane %v2793, 4
    %v2803 = vpack.c.bf16 %v2793, %v2793
    %v2804 = vpack.c.bf16 %v2801, %v2801
    %v2806 = vunpack.c.l.b16 %v2803
    %v2807 = vpack.c.b16 %v2806, %v2806
    %2808 = vrot.lane.b32.xlu0 %v2807, 96
    %v2809 = vpop.permute.xlu0 %2808
    %v2811 = vsel %vm1449, %v2803, 0
    %v2814 = vsel %vm1449, %v2809, 0
    %2816 = vmatpush.bf16.xpose.msra.mxu0 0
    %2817 = vmatpush.bf16.xpose.msra.mxu0 0
    %2818 = vmatpush.bf16.xpose.msra.mxu0 0
    %2819 = vmatpush.bf16.xpose.msra.mxu0 0
    %2820 = vmatpush.bf16.xpose.msra.mxu0 0
    %2821 = vmatpush.bf16.xpose.msra.mxu0 0
    %2822 = vmatpush.bf16.xpose.msra.mxu0 0
    %2823 = vmatpush.bf16.xpose.msra.mxu0 %v2814
    %2824 = vmatmul.bf16.gmra.mxu0 %v2811
    %v2825 = vpop.f32.mrf.mxu0
    %v2826 = vadd.f32 0.0, %v2825
    %v2827 = vpop.f32.mrf.mxu0
    %2828 = vdwg.mxu0
    %v2830 = vunpack.c.l.b16 %v2804
    %v2831 = vpack.c.b16 %v2830, %v2830
    %2832 = vrot.lane.b32.xlu0 %v2831, 96
    %v2833 = vpop.permute.xlu0 %2832
    %v2835 = vsel %vm1449, %v2804, 0
    %v2838 = vsel %vm1449, %v2833, 0
    %2840 = vmatpush.bf16.xpose.msra.mxu0 0
    %2841 = vmatpush.bf16.xpose.msra.mxu0 0
    %2842 = vmatpush.bf16.xpose.msra.mxu0 0
    %2843 = vmatpush.bf16.xpose.msra.mxu0 0
    %2844 = vmatpush.bf16.xpose.msra.mxu0 0
    %2845 = vmatpush.bf16.xpose.msra.mxu0 0
    %2846 = vmatpush.bf16.xpose.msra.mxu0 0
    %2847 = vmatpush.bf16.xpose.msra.mxu0 %v2838
    %2848 = vmatmul.bf16.gmra.mxu0 %v2835
    %v2849 = vpop.f32.mrf.mxu0
    %v2850 = vadd.f32 0.0, %v2849
    %v2851 = vpop.f32.mrf.mxu0
    %2852 = vdwg.mxu0
    %v2853 = vmul.f32 %v2826, 0.17677669
    %v2854 = vmul.f32 %v2850, 0.17677669
    %vm2855 = vcmask 27648
    %v2856 = vsel %vm2855, %v2853, -inf
    %2857 = vmax.xlane.f32.xlu0 %v2856
    %v2858 = vpop.xlane.xlu0 %2857
    %v2859 = vsel %vm2855, %v2854, -inf
    %2860 = vmax.xlane.f32.xlu0 %v2859
    %v2861 = vpop.xlane.xlu0 %2860
    %v2862 = vsub.f32 %v2853, %v2858
    %v2863 = vsub.f32 %v2854, %v2861
    %v2864 = vmul.f32 %v2862, 1.442695
    %v2865 = vpow.pop %v2864
    %v2866 = vmul.f32 %v2863, 1.442695
    %v2867 = vpow.pop %v2866
    %v2868 = vsel %vm2855, %v2865, 0.0
    %2869 = vadd.xlane.f32.xlu0 %v2868
    %v2870 = vpop.xlane.xlu0 %2869
    %v2871 = vsel %vm2855, %v2867, 0.0
    %2872 = vadd.xlane.f32.xlu0 %v2871
    %v2873 = vpop.xlane.xlu0 %2872
    %v2874 = vrcp.pop %v2870
    %v2875 = vrcp.pop %v2873
    %v2876 = vmul.f32 %v2865, %v2874
    %v2877 = vmul.f32 %v2867, %v2875
    %2878 = vst.msk [vmem:[#allocation35] sm:$0xf] %vm2855, %v2876
    %2879 = vst.msk [vmem:[#allocation35 + $0x10] sm:$0xf] %vm2855, %v2877
    %v2880 = vpack.c.bf16 %v2876, %v2876
    %v2881 = vpack.c.bf16 %v2877, %v2877
    %2882 = vrot.lane.b32.xlu0 %v2807, 64
    %v2883 = vpop.permute.xlu0 %2882
    %vm2884 = vcmask 31744
    %v2886 = vsel %vm2884, %v2880, 0
    %vm2888 = vcmask 1041408
    %v2890 = vsel %vm2888, %v2883, 0
    %2892 = vmatpush.bf16.msra.mxu0 0
    %2893 = vmatpush.bf16.msra.mxu0 0
    %2894 = vmatpush.bf16.msra.mxu0 0
    %2895 = vmatpush.bf16.msra.mxu0 0
    %2896 = vmatpush.bf16.msra.mxu0 0
    %2897 = vmatpush.bf16.msra.mxu0 0
    %2898 = vmatpush.bf16.msra.mxu0 0
    %2899 = vmatpush.bf16.msra.mxu0 %v2890
    %2900 = vmatmul.bf16.gmra.mxu0 %v2886
    %v2901 = vpop.f32.mrf.mxu0
    %v2902 = vadd.f32 0.0, %v2901
    %v2903 = vpop.f32.mrf.mxu0
    %2904 = vdwg.mxu0
    %2905 = vrot.lane.b32.xlu0 %v2831, 64
    %v2906 = vpop.permute.xlu0 %2905
    %v2908 = vsel %vm2884, %v2881, 0
    %v2911 = vsel %vm2888, %v2906, 0
    %2913 = vmatpush.bf16.msra.mxu0 0
    %2914 = vmatpush.bf16.msra.mxu0 0
    %2915 = vmatpush.bf16.msra.mxu0 0
    %2916 = vmatpush.bf16.msra.mxu0 0
    %2917 = vmatpush.bf16.msra.mxu0 0
    %2918 = vmatpush.bf16.msra.mxu0 0
    %2919 = vmatpush.bf16.msra.mxu0 0
    %2920 = vmatpush.bf16.msra.mxu0 %v2911
    %2921 = vmatmul.bf16.gmra.mxu0 %v2908
    %v2922 = vpop.f32.mrf.mxu0
    %v2923 = vadd.f32 0.0, %v2922
    %v2924 = vpop.f32.mrf.mxu0
    %2925 = vdwg.mxu0
    %2928 = vst [vmem:[#allocation1] ss:$2 sm:$0xff] %v2902
    %s2929 = scalar_lea.vmem [#allocation1], 1
    %2930 = vst [vmem:[%s2929] ss:$2 sm:$0xff] %v2923
    %v2931 = vld.sshfl [vmem:[#allocation1] sm:$0xff pattern:$0x75316420]
    %v2933 = vpack.c.bf16 %v2931, %v2931
    %v2934 = vpack.c.bf16 %v2796, %v2796
    %2935 = vrot.lane.b32.xlu0 %v2807, 120
    %v2936 = vpop.permute.xlu0 %2935
    %2937 = vrot.lane.b32.xlu0 %v2807, 88
    %v2938 = vpop.permute.xlu0 %2937
    %v2940 = vsel %vm1449, %v2936, 0
    %v2943 = vsel %vm1449, %v2938, 0
    %2945 = vmatpush.bf16.xpose.msra.mxu0 0
    %2946 = vmatpush.bf16.xpose.msra.mxu0 0
    %2947 = vmatpush.bf16.xpose.msra.mxu0 0
    %2948 = vmatpush.bf16.xpose.msra.mxu0 0
    %2949 = vmatpush.bf16.xpose.msra.mxu0 0
    %2950 = vmatpush.bf16.xpose.msra.mxu0 0
    %2951 = vmatpush.bf16.xpose.msra.mxu0 0
    %2952 = vmatpush.bf16.xpose.msra.mxu0 %v2943
    %2953 = vmatmul.bf16.gmra.mxu0 %v2940
    %v2954 = vpop.f32.mrf.mxu0
    %v2955 = vadd.f32 0.0, %v2954
    %v2956 = vpop.f32.mrf.mxu0
    %2957 = vdwg.mxu0
    %2958 = vrot.lane.b32.xlu0 %v2831, 120
    %v2959 = vpop.permute.xlu0 %2958
    %2960 = vrot.lane.b32.xlu0 %v2831, 88
    %v2961 = vpop.permute.xlu0 %2960
    %v2963 = vsel %vm1449, %v2959, 0
    %v2966 = vsel %vm1449, %v2961, 0
    %2968 = vmatpush.bf16.xpose.msra.mxu0 0
    %2969 = vmatpush.bf16.xpose.msra.mxu0 0
    %2970 = vmatpush.bf16.xpose.msra.mxu0 0
    %2971 = vmatpush.bf16.xpose.msra.mxu0 0
    %2972 = vmatpush.bf16.xpose.msra.mxu0 0
    %2973 = vmatpush.bf16.xpose.msra.mxu0 0
    %2974 = vmatpush.bf16.xpose.msra.mxu0 0
    %2975 = vmatpush.bf16.xpose.msra.mxu0 %v2966
    %2976 = vmatmul.bf16.gmra.mxu0 %v2963
    %v2977 = vpop.f32.mrf.mxu0
    %v2978 = vadd.f32 0.0, %v2977
    %v2979 = vpop.f32.mrf.mxu0
    %2980 = vdwg.mxu0
    %v2981 = vmul.f32 %v2955, 0.17677669
    %v2982 = vmul.f32 %v2978, 0.17677669
    %v2983 = vsel %vm2855, %v2981, -inf
    %2984 = vmax.xlane.f32.xlu0 %v2983
    %v2985 = vpop.xlane.xlu0 %2984
    %v2986 = vsel %vm2855, %v2982, -inf
    %2987 = vmax.xlane.f32.xlu0 %v2986
    %v2988 = vpop.xlane.xlu0 %2987
    %v2989 = vsub.f32 %v2981, %v2985
    %v2990 = vsub.f32 %v2982, %v2988
    %v2991 = vmul.f32 %v2989, 1.442695
    %v2992 = vpow.pop %v2991
    %v2993 = vmul.f32 %v2990, 1.442695
    %v2994 = vpow.pop %v2993
    %v2995 = vsel %vm2855, %v2992, 0.0
    %2996 = vadd.xlane.f32.xlu0 %v2995
    %v2997 = vpop.xlane.xlu0 %2996
    %v2998 = vsel %vm2855, %v2994, 0.0
    %2999 = vadd.xlane.f32.xlu0 %v2998
    %v3000 = vpop.xlane.xlu0 %2999
    %v3001 = vrcp.pop %v2997
    %v3002 = vrcp.pop %v3000
    %v3003 = vmul.f32 %v2992, %v3001
    %v3004 = vmul.f32 %v2994, %v3002
    %s3005 = scalar_lea.vmem [#allocation35], 4
    %3006 = vst.msk [vmem:[%s3005] sm:$0xf] %vm2855, %v3003
    %3007 = vst.msk [vmem:[%s3005 + $0x10] sm:$0xf] %vm2855, %v3004
    %v3008 = vpack.c.bf16 %v3003, %v3003
    %v3009 = vpack.c.bf16 %v3004, %v3004
    %3010 = vrot.lane.b32.xlu0 %v2807, 56
    %v3011 = vpop.permute.xlu0 %3010
    %v3013 = vsel %vm2884, %v3008, 0
    %v3016 = vsel %vm2888, %v3011, 0
    %3018 = vmatpush.bf16.msra.mxu0 0
    %3019 = vmatpush.bf16.msra.mxu0 0
    %3020 = vmatpush.bf16.msra.mxu0 0
    %3021 = vmatpush.bf16.msra.mxu0 0
    %3022 = vmatpush.bf16.msra.mxu0 0
    %3023 = vmatpush.bf16.msra.mxu0 0
    %3024 = vmatpush.bf16.msra.mxu0 0
    %3025 = vmatpush.bf16.msra.mxu0 %v3016
    %3026 = vmatmul.bf16.gmra.mxu0 %v3013
    %v3027 = vpop.f32.mrf.mxu0
    %v3028 = vadd.f32 0.0, %v3027
    %v3029 = vpop.f32.mrf.mxu0
    %3030 = vdwg.mxu0
    %3031 = vrot.lane.b32.xlu0 %v2831, 56
    %v3032 = vpop.permute.xlu0 %3031
    %v3034 = vsel %vm2884, %v3009, 0
    %v3037 = vsel %vm2888, %v3032, 0
    %3039 = vmatpush.bf16.msra.mxu0 0
    %3040 = vmatpush.bf16.msra.mxu0 0
    %3041 = vmatpush.bf16.msra.mxu0 0
    %3042 = vmatpush.bf16.msra.mxu0 0
    %3043 = vmatpush.bf16.msra.mxu0 0
    %3044 = vmatpush.bf16.msra.mxu0 0
    %3045 = vmatpush.bf16.msra.mxu0 0
    %3046 = vmatpush.bf16.msra.mxu0 %v3037
    %3047 = vmatmul.bf16.gmra.mxu0 %v3034
    %v3048 = vpop.f32.mrf.mxu0
    %v3049 = vadd.f32 0.0, %v3048
    %v3050 = vpop.f32.mrf.mxu0
    %3051 = vdwg.mxu0
    %3054 = vst [vmem:[#allocation1] ss:$2 sm:$0xff] %v3028
    %s3055 = scalar_lea.vmem [#allocation1], 1
    %3056 = vst [vmem:[%s3055] ss:$2 sm:$0xff] %v3049
    %v3057 = vld.sshfl [vmem:[#allocation1] sm:$0xff pattern:$0x75316420]
    %v3059 = vpack.c.bf16 %v3057, %v3057
    %v3060 = vpack.c.bf16 %v2797, %v2797
    %v3062 = vsel %vm1449, %v3059, 0
    %v3065 = vsel %vm1674, %v3060, 0
    %3067 = vmatpush.bf16.msra.mxu0 0
    %3068 = vmatpush.bf16.msra.mxu0 0
    %3069 = vmatpush.bf16.msra.mxu0 0
    %3070 = vmatpush.bf16.msra.mxu0 0
    %3071 = vmatpush.bf16.msra.mxu0 0
    %3072 = vmatpush.bf16.msra.mxu0 0
    %3073 = vmatpush.bf16.msra.mxu0 0
    %3074 = vmatpush.bf16.msra.mxu0 %v3065
    %3075 = vmatmul.bf16.gmra.mxu0 %v3062
    %v3076 = vpop.f32.mrf.mxu0
    %v3077 = vadd.f32 0.0, %v3076
    %v3078 = vpop.f32.mrf.mxu0
    %3079 = vdwg.mxu0
    %v3081 = vsel %vm1449, %v2933, 0
    %v3084 = vsel %vm1674, %v2934, 0
    %3086 = vmatpush.bf16.msra.mxu0 0
    %3087 = vmatpush.bf16.msra.mxu0 0
    %3088 = vmatpush.bf16.msra.mxu0 0
    %3089 = vmatpush.bf16.msra.mxu0 0
    %3090 = vmatpush.bf16.msra.mxu0 0
    %3091 = vmatpush.bf16.msra.mxu0 0
    %3092 = vmatpush.bf16.msra.mxu0 0
    %3093 = vmatpush.bf16.msra.mxu0 %v3084
    %3094 = vmatmul.bf16.gmra.mxu0 %v3081
    %v3095 = vpop.f32.mrf.mxu0
    %v3096 = vadd.f32 %v3077, %v3095
    %v3097 = vpop.f32.mrf.mxu0
    %3098 = vdwg.mxu0
    %3099 = vrot.lane.b32.xlu0 %v2807, 112
    %v3100 = vpop.permute.xlu0 %3099
    %3101 = vrot.lane.b32.xlu0 %v2807, 80
    %v3102 = vpop.permute.xlu0 %3101
    %v3104 = vsel %vm1449, %v3100, 0
    %v3107 = vsel %vm1449, %v3102, 0
    %3109 = vmatpush.bf16.xpose.msra.mxu0 0
    %3110 = vmatpush.bf16.xpose.msra.mxu0 0
    %3111 = vmatpush.bf16.xpose.msra.mxu0 0
    %3112 = vmatpush.bf16.xpose.msra.mxu0 0
    %3113 = vmatpush.bf16.xpose.msra.mxu0 0
    %3114 = vmatpush.bf16.xpose.msra.mxu0 0
    %3115 = vmatpush.bf16.xpose.msra.mxu0 0
    %3116 = vmatpush.bf16.xpose.msra.mxu0 %v3107
    %3117 = vmatmul.bf16.gmra.mxu0 %v3104
    %v3118 = vpop.f32.mrf.mxu0
    %v3119 = vadd.f32 0.0, %v3118
    %v3120 = vpop.f32.mrf.mxu0
    %3121 = vdwg.mxu0
    %3122 = vrot.lane.b32.xlu0 %v2831, 112
    %v3123 = vpop.permute.xlu0 %3122
    %3124 = vrot.lane.b32.xlu0 %v2831, 80
    %v3125 = vpop.permute.xlu0 %3124
    %v3127 = vsel %vm1449, %v3123, 0
    %v3130 = vsel %vm1449, %v3125, 0
    %3132 = vmatpush.bf16.xpose.msra.mxu0 0
    %3133 = vmatpush.bf16.xpose.msra.mxu0 0
    %3134 = vmatpush.bf16.xpose.msra.mxu0 0
    %3135 = vmatpush.bf16.xpose.msra.mxu0 0
    %3136 = vmatpush.bf16.xpose.msra.mxu0 0
    %3137 = vmatpush.bf16.xpose.msra.mxu0 0
    %3138 = vmatpush.bf16.xpose.msra.mxu0 0
    %3139 = vmatpush.bf16.xpose.msra.mxu0 %v3130
    %3140 = vmatmul.bf16.gmra.mxu0 %v3127
    %v3141 = vpop.f32.mrf.mxu0
    %v3142 = vadd.f32 0.0, %v3141
    %v3143 = vpop.f32.mrf.mxu0
    %3144 = vdwg.mxu0
    %v3145 = vmul.f32 %v3119, 0.17677669
    %v3146 = vmul.f32 %v3142, 0.17677669
    %v3147 = vsel %vm2855, %v3145, -inf
    %3148 = vmax.xlane.f32.xlu0 %v3147
    %v3149 = vpop.xlane.xlu0 %3148
    %v3150 = vsel %vm2855, %v3146, -inf
    %3151 = vmax.xlane.f32.xlu0 %v3150
    %v3152 = vpop.xlane.xlu0 %3151
    %v3153 = vsub.f32 %v3145, %v3149
    %v3154 = vsub.f32 %v3146, %v3152
    %v3155 = vmul.f32 %v3153, 1.442695
    %v3156 = vpow.pop %v3155
    %v3157 = vmul.f32 %v3154, 1.442695
    %v3158 = vpow.pop %v3157
    %v3159 = vsel %vm2855, %v3156, 0.0
    %3160 = vadd.xlane.f32.xlu0 %v3159
    %v3161 = vpop.xlane.xlu0 %3160
    %v3162 = vsel %vm2855, %v3158, 0.0
    %3163 = vadd.xlane.f32.xlu0 %v3162
    %v3164 = vpop.xlane.xlu0 %3163
    %v3165 = vrcp.pop %v3161
    %v3166 = vrcp.pop %v3164
    %v3167 = vmul.f32 %v3156, %v3165
    %v3168 = vmul.f32 %v3158, %v3166
    %s3169 = scalar_lea.vmem [#allocation35], 8
    %3170 = vst.msk [vmem:[%s3169] sm:$0xf] %vm2855, %v3167
    %3171 = vst.msk [vmem:[%s3169 + $0x10] sm:$0xf] %vm2855, %v3168
    %v3172 = vpack.c.bf16 %v3167, %v3167
    %v3173 = vpack.c.bf16 %v3168, %v3168
    %3174 = vrot.lane.b32.xlu0 %v2807, 48
    %v3175 = vpop.permute.xlu0 %3174
    %v3177 = vsel %vm2884, %v3172, 0
    %v3180 = vsel %vm2888, %v3175, 0
    %3182 = vmatpush.bf16.msra.mxu0 0
    %3183 = vmatpush.bf16.msra.mxu0 0
    %3184 = vmatpush.bf16.msra.mxu0 0
    %3185 = vmatpush.bf16.msra.mxu0 0
    %3186 = vmatpush.bf16.msra.mxu0 0
    %3187 = vmatpush.bf16.msra.mxu0 0
    %3188 = vmatpush.bf16.msra.mxu0 0
    %3189 = vmatpush.bf16.msra.mxu0 %v3180
    %3190 = vmatmul.bf16.gmra.mxu0 %v3177
    %v3191 = vpop.f32.mrf.mxu0
    %v3192 = vadd.f32 0.0, %v3191
    %v3193 = vpop.f32.mrf.mxu0
    %3194 = vdwg.mxu0
    %3195 = vrot.lane.b32.xlu0 %v2831, 48
    %v3196 = vpop.permute.xlu0 %3195
    %v3198 = vsel %vm2884, %v3173, 0
    %v3201 = vsel %vm2888, %v3196, 0
    %3203 = vmatpush.bf16.msra.mxu0 0
    %3204 = vmatpush.bf16.msra.mxu0 0
    %3205 = vmatpush.bf16.msra.mxu0 0
    %3206 = vmatpush.bf16.msra.mxu0 0
    %3207 = vmatpush.bf16.msra.mxu0 0
    %3208 = vmatpush.bf16.msra.mxu0 0
    %3209 = vmatpush.bf16.msra.mxu0 0
    %3210 = vmatpush.bf16.msra.mxu0 %v3201
    %3211 = vmatmul.bf16.gmra.mxu0 %v3198
    %v3212 = vpop.f32.mrf.mxu0
    %v3213 = vadd.f32 0.0, %v3212
    %v3214 = vpop.f32.mrf.mxu0
    %3215 = vdwg.mxu0
    %3218 = vst [vmem:[#allocation1] ss:$2 sm:$0xff] %v3192
    %s3219 = scalar_lea.vmem [#allocation1], 1
    %3220 = vst [vmem:[%s3219] ss:$2 sm:$0xff] %v3213
    %v3221 = vld.sshfl [vmem:[#allocation1] sm:$0xff pattern:$0x75316420]
    %v3223 = vpack.c.bf16 %v3221, %v3221
    %v3224 = vpack.c.bf16 %v2798, %v2798
    %v3226 = vsel %vm1449, %v3223, 0
    %v3229 = vsel %vm1674, %v3224, 0
    %3231 = vmatpush.bf16.msra.mxu0 0
    %3232 = vmatpush.bf16.msra.mxu0 0
    %3233 = vmatpush.bf16.msra.mxu0 0
    %3234 = vmatpush.bf16.msra.mxu0 0
    %3235 = vmatpush.bf16.msra.mxu0 0
    %3236 = vmatpush.bf16.msra.mxu0 0
    %3237 = vmatpush.bf16.msra.mxu0 0
    %3238 = vmatpush.bf16.msra.mxu0 %v3229
    %3239 = vmatmul.bf16.gmra.mxu0 %v3226
    %v3240 = vpop.f32.mrf.mxu0
    %v3241 = vadd.f32 0.0, %v3240
    %v3242 = vpop.f32.mrf.mxu0
    %3243 = vdwg.mxu0
    %v3244 = vadd.f32 %v3096, %v3241
    %3245 = vrot.lane.b32.xlu0 %v2807, 104
    %v3246 = vpop.permute.xlu0 %3245
    %3247 = vrot.lane.b32.xlu0 %v2807, 72
    %v3248 = vpop.permute.xlu0 %3247
    %v3250 = vsel %vm1449, %v3246, 0
    %v3253 = vsel %vm1449, %v3248, 0
    %3255 = vmatpush.bf16.xpose.msra.mxu0 0
    %3256 = vmatpush.bf16.xpose.msra.mxu0 0
    %3257 = vmatpush.bf16.xpose.msra.mxu0 0
    %3258 = vmatpush.bf16.xpose.msra.mxu0 0
    %3259 = vmatpush.bf16.xpose.msra.mxu0 0
    %3260 = vmatpush.bf16.xpose.msra.mxu0 0
    %3261 = vmatpush.bf16.xpose.msra.mxu0 0
    %3262 = vmatpush.bf16.xpose.msra.mxu0 %v3253
    %3263 = vmatmul.bf16.gmra.mxu0 %v3250
    %v3264 = vpop.f32.mrf.mxu0
    %v3265 = vadd.f32 0.0, %v3264
    %v3266 = vpop.f32.mrf.mxu0
    %3267 = vdwg.mxu0
    %3268 = vrot.lane.b32.xlu0 %v2831, 104
    %v3269 = vpop.permute.xlu0 %3268
    %3270 = vrot.lane.b32.xlu0 %v2831, 72
    %v3271 = vpop.permute.xlu0 %3270
    %v3273 = vsel %vm1449, %v3269, 0
    %v3276 = vsel %vm1449, %v3271, 0
    %3278 = vmatpush.bf16.xpose.msra.mxu0 0
    %3279 = vmatpush.bf16.xpose.msra.mxu0 0
    %3280 = vmatpush.bf16.xpose.msra.mxu0 0
    %3281 = vmatpush.bf16.xpose.msra.mxu0 0
    %3282 = vmatpush.bf16.xpose.msra.mxu0 0
    %3283 = vmatpush.bf16.xpose.msra.mxu0 0
    %3284 = vmatpush.bf16.xpose.msra.mxu0 0
    %3285 = vmatpush.bf16.xpose.msra.mxu0 %v3276
    %3286 = vmatmul.bf16.gmra.mxu0 %v3273
    %v3287 = vpop.f32.mrf.mxu0
    %v3288 = vadd.f32 0.0, %v3287
    %v3289 = vpop.f32.mrf.mxu0
    %3290 = vdwg.mxu0
    %v3291 = vmul.f32 %v3265, 0.17677669
    %v3292 = vmul.f32 %v3288, 0.17677669
    %v3293 = vsel %vm2855, %v3291, -inf
    %3294 = vmax.xlane.f32.xlu0 %v3293
    %v3295 = vpop.xlane.xlu0 %3294
    %v3296 = vsel %vm2855, %v3292, -inf
    %3297 = vmax.xlane.f32.xlu0 %v3296
    %v3298 = vpop.xlane.xlu0 %3297
    %v3299 = vsub.f32 %v3291, %v3295
    %v3300 = vsub.f32 %v3292, %v3298
    %v3301 = vmul.f32 %v3299, 1.442695
    %v3302 = vpow.pop %v3301
    %v3303 = vmul.f32 %v3300, 1.442695
    %v3304 = vpow.pop %v3303
    %v3305 = vsel %vm2855, %v3302, 0.0
    %3306 = vadd.xlane.f32.xlu0 %v3305
    %v3307 = vpop.xlane.xlu0 %3306
    %v3308 = vsel %vm2855, %v3304, 0.0
    %3309 = vadd.xlane.f32.xlu0 %v3308
    %v3310 = vpop.xlane.xlu0 %3309
    %v3311 = vrcp.pop %v3307
    %v3312 = vrcp.pop %v3310
    %v3313 = vmul.f32 %v3302, %v3311
    %v3314 = vmul.f32 %v3304, %v3312
    %s3315 = scalar_lea.vmem [#allocation35], 12
    %3316 = vst.msk [vmem:[%s3315] sm:$0xf] %vm2855, %v3313
    %3317 = vst.msk [vmem:[%s3315 + $0x10] sm:$0xf] %vm2855, %v3314
    %v3318 = vpack.c.bf16 %v3313, %v3313
    %v3319 = vpack.c.bf16 %v3314, %v3314
    %3320 = vrot.lane.b32.xlu0 %v2807, 40
    %v3321 = vpop.permute.xlu0 %3320
    %v3323 = vsel %vm2884, %v3318, 0
    %v3326 = vsel %vm2888, %v3321, 0
    %3328 = vmatpush.bf16.msra.mxu0 0
    %3329 = vmatpush.bf16.msra.mxu0 0
    %3330 = vmatpush.bf16.msra.mxu0 0
    %3331 = vmatpush.bf16.msra.mxu0 0
    %3332 = vmatpush.bf16.msra.mxu0 0
    %3333 = vmatpush.bf16.msra.mxu0 0
    %3334 = vmatpush.bf16.msra.mxu0 0
    %3335 = vmatpush.bf16.msra.mxu0 %v3326
    %3336 = vmatmul.bf16.gmra.mxu0 %v3323
    %v3337 = vpop.f32.mrf.mxu0
    %v3338 = vadd.f32 0.0, %v3337
    %v3339 = vpop.f32.mrf.mxu0
    %3340 = vdwg.mxu0
    %3341 = vrot.lane.b32.xlu0 %v2831, 40
    %v3342 = vpop.permute.xlu0 %3341
    %v3344 = vsel %vm2884, %v3319, 0
    %v3347 = vsel %vm2888, %v3342, 0
    %3349 = vmatpush.bf16.msra.mxu0 0
    %3350 = vmatpush.bf16.msra.mxu0 0
    %3351 = vmatpush.bf16.msra.mxu0 0
    %3352 = vmatpush.bf16.msra.mxu0 0
    %3353 = vmatpush.bf16.msra.mxu0 0
    %3354 = vmatpush.bf16.msra.mxu0 0
    %3355 = vmatpush.bf16.msra.mxu0 0
    %3356 = vmatpush.bf16.msra.mxu0 %v3347
    %3357 = vmatmul.bf16.gmra.mxu0 %v3344
    %v3358 = vpop.f32.mrf.mxu0
    %v3359 = vadd.f32 0.0, %v3358
    %v3360 = vpop.f32.mrf.mxu0
    %3361 = vdwg.mxu0
    %3364 = vst [vmem:[#allocation1] ss:$2 sm:$0xff] %v3338
    %s3365 = scalar_lea.vmem [#allocation1], 1
    %3366 = vst [vmem:[%s3365] ss:$2 sm:$0xff] %v3359
    %v3367 = vld.sshfl [vmem:[#allocation1] sm:$0xff pattern:$0x75316420]
    %v3369 = vpack.c.bf16 %v3367, %v3367
    %v3370 = vpack.c.bf16 %v2799, %v2799
    %v3372 = vsel %vm1449, %v3369, 0
    %v3375 = vsel %vm1674, %v3370, 0
    %3377 = vmatpush.bf16.msra.mxu0 0
    %3378 = vmatpush.bf16.msra.mxu0 0
    %3379 = vmatpush.bf16.msra.mxu0 0
    %3380 = vmatpush.bf16.msra.mxu0 0
    %3381 = vmatpush.bf16.msra.mxu0 0
    %3382 = vmatpush.bf16.msra.mxu0 0
    %3383 = vmatpush.bf16.msra.mxu0 0
    %3384 = vmatpush.bf16.msra.mxu0 %v3375
    %3385 = vmatmul.bf16.gmra.mxu0 %v3372
    %v3386 = vpop.f32.mrf.mxu0
    %v3387 = vadd.f32 0.0, %v3386
    %v3388 = vpop.f32.mrf.mxu0
    %3389 = vdwg.mxu0
    %v3390 = vadd.f32 %v3244, %v3387
    %v3391 = vld [vmem:[%s35] sm:$0x1]
    %v3393 = vperm.slane %v3391, 0
    %v3395 = vadd.f32 %v3390, %v3393
    %v3397 = vrot.slane %v3395, 4
    %vm3399 = vcmask 257024
    %v3400 = vsel %vm3399, %v3395, 0.0
    %v3401 = vrot.slane %v3400, 4
    %v3402 = vadd.f32 %v3400, %v3401
    %v3403 = vrot.slane %v3402, 2
    %v3404 = vadd.f32 %v3402, %v3403
    %v3405 = vrot.slane %v3404, 1
    %v3406 = vadd.f32 %v3404, %v3405
    %v3407 = vsel %vm3399, %v3397, 0.0
    %v3408 = vrot.slane %v3407, 4
    %v3409 = vadd.f32 %v3407, %v3408
    %v3410 = vrot.slane %v3409, 2
    %v3411 = vadd.f32 %v3409, %v3410
    %v3412 = vrot.slane %v3411, 1
    %v3413 = vadd.f32 %v3411, %v3412
    %v3414 = vrcp.pop 4.0
    %v3415 = vmul.f32 4.0, %v3414
    %v3416 = vsub.f32 1.0, %v3415
    %v3417 = vmul.f32 %v3414, %v3416
    %v3418 = vadd.f32 %v3414, %v3417
    %vm3419 = vweird.f32 %v3414
    %v3420 = vsel %vm3419, %v3414, %v3418
    %v3421 = vmul.f32 %v3406, %v3420
    %v3422 = vmul.f32 %v3413, %v3420
    %v3423 = vld [vmem:[%s3] sm:$0x3]
    %v3424 = vld [vmem:[%s37] sm:$0x7f]
    %v3425 = vld [vmem:[%s39] sm:$0x1]
    %v3427 = vperm.slane %v3425, 0
    %vm3429 = vcmask 56320
    %v3431 = vsel %vm3429, %v3423, 0
    %v3434 = vsel %vm467, %v3424, 0
    %3436 = vmatpush.msra.mxu0 0.0
    %3437 = vmatpush.msra.mxu0 0.0
    %3438 = vmatpush.msra.mxu0 0.0
    %3439 = vmatpush.msra.mxu0 0.0
    %3440 = vmatpush.msra.mxu0 0.0
    %3441 = vmatpush.msra.mxu0 0.0
    %3442 = vmatpush.msra.mxu0 0.0
    %3443 = vmatpush.msra.mxu0 0.0
    %3444 = vmatpush.msra.mxu0 0.0
    %3445 = vmatpush.msra.mxu0 0.0
    %3446 = vmatpush.msra.mxu0 0.0
    %3447 = vmatpush.msra.mxu0 0.0
    %3448 = vmatpush.msra.mxu0 0.0
    %3449 = vmatpush.msra.mxu0 0.0
    %3450 = vmatpush.msra.mxu0 0.0
    %v3451 = vand.u32 %v3434, 4294901760
    %3452 = vmatpush.msra.mxu0 %v3451
    %v3453 = vand.u32 %v3431, 4294901760
    %v3454 = vsub.f32 %v3431, %v3453
    %v3455 = vand.u32 %v3454, 4294901760
    %v3456 = vsub.f32 %v3454, %v3455
    %v3457 = vand.u32 %v3456, 4294901760
    %3458 = vmatmul.f32.gmra.mxu0 %v3457
    %v3459 = vpop.f32.mrf.mxu0
    %v3460 = vadd.f32 %v3427, %v3459
    %3461 = vdwg.mxu0
    %3462 = vmatpush.msra.mxu0 0.0
    %3463 = vmatpush.msra.mxu0 0.0
    %3464 = vmatpush.msra.mxu0 0.0
    %3465 = vmatpush.msra.mxu0 0.0
    %3466 = vmatpush.msra.mxu0 0.0
    %3467 = vmatpush.msra.mxu0 0.0
    %3468 = vmatpush.msra.mxu0 0.0
    %3469 = vmatpush.msra.mxu0 0.0
    %3470 = vmatpush.msra.mxu0 0.0
    %3471 = vmatpush.msra.mxu0 0.0
    %3472 = vmatpush.msra.mxu0 0.0
    %3473 = vmatpush.msra.mxu0 0.0
    %3474 = vmatpush.msra.mxu0 0.0
    %3475 = vmatpush.msra.mxu0 0.0
    %3476 = vmatpush.msra.mxu0 0.0
    %v3477 = vand.u32 %v3434, 4294901760
    %v3478 = vsub.f32 %v3434, %v3477
    %v3479 = vand.u32 %v3478, 4294901760
    %v3480 = vsub.f32 %v3478, %v3479
    %v3481 = vand.u32 %v3480, 4294901760
    %3482 = vmatpush.msra.mxu0 %v3481
    %v3483 = vand.u32 %v3431, 4294901760
    %3484 = vmatmul.f32.gmra.mxu0 %v3483
    %v3485 = vpop.f32.mrf.mxu0
    %v3486 = vadd.f32 %v3460, %v3485
    %3487 = vdwg.mxu0
    %3488 = vmatpush.msra.mxu0 0.0
    %3489 = vmatpush.msra.mxu0 0.0
    %3490 = vmatpush.msra.mxu0 0.0
    %3491 = vmatpush.msra.mxu0 0.0
    %3492 = vmatpush.msra.mxu0 0.0
    %3493 = vmatpush.msra.mxu0 0.0
    %3494 = vmatpush.msra.mxu0 0.0
    %3495 = vmatpush.msra.mxu0 0.0
    %3496 = vmatpush.msra.mxu0 0.0
    %3497 = vmatpush.msra.mxu0 0.0
    %3498 = vmatpush.msra.mxu0 0.0
    %3499 = vmatpush.msra.mxu0 0.0
    %3500 = vmatpush.msra.mxu0 0.0
    %3501 = vmatpush.msra.mxu0 0.0
    %3502 = vmatpush.msra.mxu0 0.0
    %v3503 = vand.u32 %v3434, 4294901760
    %v3504 = vsub.f32 %v3434, %v3503
    %3505 = vmatpush.msra.mxu0 %v3504
    %v3506 = vand.u32 %v3431, 4294901760
    %v3507 = vsub.f32 %v3431, %v3506
    %3508 = vmatmul.f32.gmra.mxu0 %v3507
    %v3509 = vpop.f32.mrf.mxu0
    %v3510 = vadd.f32 %v3486, %v3509
    %3511 = vdwg.mxu0
    %3512 = vmatpush.msra.mxu0 0.0
    %3513 = vmatpush.msra.mxu0 0.0
    %3514 = vmatpush.msra.mxu0 0.0
    %3515 = vmatpush.msra.mxu0 0.0
    %3516 = vmatpush.msra.mxu0 0.0
    %3517 = vmatpush.msra.mxu0 0.0
    %3518 = vmatpush.msra.mxu0 0.0
    %3519 = vmatpush.msra.mxu0 0.0
    %3520 = vmatpush.msra.mxu0 0.0
    %3521 = vmatpush.msra.mxu0 0.0
    %3522 = vmatpush.msra.mxu0 0.0
    %3523 = vmatpush.msra.mxu0 0.0
    %3524 = vmatpush.msra.mxu0 0.0
    %3525 = vmatpush.msra.mxu0 0.0
    %3526 = vmatpush.msra.mxu0 0.0
    %v3527 = vand.u32 %v3434, 4294901760
    %3528 = vmatpush.msra.mxu0 %v3527
    %v3529 = vand.u32 %v3431, 4294901760
    %v3530 = vsub.f32 %v3431, %v3529
    %v3531 = vand.u32 %v3530, 4294901760
    %3532 = vmatmul.f32.gmra.mxu0 %v3531
    %v3533 = vpop.f32.mrf.mxu0
    %v3534 = vadd.f32 %v3510, %v3533
    %3535 = vdwg.mxu0
    %3536 = vmatpush.msra.mxu0 0.0
    %3537 = vmatpush.msra.mxu0 0.0
    %3538 = vmatpush.msra.mxu0 0.0
    %3539 = vmatpush.msra.mxu0 0.0
    %3540 = vmatpush.msra.mxu0 0.0
    %3541 = vmatpush.msra.mxu0 0.0
    %3542 = vmatpush.msra.mxu0 0.0
    %3543 = vmatpush.msra.mxu0 0.0
    %3544 = vmatpush.msra.mxu0 0.0
    %3545 = vmatpush.msra.mxu0 0.0
    %3546 = vmatpush.msra.mxu0 0.0
    %3547 = vmatpush.msra.mxu0 0.0
    %3548 = vmatpush.msra.mxu0 0.0
    %3549 = vmatpush.msra.mxu0 0.0
    %3550 = vmatpush.msra.mxu0 0.0
    %v3551 = vand.u32 %v3434, 4294901760
    %v3552 = vsub.f32 %v3434, %v3551
    %v3553 = vand.u32 %v3552, 4294901760
    %3554 = vmatpush.msra.mxu0 %v3553
    %v3555 = vand.u32 %v3431, 4294901760
    %3556 = vmatmul.f32.gmra.mxu0 %v3555
    %v3557 = vpop.f32.mrf.mxu0
    %v3558 = vadd.f32 %v3534, %v3557
    %3559 = vdwg.mxu0
    %3560 = vmatpush.msra.mxu0 0.0
    %3561 = vmatpush.msra.mxu0 0.0
    %3562 = vmatpush.msra.mxu0 0.0
    %3563 = vmatpush.msra.mxu0 0.0
    %3564 = vmatpush.msra.mxu0 0.0
    %3565 = vmatpush.msra.mxu0 0.0
    %3566 = vmatpush.msra.mxu0 0.0
    %3567 = vmatpush.msra.mxu0 0.0
    %3568 = vmatpush.msra.mxu0 0.0
    %3569 = vmatpush.msra.mxu0 0.0
    %3570 = vmatpush.msra.mxu0 0.0
    %3571 = vmatpush.msra.mxu0 0.0
    %3572 = vmatpush.msra.mxu0 0.0
    %3573 = vmatpush.msra.mxu0 0.0
    %3574 = vmatpush.msra.mxu0 0.0
    %v3575 = vand.u32 %v3434, 4294901760
    %3576 = vmatpush.msra.mxu0 %v3575
    %v3577 = vand.u32 %v3431, 4294901760
    %3578 = vmatmul.f32.gmra.mxu0 %v3577
    %v3579 = vpop.f32.mrf.mxu0
    %v3580 = vadd.f32 %v3558, %v3579
    %3581 = vdwg.mxu0
    %v3582 = vmax.f32 %v3580, 0.0
    %v3583 = vld [vmem:[#allocation26] sm:$0xff]
    %v3584 = vld [vmem:[#allocation26 + $0x8] sm:$0xff]
    %v3585 = vld [vmem:[#allocation26 + $0x10] sm:$0xff]
    %v3586 = vld [vmem:[#allocation26 + $0x18] sm:$0xff]
    %v3587 = vld [vmem:[#allocation27] sm:$0xff]
    %v3588 = vld [vmem:[#allocation27 + $0x8] sm:$0xff]
    %v3589 = vld [vmem:[#allocation27 + $0x10] sm:$0xff]
    %v3590 = vld [vmem:[#allocation27 + $0x18] sm:$0xff]
    %v3591 = vld [vmem:[#allocation27 + $0x20] sm:$0xff]
    %v3592 = vld [vmem:[#allocation27 + $0x28] sm:$0xff]
    %v3593 = vld [vmem:[#allocation27 + $0x30] sm:$0xff]
    %v3594 = vld [vmem:[#allocation27 + $0x38] sm:$0xff]
    %vm3595 = vcmask 523264
    %v3597 = vsel %vm3595, %v3582, 0
    %3599 = vmatpush.msra.mxu0 0.0
    %3600 = vmatpush.msra.mxu0 0.0
    %3601 = vmatpush.msra.mxu0 0.0
    %3602 = vmatpush.msra.mxu0 0.0
    %3603 = vmatpush.msra.mxu0 0.0
    %3604 = vmatpush.msra.mxu0 0.0
    %3605 = vmatpush.msra.mxu0 0.0
    %3606 = vmatpush.msra.mxu0 0.0
    %v3607 = vand.u32 %v3594, 4294901760
    %3608 = vmatpush.msra.mxu0 %v3607
    %v3609 = vand.u32 %v3593, 4294901760
    %3610 = vmatpush.msra.mxu0 %v3609
    %v3611 = vand.u32 %v3592, 4294901760
    %3612 = vmatpush.msra.mxu0 %v3611
    %v3613 = vand.u32 %v3591, 4294901760
    %3614 = vmatpush.msra.mxu0 %v3613
    %v3615 = vand.u32 %v3590, 4294901760
    %3616 = vmatpush.msra.mxu0 %v3615
    %v3617 = vand.u32 %v3589, 4294901760
    %3618 = vmatpush.msra.mxu0 %v3617
    %v3619 = vand.u32 %v3588, 4294901760
    %3620 = vmatpush.msra.mxu0 %v3619
    %v3621 = vand.u32 %v3587, 4294901760
    %3622 = vmatpush.msra.mxu0 %v3621
    %v3623 = vand.u32 %v3597, 4294901760
    %v3624 = vsub.f32 %v3597, %v3623
    %v3625 = vand.u32 %v3624, 4294901760
    %v3626 = vsub.f32 %v3624, %v3625
    %v3627 = vand.u32 %v3626, 4294901760
    %3628 = vmatmul.f32.gmra.mxu0 %v3627
    %v3629 = vpop.f32.mrf.mxu0
    %v3630 = vadd.f32 0.0, %v3629
    %3631 = vdwg.mxu0
    %3632 = vmatpush.msra.mxu0 0.0
    %3633 = vmatpush.msra.mxu0 0.0
    %3634 = vmatpush.msra.mxu0 0.0
    %3635 = vmatpush.msra.mxu0 0.0
    %3636 = vmatpush.msra.mxu0 0.0
    %3637 = vmatpush.msra.mxu0 0.0
    %3638 = vmatpush.msra.mxu0 0.0
    %3639 = vmatpush.msra.mxu0 0.0
    %v3640 = vand.u32 %v3594, 4294901760
    %v3641 = vsub.f32 %v3594, %v3640
    %v3642 = vand.u32 %v3641, 4294901760
    %v3643 = vsub.f32 %v3641, %v3642
    %v3644 = vand.u32 %v3643, 4294901760
    %3645 = vmatpush.msra.mxu0 %v3644
    %v3646 = vand.u32 %v3593, 4294901760
    %v3647 = vsub.f32 %v3593, %v3646
    %v3648 = vand.u32 %v3647, 4294901760
    %v3649 = vsub.f32 %v3647, %v3648
    %v3650 = vand.u32 %v3649, 4294901760
    %3651 = vmatpush.msra.mxu0 %v3650
    %v3652 = vand.u32 %v3592, 4294901760
    %v3653 = vsub.f32 %v3592, %v3652
    %v3654 = vand.u32 %v3653, 4294901760
    %v3655 = vsub.f32 %v3653, %v3654
    %v3656 = vand.u32 %v3655, 4294901760
    %3657 = vmatpush.msra.mxu0 %v3656
    %v3658 = vand.u32 %v3591, 4294901760
    %v3659 = vsub.f32 %v3591, %v3658
    %v3660 = vand.u32 %v3659, 4294901760
    %v3661 = vsub.f32 %v3659, %v3660
    %v3662 = vand.u32 %v3661, 4294901760
    %3663 = vmatpush.msra.mxu0 %v3662
    %v3664 = vand.u32 %v3590, 4294901760
    %v3665 = vsub.f32 %v3590, %v3664
    %v3666 = vand.u32 %v3665, 4294901760
    %v3667 = vsub.f32 %v3665, %v3666
    %v3668 = vand.u32 %v3667, 4294901760
    %3669 = vmatpush.msra.mxu0 %v3668
    %v3670 = vand.u32 %v3589, 4294901760
    %v3671 = vsub.f32 %v3589, %v3670
    %v3672 = vand.u32 %v3671, 4294901760
    %v3673 = vsub.f32 %v3671, %v3672
    %v3674 = vand.u32 %v3673, 4294901760
    %3675 = vmatpush.msra.mxu0 %v3674
    %v3676 = vand.u32 %v3588, 4294901760
    %v3677 = vsub.f32 %v3588, %v3676
    %v3678 = vand.u32 %v3677, 4294901760
    %v3679 = vsub.f32 %v3677, %v3678
    %v3680 = vand.u32 %v3679, 4294901760
    %3681 = vmatpush.msra.mxu0 %v3680
    %v3682 = vand.u32 %v3587, 4294901760
    %v3683 = vsub.f32 %v3587, %v3682
    %v3684 = vand.u32 %v3683, 4294901760
    %v3685 = vsub.f32 %v3683, %v3684
    %v3686 = vand.u32 %v3685, 4294901760
    %3687 = vmatpush.msra.mxu0 %v3686
    %v3688 = vand.u32 %v3597, 4294901760
    %3689 = vmatmul.f32.gmra.mxu0 %v3688
    %v3690 = vpop.f32.mrf.mxu0
    %v3691 = vadd.f32 %v3630, %v3690
    %3692 = vdwg.mxu0
    %3693 = vmatpush.msra.mxu0 0.0
    %3694 = vmatpush.msra.mxu0 0.0
    %3695 = vmatpush.msra.mxu0 0.0
    %3696 = vmatpush.msra.mxu0 0.0
    %3697 = vmatpush.msra.mxu0 0.0
    %3698 = vmatpush.msra.mxu0 0.0
    %3699 = vmatpush.msra.mxu0 0.0
    %3700 = vmatpush.msra.mxu0 0.0
    %v3701 = vand.u32 %v3594, 4294901760
    %v3702 = vsub.f32 %v3594, %v3701
    %3703 = vmatpush.msra.mxu0 %v3702
    %v3704 = vand.u32 %v3593, 4294901760
    %v3705 = vsub.f32 %v3593, %v3704
    %3706 = vmatpush.msra.mxu0 %v3705
    %v3707 = vand.u32 %v3592, 4294901760
    %v3708 = vsub.f32 %v3592, %v3707
    %3709 = vmatpush.msra.mxu0 %v3708
    %v3710 = vand.u32 %v3591, 4294901760
    %v3711 = vsub.f32 %v3591, %v3710
    %3712 = vmatpush.msra.mxu0 %v3711
    %v3713 = vand.u32 %v3590, 4294901760
    %v3714 = vsub.f32 %v3590, %v3713
    %3715 = vmatpush.msra.mxu0 %v3714
    %v3716 = vand.u32 %v3589, 4294901760
    %v3717 = vsub.f32 %v3589, %v3716
    %3718 = vmatpush.msra.mxu0 %v3717
    %v3719 = vand.u32 %v3588, 4294901760
    %v3720 = vsub.f32 %v3588, %v3719
    %3721 = vmatpush.msra.mxu0 %v3720
    %v3722 = vand.u32 %v3587, 4294901760
    %v3723 = vsub.f32 %v3587, %v3722
    %3724 = vmatpush.msra.mxu0 %v3723
    %v3725 = vand.u32 %v3597, 4294901760
    %v3726 = vsub.f32 %v3597, %v3725
    %3727 = vmatmul.f32.gmra.mxu0 %v3726
    %v3728 = vpop.f32.mrf.mxu0
    %v3729 = vadd.f32 %v3691, %v3728
    %3730 = vdwg.mxu0
    %3731 = vmatpush.msra.mxu0 0.0
    %3732 = vmatpush.msra.mxu0 0.0
    %3733 = vmatpush.msra.mxu0 0.0
    %3734 = vmatpush.msra.mxu0 0.0
    %3735 = vmatpush.msra.mxu0 0.0
    %3736 = vmatpush.msra.mxu0 0.0
    %3737 = vmatpush.msra.mxu0 0.0
    %3738 = vmatpush.msra.mxu0 0.0
    %v3739 = vand.u32 %v3594, 4294901760
    %3740 = vmatpush.msra.mxu0 %v3739
    %v3741 = vand.u32 %v3593, 4294901760
    %3742 = vmatpush.msra.mxu0 %v3741
    %v3743 = vand.u32 %v3592, 4294901760
    %3744 = vmatpush.msra.mxu0 %v3743
    %v3745 = vand.u32 %v3591, 4294901760
    %3746 = vmatpush.msra.mxu0 %v3745
    %v3747 = vand.u32 %v3590, 4294901760
    %3748 = vmatpush.msra.mxu0 %v3747
    %v3749 = vand.u32 %v3589, 4294901760
    %3750 = vmatpush.msra.mxu0 %v3749
    %v3751 = vand.u32 %v3588, 4294901760
    %3752 = vmatpush.msra.mxu0 %v3751
    %v3753 = vand.u32 %v3587, 4294901760
    %3754 = vmatpush.msra.mxu0 %v3753
    %v3755 = vand.u32 %v3597, 4294901760
    %v3756 = vsub.f32 %v3597, %v3755
    %v3757 = vand.u32 %v3756, 4294901760
    %3758 = vmatmul.f32.gmra.mxu0 %v3757
    %v3759 = vpop.f32.mrf.mxu0
    %v3760 = vadd.f32 %v3729, %v3759
    %3761 = vdwg.mxu0
    %3762 = vmatpush.msra.mxu0 0.0
    %3763 = vmatpush.msra.mxu0 0.0
    %3764 = vmatpush.msra.mxu0 0.0
    %3765 = vmatpush.msra.mxu0 0.0
    %3766 = vmatpush.msra.mxu0 0.0
    %3767 = vmatpush.msra.mxu0 0.0
    %3768 = vmatpush.msra.mxu0 0.0
    %3769 = vmatpush.msra.mxu0 0.0
    %v3770 = vand.u32 %v3594, 4294901760
    %v3771 = vsub.f32 %v3594, %v3770
    %v3772 = vand.u32 %v3771, 4294901760
    %3773 = vmatpush.msra.mxu0 %v3772
    %v3774 = vand.u32 %v3593, 4294901760
    %v3775 = vsub.f32 %v3593, %v3774
    %v3776 = vand.u32 %v3775, 4294901760
    %3777 = vmatpush.msra.mxu0 %v3776
    %v3778 = vand.u32 %v3592, 4294901760
    %v3779 = vsub.f32 %v3592, %v3778
    %v3780 = vand.u32 %v3779, 4294901760
    %3781 = vmatpush.msra.mxu0 %v3780
    %v3782 = vand.u32 %v3591, 4294901760
    %v3783 = vsub.f32 %v3591, %v3782
    %v3784 = vand.u32 %v3783, 4294901760
    %3785 = vmatpush.msra.mxu0 %v3784
    %v3786 = vand.u32 %v3590, 4294901760
    %v3787 = vsub.f32 %v3590, %v3786
    %v3788 = vand.u32 %v3787, 4294901760
    %3789 = vmatpush.msra.mxu0 %v3788
    %v3790 = vand.u32 %v3589, 4294901760
    %v3791 = vsub.f32 %v3589, %v3790
    %v3792 = vand.u32 %v3791, 4294901760
    %3793 = vmatpush.msra.mxu0 %v3792
    %v3794 = vand.u32 %v3588, 4294901760
    %v3795 = vsub.f32 %v3588, %v3794
    %v3796 = vand.u32 %v3795, 4294901760
    %3797 = vmatpush.msra.mxu0 %v3796
    %v3798 = vand.u32 %v3587, 4294901760
    %v3799 = vsub.f32 %v3587, %v3798
    %v3800 = vand.u32 %v3799, 4294901760
    %3801 = vmatpush.msra.mxu0 %v3800
    %v3802 = vand.u32 %v3597, 4294901760
    %3803 = vmatmul.f32.gmra.mxu0 %v3802
    %v3804 = vpop.f32.mrf.mxu0
    %v3805 = vadd.f32 %v3760, %v3804
    %3806 = vdwg.mxu0
    %3807 = vmatpush.msra.mxu0 0.0
    %3808 = vmatpush.msra.mxu0 0.0
    %3809 = vmatpush.msra.mxu0 0.0
    %3810 = vmatpush.msra.mxu0 0.0
    %3811 = vmatpush.msra.mxu0 0.0
    %3812 = vmatpush.msra.mxu0 0.0
    %3813 = vmatpush.msra.mxu0 0.0
    %3814 = vmatpush.msra.mxu0 0.0
    %v3815 = vand.u32 %v3594, 4294901760
    %3816 = vmatpush.msra.mxu0 %v3815
    %v3817 = vand.u32 %v3593, 4294901760
    %3818 = vmatpush.msra.mxu0 %v3817
    %v3819 = vand.u32 %v3592, 4294901760
    %3820 = vmatpush.msra.mxu0 %v3819
    %v3821 = vand.u32 %v3591, 4294901760
    %3822 = vmatpush.msra.mxu0 %v3821
    %v3823 = vand.u32 %v3590, 4294901760
    %3824 = vmatpush.msra.mxu0 %v3823
    %v3825 = vand.u32 %v3589, 4294901760
    %3826 = vmatpush.msra.mxu0 %v3825
    %v3827 = vand.u32 %v3588, 4294901760
    %3828 = vmatpush.msra.mxu0 %v3827
    %v3829 = vand.u32 %v3587, 4294901760
    %3830 = vmatpush.msra.mxu0 %v3829
    %v3831 = vand.u32 %v3597, 4294901760
    %3832 = vmatmul.f32.gmra.mxu0 %v3831
    %v3833 = vpop.f32.mrf.mxu0
    %v3834 = vadd.f32 %v3805, %v3833
    %3835 = vdwg.mxu0
    %v3838 = vsel %vm1524, %v3422, %v3421
    %v3839 = vsel %vm2517, %v3838, 0
    %3841 = vmatpush.msra.mxu0 0.0
    %3842 = vmatpush.msra.mxu0 0.0
    %3843 = vmatpush.msra.mxu0 0.0
    %3844 = vmatpush.msra.mxu0 0.0
    %3845 = vmatpush.msra.mxu0 0.0
    %3846 = vmatpush.msra.mxu0 0.0
    %3847 = vmatpush.msra.mxu0 0.0
    %3848 = vmatpush.msra.mxu0 0.0
    %3849 = vmatpush.msra.mxu0 0.0
    %3850 = vmatpush.msra.mxu0 0.0
    %3851 = vmatpush.msra.mxu0 0.0
    %3852 = vmatpush.msra.mxu0 0.0
    %v3853 = vand.u32 %v3586, 4294901760
    %3854 = vmatpush.msra.mxu0 %v3853
    %v3855 = vand.u32 %v3585, 4294901760
    %3856 = vmatpush.msra.mxu0 %v3855
    %v3857 = vand.u32 %v3584, 4294901760
    %3858 = vmatpush.msra.mxu0 %v3857
    %v3859 = vand.u32 %v3583, 4294901760
    %3860 = vmatpush.msra.mxu0 %v3859
    %v3861 = vand.u32 %v3839, 4294901760
    %v3862 = vsub.f32 %v3839, %v3861
    %v3863 = vand.u32 %v3862, 4294901760
    %v3864 = vsub.f32 %v3862, %v3863
    %v3865 = vand.u32 %v3864, 4294901760
    %3866 = vmatmul.f32.gmra.mxu0 %v3865
    %v3867 = vpop.f32.mrf.mxu0
    %v3868 = vadd.f32 %v3834, %v3867
    %3869 = vdwg.mxu0
    %3870 = vmatpush.msra.mxu0 0.0
    %3871 = vmatpush.msra.mxu0 0.0
    %3872 = vmatpush.msra.mxu0 0.0
    %3873 = vmatpush.msra.mxu0 0.0
    %3874 = vmatpush.msra.mxu0 0.0
    %3875 = vmatpush.msra.mxu0 0.0
    %3876 = vmatpush.msra.mxu0 0.0
    %3877 = vmatpush.msra.mxu0 0.0
    %3878 = vmatpush.msra.mxu0 0.0
    %3879 = vmatpush.msra.mxu0 0.0
    %3880 = vmatpush.msra.mxu0 0.0
    %3881 = vmatpush.msra.mxu0 0.0
    %v3882 = vand.u32 %v3586, 4294901760
    %v3883 = vsub.f32 %v3586, %v3882
    %v3884 = vand.u32 %v3883, 4294901760
    %v3885 = vsub.f32 %v3883, %v3884
    %v3886 = vand.u32 %v3885, 4294901760
    %3887 = vmatpush.msra.mxu0 %v3886
    %v3888 = vand.u32 %v3585, 4294901760
    %v3889 = vsub.f32 %v3585, %v3888
    %v3890 = vand.u32 %v3889, 4294901760
    %v3891 = vsub.f32 %v3889, %v3890
    %v3892 = vand.u32 %v3891, 4294901760
    %3893 = vmatpush.msra.mxu0 %v3892
    %v3894 = vand.u32 %v3584, 4294901760
    %v3895 = vsub.f32 %v3584, %v3894
    %v3896 = vand.u32 %v3895, 4294901760
    %v3897 = vsub.f32 %v3895, %v3896
    %v3898 = vand.u32 %v3897, 4294901760
    %3899 = vmatpush.msra.mxu0 %v3898
    %v3900 = vand.u32 %v3583, 4294901760
    %v3901 = vsub.f32 %v3583, %v3900
    %v3902 = vand.u32 %v3901, 4294901760
    %v3903 = vsub.f32 %v3901, %v3902
    %v3904 = vand.u32 %v3903, 4294901760
    %3905 = vmatpush.msra.mxu0 %v3904
    %v3906 = vand.u32 %v3839, 4294901760
    %3907 = vmatmul.f32.gmra.mxu0 %v3906
    %v3908 = vpop.f32.mrf.mxu0
    %v3909 = vadd.f32 %v3868, %v3908
    %3910 = vdwg.mxu0
    %3911 = vmatpush.msra.mxu0 0.0
    %3912 = vmatpush.msra.mxu0 0.0
    %3913 = vmatpush.msra.mxu0 0.0
    %3914 = vmatpush.msra.mxu0 0.0
    %3915 = vmatpush.msra.mxu0 0.0
    %3916 = vmatpush.msra.mxu0 0.0
    %3917 = vmatpush.msra.mxu0 0.0
    %3918 = vmatpush.msra.mxu0 0.0
    %3919 = vmatpush.msra.mxu0 0.0
    %3920 = vmatpush.msra.mxu0 0.0
    %3921 = vmatpush.msra.mxu0 0.0
    %3922 = vmatpush.msra.mxu0 0.0
    %v3923 = vand.u32 %v3586, 4294901760
    %v3924 = vsub.f32 %v3586, %v3923
    %3925 = vmatpush.msra.mxu0 %v3924
    %v3926 = vand.u32 %v3585, 4294901760
    %v3927 = vsub.f32 %v3585, %v3926
    %3928 = vmatpush.msra.mxu0 %v3927
    %v3929 = vand.u32 %v3584, 4294901760
    %v3930 = vsub.f32 %v3584, %v3929
    %3931 = vmatpush.msra.mxu0 %v3930
    %v3932 = vand.u32 %v3583, 4294901760
    %v3933 = vsub.f32 %v3583, %v3932
    %3934 = vmatpush.msra.mxu0 %v3933
    %v3935 = vand.u32 %v3839, 4294901760
    %v3936 = vsub.f32 %v3839, %v3935
    %3937 = vmatmul.f32.gmra.mxu0 %v3936
    %v3938 = vpop.f32.mrf.mxu0
    %v3939 = vadd.f32 %v3909, %v3938
    %3940 = vdwg.mxu0
    %3941 = vmatpush.msra.mxu0 0.0
    %3942 = vmatpush.msra.mxu0 0.0
    %3943 = vmatpush.msra.mxu0 0.0
    %3944 = vmatpush.msra.mxu0 0.0
    %3945 = vmatpush.msra.mxu0 0.0
    %3946 = vmatpush.msra.mxu0 0.0
    %3947 = vmatpush.msra.mxu0 0.0
    %3948 = vmatpush.msra.mxu0 0.0
    %3949 = vmatpush.msra.mxu0 0.0
    %3950 = vmatpush.msra.mxu0 0.0
    %3951 = vmatpush.msra.mxu0 0.0
    %3952 = vmatpush.msra.mxu0 0.0
    %v3953 = vand.u32 %v3586, 4294901760
    %3954 = vmatpush.msra.mxu0 %v3953
    %v3955 = vand.u32 %v3585, 4294901760
    %3956 = vmatpush.msra.mxu0 %v3955
    %v3957 = vand.u32 %v3584, 4294901760
    %3958 = vmatpush.msra.mxu0 %v3957
    %v3959 = vand.u32 %v3583, 4294901760
    %3960 = vmatpush.msra.mxu0 %v3959
    %v3961 = vand.u32 %v3839, 4294901760
    %v3962 = vsub.f32 %v3839, %v3961
    %v3963 = vand.u32 %v3962, 4294901760
    %3964 = vmatmul.f32.gmra.mxu0 %v3963
    %v3965 = vpop.f32.mrf.mxu0
    %v3966 = vadd.f32 %v3939, %v3965
    %3967 = vdwg.mxu0
    %3968 = vmatpush.msra.mxu0 0.0
    %3969 = vmatpush.msra.mxu0 0.0
    %3970 = vmatpush.msra.mxu0 0.0
    %3971 = vmatpush.msra.mxu0 0.0
    %3972 = vmatpush.msra.mxu0 0.0
    %3973 = vmatpush.msra.mxu0 0.0
    %3974 = vmatpush.msra.mxu0 0.0
    %3975 = vmatpush.msra.mxu0 0.0
    %3976 = vmatpush.msra.mxu0 0.0
    %3977 = vmatpush.msra.mxu0 0.0
    %3978 = vmatpush.msra.mxu0 0.0
    %3979 = vmatpush.msra.mxu0 0.0
    %v3980 = vand.u32 %v3586, 4294901760
    %v3981 = vsub.f32 %v3586, %v3980
    %v3982 = vand.u32 %v3981, 4294901760
    %3983 = vmatpush.msra.mxu0 %v3982
    %v3984 = vand.u32 %v3585, 4294901760
    %v3985 = vsub.f32 %v3585, %v3984
    %v3986 = vand.u32 %v3985, 4294901760
    %3987 = vmatpush.msra.mxu0 %v3986
    %v3988 = vand.u32 %v3584, 4294901760
    %v3989 = vsub.f32 %v3584, %v3988
    %v3990 = vand.u32 %v3989, 4294901760
    %3991 = vmatpush.msra.mxu0 %v3990
    %v3992 = vand.u32 %v3583, 4294901760
    %v3993 = vsub.f32 %v3583, %v3992
    %v3994 = vand.u32 %v3993, 4294901760
    %3995 = vmatpush.msra.mxu0 %v3994
    %v3996 = vand.u32 %v3839, 4294901760
    %3997 = vmatmul.f32.gmra.mxu0 %v3996
    %v3998 = vpop.f32.mrf.mxu0
    %v3999 = vadd.f32 %v3966, %v3998
    %4000 = vdwg.mxu0
    %4001 = vmatpush.msra.mxu0 0.0
    %4002 = vmatpush.msra.mxu0 0.0
    %4003 = vmatpush.msra.mxu0 0.0
    %4004 = vmatpush.msra.mxu0 0.0
    %4005 = vmatpush.msra.mxu0 0.0
    %4006 = vmatpush.msra.mxu0 0.0
    %4007 = vmatpush.msra.mxu0 0.0
    %4008 = vmatpush.msra.mxu0 0.0
    %4009 = vmatpush.msra.mxu0 0.0
    %4010 = vmatpush.msra.mxu0 0.0
    %4011 = vmatpush.msra.mxu0 0.0
    %4012 = vmatpush.msra.mxu0 0.0
    %v4013 = vand.u32 %v3586, 4294901760
    %4014 = vmatpush.msra.mxu0 %v4013
    %v4015 = vand.u32 %v3585, 4294901760
    %4016 = vmatpush.msra.mxu0 %v4015
    %v4017 = vand.u32 %v3584, 4294901760
    %4018 = vmatpush.msra.mxu0 %v4017
    %v4019 = vand.u32 %v3583, 4294901760
    %4020 = vmatpush.msra.mxu0 %v4019
    %v4021 = vand.u32 %v3839, 4294901760
    %4022 = vmatmul.f32.gmra.mxu0 %v4021
    %v4023 = vpop.f32.mrf.mxu0
    %v4024 = vadd.f32 %v3999, %v4023
    %4025 = vdwg.mxu0
    %v4026 = vld [vmem:[%s45] sm:$0x1]
    %v4028 = vperm.slane %v4026, 0
    %v4030 = vadd.f32 %v4024, %v4028
    %v4031 = vmax.f32 %v4030, 0.0
    %v4032 = vld [vmem:[%s47] sm:$0xff]
    %v4033 = vld [vmem:[%s47 + $0x8] sm:$0xff]
    %v4034 = vld [vmem:[%s47 + $0x10] sm:$0xff]
    %v4035 = vld [vmem:[%s47 + $0x18] sm:$0xff]
    %v4036 = vld [vmem:[%s47 + $0x20] sm:$0xff]
    %v4037 = vld [vmem:[%s47 + $0x28] sm:$0xff]
    %v4038 = vld [vmem:[%s47 + $0x30] sm:$0xff]
    %v4039 = vld [vmem:[%s47 + $0x38] sm:$0xff]
    %v4040 = vld [vmem:[%s47 + $0x40] sm:$0xff]
    %v4041 = vld [vmem:[%s47 + $0x48] sm:$0xff]
    %v4042 = vld [vmem:[%s47 + $0x50] sm:$0xff]
    %v4043 = vld [vmem:[%s47 + $0x58] sm:$0xff]
    %v4044 = vld [vmem:[%s47 + $0x60] sm:$0xff]
    %v4045 = vld [vmem:[%s47 + $0x68] sm:$0xff]
    %v4046 = vld [vmem:[%s47 + $0x70] sm:$0xff]
    %v4047 = vld [vmem:[%s47 + $0x78] sm:$0xff]
    %v4048 = vld [vmem:[%s49] sm:$0x1]
    %v4050 = vperm.slane %v4048, 0
    %v4052 = vand.u32 %v4047, 4294901760
    %4053 = vmatpush.msra.mxu0 %v4052
    %v4054 = vand.u32 %v4046, 4294901760
    %4055 = vmatpush.msra.mxu0 %v4054
    %v4056 = vand.u32 %v4045, 4294901760
    %4057 = vmatpush.msra.mxu0 %v4056
    %v4058 = vand.u32 %v4044, 4294901760
    %4059 = vmatpush.msra.mxu0 %v4058
    %v4060 = vand.u32 %v4043, 4294901760
    %4061 = vmatpush.msra.mxu0 %v4060
    %v4062 = vand.u32 %v4042, 4294901760
    %4063 = vmatpush.msra.mxu0 %v4062
    %v4064 = vand.u32 %v4041, 4294901760
    %4065 = vmatpush.msra.mxu0 %v4064
    %v4066 = vand.u32 %v4040, 4294901760
    %4067 = vmatpush.msra.mxu0 %v4066
    %v4068 = vand.u32 %v4039, 4294901760
    %4069 = vmatpush.msra.mxu0 %v4068
    %v4070 = vand.u32 %v4038, 4294901760
    %4071 = vmatpush.msra.mxu0 %v4070
    %v4072 = vand.u32 %v4037, 4294901760
    %4073 = vmatpush.msra.mxu0 %v4072
    %v4074 = vand.u32 %v4036, 4294901760
    %4075 = vmatpush.msra.mxu0 %v4074
    %v4076 = vand.u32 %v4035, 4294901760
    %4077 = vmatpush.msra.mxu0 %v4076
    %v4078 = vand.u32 %v4034, 4294901760
    %4079 = vmatpush.msra.mxu0 %v4078
    %v4080 = vand.u32 %v4033, 4294901760
    %4081 = vmatpush.msra.mxu0 %v4080
    %v4082 = vand.u32 %v4032, 4294901760
    %4083 = vmatpush.msra.mxu0 %v4082
    %v4084 = vand.u32 %v4031, 4294901760
    %v4085 = vsub.f32 %v4031, %v4084
    %v4086 = vand.u32 %v4085, 4294901760
    %v4087 = vsub.f32 %v4085, %v4086
    %v4088 = vand.u32 %v4087, 4294901760
    %4089 = vmatmul.f32.gmra.mxu0 %v4088
    %v4090 = vpop.f32.mrf.mxu0
    %v4091 = vadd.f32 %v4050, %v4090
    %4092 = vdwg.mxu0
    %v4093 = vand.u32 %v4047, 4294901760
    %v4094 = vsub.f32 %v4047, %v4093
    %v4095 = vand.u32 %v4094, 4294901760
    %v4096 = vsub.f32 %v4094, %v4095
    %v4097 = vand.u32 %v4096, 4294901760
    %4098 = vmatpush.msra.mxu0 %v4097
    %v4099 = vand.u32 %v4046, 4294901760
    %v4100 = vsub.f32 %v4046, %v4099
    %v4101 = vand.u32 %v4100, 4294901760
    %v4102 = vsub.f32 %v4100, %v4101
    %v4103 = vand.u32 %v4102, 4294901760
    %4104 = vmatpush.msra.mxu0 %v4103
    %v4105 = vand.u32 %v4045, 4294901760
    %v4106 = vsub.f32 %v4045, %v4105
    %v4107 = vand.u32 %v4106, 4294901760
    %v4108 = vsub.f32 %v4106, %v4107
    %v4109 = vand.u32 %v4108, 4294901760
    %4110 = vmatpush.msra.mxu0 %v4109
    %v4111 = vand.u32 %v4044, 4294901760
    %v4112 = vsub.f32 %v4044, %v4111
    %v4113 = vand.u32 %v4112, 4294901760
    %v4114 = vsub.f32 %v4112, %v4113
    %v4115 = vand.u32 %v4114, 4294901760
    %4116 = vmatpush.msra.mxu0 %v4115
    %v4117 = vand.u32 %v4043, 4294901760
    %v4118 = vsub.f32 %v4043, %v4117
    %v4119 = vand.u32 %v4118, 4294901760
    %v4120 = vsub.f32 %v4118, %v4119
    %v4121 = vand.u32 %v4120, 4294901760
    %4122 = vmatpush.msra.mxu0 %v4121
    %v4123 = vand.u32 %v4042, 4294901760
    %v4124 = vsub.f32 %v4042, %v4123
    %v4125 = vand.u32 %v4124, 4294901760
    %v4126 = vsub.f32 %v4124, %v4125
    %v4127 = vand.u32 %v4126, 4294901760
    %4128 = vmatpush.msra.mxu0 %v4127
    %v4129 = vand.u32 %v4041, 4294901760
    %v4130 = vsub.f32 %v4041, %v4129
    %v4131 = vand.u32 %v4130, 4294901760
    %v4132 = vsub.f32 %v4130, %v4131
    %v4133 = vand.u32 %v4132, 4294901760
    %4134 = vmatpush.msra.mxu0 %v4133
    %v4135 = vand.u32 %v4040, 4294901760
    %v4136 = vsub.f32 %v4040, %v4135
    %v4137 = vand.u32 %v4136, 4294901760
    %v4138 = vsub.f32 %v4136, %v4137
    %v4139 = vand.u32 %v4138, 4294901760
    %4140 = vmatpush.msra.mxu0 %v4139
    %v4141 = vand.u32 %v4039, 4294901760
    %v4142 = vsub.f32 %v4039, %v4141
    %v4143 = vand.u32 %v4142, 4294901760
    %v4144 = vsub.f32 %v4142, %v4143
    %v4145 = vand.u32 %v4144, 4294901760
    %4146 = vmatpush.msra.mxu0 %v4145
    %v4147 = vand.u32 %v4038, 4294901760
    %v4148 = vsub.f32 %v4038, %v4147
    %v4149 = vand.u32 %v4148, 4294901760
    %v4150 = vsub.f32 %v4148, %v4149
    %v4151 = vand.u32 %v4150, 4294901760
    %4152 = vmatpush.msra.mxu0 %v4151
    %v4153 = vand.u32 %v4037, 4294901760
    %v4154 = vsub.f32 %v4037, %v4153
    %v4155 = vand.u32 %v4154, 4294901760
    %v4156 = vsub.f32 %v4154, %v4155
    %v4157 = vand.u32 %v4156, 4294901760
    %4158 = vmatpush.msra.mxu0 %v4157
    %v4159 = vand.u32 %v4036, 4294901760
    %v4160 = vsub.f32 %v4036, %v4159
    %v4161 = vand.u32 %v4160, 4294901760
    %v4162 = vsub.f32 %v4160, %v4161
    %v4163 = vand.u32 %v4162, 4294901760
    %4164 = vmatpush.msra.mxu0 %v4163
    %v4165 = vand.u32 %v4035, 4294901760
    %v4166 = vsub.f32 %v4035, %v4165
    %v4167 = vand.u32 %v4166, 4294901760
    %v4168 = vsub.f32 %v4166, %v4167
    %v4169 = vand.u32 %v4168, 4294901760
    %4170 = vmatpush.msra.mxu0 %v4169
    %v4171 = vand.u32 %v4034, 4294901760
    %v4172 = vsub.f32 %v4034, %v4171
    %v4173 = vand.u32 %v4172, 4294901760
    %v4174 = vsub.f32 %v4172, %v4173
    %v4175 = vand.u32 %v4174, 4294901760
    %4176 = vmatpush.msra.mxu0 %v4175
    %v4177 = vand.u32 %v4033, 4294901760
    %v4178 = vsub.f32 %v4033, %v4177
    %v4179 = vand.u32 %v4178, 4294901760
    %v4180 = vsub.f32 %v4178, %v4179
    %v4181 = vand.u32 %v4180, 4294901760
    %4182 = vmatpush.msra.mxu0 %v4181
    %v4183 = vand.u32 %v4032, 4294901760
    %v4184 = vsub.f32 %v4032, %v4183
    %v4185 = vand.u32 %v4184, 4294901760
    %v4186 = vsub.f32 %v4184, %v4185
    %v4187 = vand.u32 %v4186, 4294901760
    %4188 = vmatpush.msra.mxu0 %v4187
    %v4189 = vand.u32 %v4031, 4294901760
    %4190 = vmatmul.f32.gmra.mxu0 %v4189
    %v4191 = vpop.f32.mrf.mxu0
    %v4192 = vadd.f32 %v4091, %v4191
    %4193 = vdwg.mxu0
    %v4194 = vand.u32 %v4047, 4294901760
    %v4195 = vsub.f32 %v4047, %v4194
    %4196 = vmatpush.msra.mxu0 %v4195
    %v4197 = vand.u32 %v4046, 4294901760
    %v4198 = vsub.f32 %v4046, %v4197
    %4199 = vmatpush.msra.mxu0 %v4198
    %v4200 = vand.u32 %v4045, 4294901760
    %v4201 = vsub.f32 %v4045, %v4200
    %4202 = vmatpush.msra.mxu0 %v4201
    %v4203 = vand.u32 %v4044, 4294901760
    %v4204 = vsub.f32 %v4044, %v4203
    %4205 = vmatpush.msra.mxu0 %v4204
    %v4206 = vand.u32 %v4043, 4294901760
    %v4207 = vsub.f32 %v4043, %v4206
    %4208 = vmatpush.msra.mxu0 %v4207
    %v4209 = vand.u32 %v4042, 4294901760
    %v4210 = vsub.f32 %v4042, %v4209
    %4211 = vmatpush.msra.mxu0 %v4210
    %v4212 = vand.u32 %v4041, 4294901760
    %v4213 = vsub.f32 %v4041, %v4212
    %4214 = vmatpush.msra.mxu0 %v4213
    %v4215 = vand.u32 %v4040, 4294901760
    %v4216 = vsub.f32 %v4040, %v4215
    %4217 = vmatpush.msra.mxu0 %v4216
    %v4218 = vand.u32 %v4039, 4294901760
    %v4219 = vsub.f32 %v4039, %v4218
    %4220 = vmatpush.msra.mxu0 %v4219
    %v4221 = vand.u32 %v4038, 4294901760
    %v4222 = vsub.f32 %v4038, %v4221
    %4223 = vmatpush.msra.mxu0 %v4222
    %v4224 = vand.u32 %v4037, 4294901760
    %v4225 = vsub.f32 %v4037, %v4224
    %4226 = vmatpush.msra.mxu0 %v4225
    %v4227 = vand.u32 %v4036, 4294901760
    %v4228 = vsub.f32 %v4036, %v4227
    %4229 = vmatpush.msra.mxu0 %v4228
    %v4230 = vand.u32 %v4035, 4294901760
    %v4231 = vsub.f32 %v4035, %v4230
    %4232 = vmatpush.msra.mxu0 %v4231
    %v4233 = vand.u32 %v4034, 4294901760
    %v4234 = vsub.f32 %v4034, %v4233
    %4235 = vmatpush.msra.mxu0 %v4234
    %v4236 = vand.u32 %v4033, 4294901760
    %v4237 = vsub.f32 %v4033, %v4236
    %4238 = vmatpush.msra.mxu0 %v4237
    %v4239 = vand.u32 %v4032, 4294901760
    %v4240 = vsub.f32 %v4032, %v4239
    %4241 = vmatpush.msra.mxu0 %v4240
    %v4242 = vand.u32 %v4031, 4294901760
    %v4243 = vsub.f32 %v4031, %v4242
    %4244 = vmatmul.f32.gmra.mxu0 %v4243
    %v4245 = vpop.f32.mrf.mxu0
    %v4246 = vadd.f32 %v4192, %v4245
    %4247 = vdwg.mxu0
    %v4248 = vand.u32 %v4047, 4294901760
    %4249 = vmatpush.msra.mxu0 %v4248
    %v4250 = vand.u32 %v4046, 4294901760
    %4251 = vmatpush.msra.mxu0 %v4250
    %v4252 = vand.u32 %v4045, 4294901760
    %4253 = vmatpush.msra.mxu0 %v4252
    %v4254 = vand.u32 %v4044, 4294901760
    %4255 = vmatpush.msra.mxu0 %v4254
    %v4256 = vand.u32 %v4043, 4294901760
    %4257 = vmatpush.msra.mxu0 %v4256
    %v4258 = vand.u32 %v4042, 4294901760
    %4259 = vmatpush.msra.mxu0 %v4258
    %v4260 = vand.u32 %v4041, 4294901760
    %4261 = vmatpush.msra.mxu0 %v4260
    %v4262 = vand.u32 %v4040, 4294901760
    %4263 = vmatpush.msra.mxu0 %v4262
    %v4264 = vand.u32 %v4039, 4294901760
    %4265 = vmatpush.msra.mxu0 %v4264
    %v4266 = vand.u32 %v4038, 4294901760
    %4267 = vmatpush.msra.mxu0 %v4266
    %v4268 = vand.u32 %v4037, 4294901760
    %4269 = vmatpush.msra.mxu0 %v4268
    %v4270 = vand.u32 %v4036, 4294901760
    %4271 = vmatpush.msra.mxu0 %v4270
    %v4272 = vand.u32 %v4035, 4294901760
    %4273 = vmatpush.msra.mxu0 %v4272
    %v4274 = vand.u32 %v4034, 4294901760
    %4275 = vmatpush.msra.mxu0 %v4274
    %v4276 = vand.u32 %v4033, 4294901760
    %4277 = vmatpush.msra.mxu0 %v4276
    %v4278 = vand.u32 %v4032, 4294901760
    %4279 = vmatpush.msra.mxu0 %v4278
    %v4280 = vand.u32 %v4031, 4294901760
    %v4281 = vsub.f32 %v4031, %v4280
    %v4282 = vand.u32 %v4281, 4294901760
    %4283 = vmatmul.f32.gmra.mxu0 %v4282
    %v4284 = vpop.f32.mrf.mxu0
    %v4285 = vadd.f32 %v4246, %v4284
    %4286 = vdwg.mxu0
    %v4287 = vand.u32 %v4047, 4294901760
    %v4288 = vsub.f32 %v4047, %v4287
    %v4289 = vand.u32 %v4288, 4294901760
    %4290 = vmatpush.msra.mxu0 %v4289
    %v4291 = vand.u32 %v4046, 4294901760
    %v4292 = vsub.f32 %v4046, %v4291
    %v4293 = vand.u32 %v4292, 4294901760
    %4294 = vmatpush.msra.mxu0 %v4293
    %v4295 = vand.u32 %v4045, 4294901760
    %v4296 = vsub.f32 %v4045, %v4295
    %v4297 = vand.u32 %v4296, 4294901760
    %4298 = vmatpush.msra.mxu0 %v4297
    %v4299 = vand.u32 %v4044, 4294901760
    %v4300 = vsub.f32 %v4044, %v4299
    %v4301 = vand.u32 %v4300, 4294901760
    %4302 = vmatpush.msra.mxu0 %v4301
    %v4303 = vand.u32 %v4043, 4294901760
    %v4304 = vsub.f32 %v4043, %v4303
    %v4305 = vand.u32 %v4304, 4294901760
    %4306 = vmatpush.msra.mxu0 %v4305
    %v4307 = vand.u32 %v4042, 4294901760
    %v4308 = vsub.f32 %v4042, %v4307
    %v4309 = vand.u32 %v4308, 4294901760
    %4310 = vmatpush.msra.mxu0 %v4309
    %v4311 = vand.u32 %v4041, 4294901760
    %v4312 = vsub.f32 %v4041, %v4311
    %v4313 = vand.u32 %v4312, 4294901760
    %4314 = vmatpush.msra.mxu0 %v4313
    %v4315 = vand.u32 %v4040, 4294901760
    %v4316 = vsub.f32 %v4040, %v4315
    %v4317 = vand.u32 %v4316, 4294901760
    %4318 = vmatpush.msra.mxu0 %v4317
    %v4319 = vand.u32 %v4039, 4294901760
    %v4320 = vsub.f32 %v4039, %v4319
    %v4321 = vand.u32 %v4320, 4294901760
    %4322 = vmatpush.msra.mxu0 %v4321
    %v4323 = vand.u32 %v4038, 4294901760
    %v4324 = vsub.f32 %v4038, %v4323
    %v4325 = vand.u32 %v4324, 4294901760
    %4326 = vmatpush.msra.mxu0 %v4325
    %v4327 = vand.u32 %v4037, 4294901760
    %v4328 = vsub.f32 %v4037, %v4327
    %v4329 = vand.u32 %v4328, 4294901760
    %4330 = vmatpush.msra.mxu0 %v4329
    %v4331 = vand.u32 %v4036, 4294901760
    %v4332 = vsub.f32 %v4036, %v4331
    %v4333 = vand.u32 %v4332, 4294901760
    %4334 = vmatpush.msra.mxu0 %v4333
    %v4335 = vand.u32 %v4035, 4294901760
    %v4336 = vsub.f32 %v4035, %v4335
    %v4337 = vand.u32 %v4336, 4294901760
    %4338 = vmatpush.msra.mxu0 %v4337
    %v4339 = vand.u32 %v4034, 4294901760
    %v4340 = vsub.f32 %v4034, %v4339
    %v4341 = vand.u32 %v4340, 4294901760
    %4342 = vmatpush.msra.mxu0 %v4341
    %v4343 = vand.u32 %v4033, 4294901760
    %v4344 = vsub.f32 %v4033, %v4343
    %v4345 = vand.u32 %v4344, 4294901760
    %4346 = vmatpush.msra.mxu0 %v4345
    %v4347 = vand.u32 %v4032, 4294901760
    %v4348 = vsub.f32 %v4032, %v4347
    %v4349 = vand.u32 %v4348, 4294901760
    %4350 = vmatpush.msra.mxu0 %v4349
    %v4351 = vand.u32 %v4031, 4294901760
    %4352 = vmatmul.f32.gmra.mxu0 %v4351
    %v4353 = vpop.f32.mrf.mxu0
    %v4354 = vadd.f32 %v4285, %v4353
    %4355 = vdwg.mxu0
    %v4356 = vand.u32 %v4047, 4294901760
    %4357 = vmatpush.msra.mxu0 %v4356
    %v4358 = vand.u32 %v4046, 4294901760
    %4359 = vmatpush.msra.mxu0 %v4358
    %v4360 = vand.u32 %v4045, 4294901760
    %4361 = vmatpush.msra.mxu0 %v4360
    %v4362 = vand.u32 %v4044, 4294901760
    %4363 = vmatpush.msra.mxu0 %v4362
    %v4364 = vand.u32 %v4043, 4294901760
    %4365 = vmatpush.msra.mxu0 %v4364
    %v4366 = vand.u32 %v4042, 4294901760
    %4367 = vmatpush.msra.mxu0 %v4366
    %v4368 = vand.u32 %v4041, 4294901760
    %4369 = vmatpush.msra.mxu0 %v4368
    %v4370 = vand.u32 %v4040, 4294901760
    %4371 = vmatpush.msra.mxu0 %v4370
    %v4372 = vand.u32 %v4039, 4294901760
    %4373 = vmatpush.msra.mxu0 %v4372
    %v4374 = vand.u32 %v4038, 4294901760
    %4375 = vmatpush.msra.mxu0 %v4374
    %v4376 = vand.u32 %v4037, 4294901760
    %4377 = vmatpush.msra.mxu0 %v4376
    %v4378 = vand.u32 %v4036, 4294901760
    %4379 = vmatpush.msra.mxu0 %v4378
    %v4380 = vand.u32 %v4035, 4294901760
    %4381 = vmatpush.msra.mxu0 %v4380
    %v4382 = vand.u32 %v4034, 4294901760
    %4383 = vmatpush.msra.mxu0 %v4382
    %v4384 = vand.u32 %v4033, 4294901760
    %4385 = vmatpush.msra.mxu0 %v4384
    %v4386 = vand.u32 %v4032, 4294901760
    %4387 = vmatpush.msra.mxu0 %v4386
    %v4388 = vand.u32 %v4031, 4294901760
    %4389 = vmatmul.f32.gmra.mxu0 %v4388
    %v4390 = vpop.f32.mrf.mxu0
    %v4391 = vadd.f32 %v4354, %v4390
    %4392 = vdwg.mxu0
    %v4393 = vmax.f32 %v4391, 0.0
    %v4394 = vld [vmem:[#allocation29] sm:$0xff]
    %v4395 = vld [vmem:[#allocation29 + $0x8] sm:$0xff]
    %v4396 = vld [vmem:[#allocation29 + $0x10] sm:$0xff]
    %v4397 = vld [vmem:[#allocation29 + $0x18] sm:$0xff]
    %v4398 = vld [vmem:[#allocation29 + $0x20] sm:$0xff]
    %v4399 = vld [vmem:[#allocation29 + $0x28] sm:$0xff]
    %v4400 = vld [vmem:[#allocation29 + $0x30] sm:$0xff]
    %v4401 = vld [vmem:[#allocation29 + $0x38] sm:$0xff]
    %v4402 = vld [vmem:[%s53] sm:$0x1]
    %v4404 = vperm.slane %v4402, 0
    %v4407 = vsel %vm3595, %v4393, 0
    %4409 = vmatpush.msra.mxu0 0.0
    %4410 = vmatpush.msra.mxu0 0.0
    %4411 = vmatpush.msra.mxu0 0.0
    %4412 = vmatpush.msra.mxu0 0.0
    %4413 = vmatpush.msra.mxu0 0.0
    %4414 = vmatpush.msra.mxu0 0.0
    %4415 = vmatpush.msra.mxu0 0.0
    %4416 = vmatpush.msra.mxu0 0.0
    %v4417 = vand.u32 %v4401, 4294901760
    %4418 = vmatpush.msra.mxu0 %v4417
    %v4419 = vand.u32 %v4400, 4294901760
    %4420 = vmatpush.msra.mxu0 %v4419
    %v4421 = vand.u32 %v4399, 4294901760
    %4422 = vmatpush.msra.mxu0 %v4421
    %v4423 = vand.u32 %v4398, 4294901760
    %4424 = vmatpush.msra.mxu0 %v4423
    %v4425 = vand.u32 %v4397, 4294901760
    %4426 = vmatpush.msra.mxu0 %v4425
    %v4427 = vand.u32 %v4396, 4294901760
    %4428 = vmatpush.msra.mxu0 %v4427
    %v4429 = vand.u32 %v4395, 4294901760
    %4430 = vmatpush.msra.mxu0 %v4429
    %v4431 = vand.u32 %v4394, 4294901760
    %4432 = vmatpush.msra.mxu0 %v4431
    %v4433 = vand.u32 %v4407, 4294901760
    %v4434 = vsub.f32 %v4407, %v4433
    %v4435 = vand.u32 %v4434, 4294901760
    %v4436 = vsub.f32 %v4434, %v4435
    %v4437 = vand.u32 %v4436, 4294901760
    %4438 = vmatmul.f32.gmra.mxu0 %v4437
    %v4439 = vpop.f32.mrf.mxu0
    %v4440 = vadd.f32 %v4404, %v4439
    %4441 = vdwg.mxu0
    %4442 = vmatpush.msra.mxu0 0.0
    %4443 = vmatpush.msra.mxu0 0.0
    %4444 = vmatpush.msra.mxu0 0.0
    %4445 = vmatpush.msra.mxu0 0.0
    %4446 = vmatpush.msra.mxu0 0.0
    %4447 = vmatpush.msra.mxu0 0.0
    %4448 = vmatpush.msra.mxu0 0.0
    %4449 = vmatpush.msra.mxu0 0.0
    %v4450 = vand.u32 %v4401, 4294901760
    %v4451 = vsub.f32 %v4401, %v4450
    %v4452 = vand.u32 %v4451, 4294901760
    %v4453 = vsub.f32 %v4451, %v4452
    %v4454 = vand.u32 %v4453, 4294901760
    %4455 = vmatpush.msra.mxu0 %v4454
    %v4456 = vand.u32 %v4400, 4294901760
    %v4457 = vsub.f32 %v4400, %v4456
    %v4458 = vand.u32 %v4457, 4294901760
    %v4459 = vsub.f32 %v4457, %v4458
    %v4460 = vand.u32 %v4459, 4294901760
    %4461 = vmatpush.msra.mxu0 %v4460
    %v4462 = vand.u32 %v4399, 4294901760
    %v4463 = vsub.f32 %v4399, %v4462
    %v4464 = vand.u32 %v4463, 4294901760
    %v4465 = vsub.f32 %v4463, %v4464
    %v4466 = vand.u32 %v4465, 4294901760
    %4467 = vmatpush.msra.mxu0 %v4466
    %v4468 = vand.u32 %v4398, 4294901760
    %v4469 = vsub.f32 %v4398, %v4468
    %v4470 = vand.u32 %v4469, 4294901760
    %v4471 = vsub.f32 %v4469, %v4470
    %v4472 = vand.u32 %v4471, 4294901760
    %4473 = vmatpush.msra.mxu0 %v4472
    %v4474 = vand.u32 %v4397, 4294901760
    %v4475 = vsub.f32 %v4397, %v4474
    %v4476 = vand.u32 %v4475, 4294901760
    %v4477 = vsub.f32 %v4475, %v4476
    %v4478 = vand.u32 %v4477, 4294901760
    %4479 = vmatpush.msra.mxu0 %v4478
    %v4480 = vand.u32 %v4396, 4294901760
    %v4481 = vsub.f32 %v4396, %v4480
    %v4482 = vand.u32 %v4481, 4294901760
    %v4483 = vsub.f32 %v4481, %v4482
    %v4484 = vand.u32 %v4483, 4294901760
    %4485 = vmatpush.msra.mxu0 %v4484
    %v4486 = vand.u32 %v4395, 4294901760
    %v4487 = vsub.f32 %v4395, %v4486
    %v4488 = vand.u32 %v4487, 4294901760
    %v4489 = vsub.f32 %v4487, %v4488
    %v4490 = vand.u32 %v4489, 4294901760
    %4491 = vmatpush.msra.mxu0 %v4490
    %v4492 = vand.u32 %v4394, 4294901760
    %v4493 = vsub.f32 %v4394, %v4492
    %v4494 = vand.u32 %v4493, 4294901760
    %v4495 = vsub.f32 %v4493, %v4494
    %v4496 = vand.u32 %v4495, 4294901760
    %4497 = vmatpush.msra.mxu0 %v4496
    %v4498 = vand.u32 %v4407, 4294901760
    %4499 = vmatmul.f32.gmra.mxu0 %v4498
    %v4500 = vpop.f32.mrf.mxu0
    %v4501 = vadd.f32 %v4440, %v4500
    %4502 = vdwg.mxu0
    %4503 = vmatpush.msra.mxu0 0.0
    %4504 = vmatpush.msra.mxu0 0.0
    %4505 = vmatpush.msra.mxu0 0.0
    %4506 = vmatpush.msra.mxu0 0.0
    %4507 = vmatpush.msra.mxu0 0.0
    %4508 = vmatpush.msra.mxu0 0.0
    %4509 = vmatpush.msra.mxu0 0.0
    %4510 = vmatpush.msra.mxu0 0.0
    %v4511 = vand.u32 %v4401, 4294901760
    %v4512 = vsub.f32 %v4401, %v4511
    %4513 = vmatpush.msra.mxu0 %v4512
    %v4514 = vand.u32 %v4400, 4294901760
    %v4515 = vsub.f32 %v4400, %v4514
    %4516 = vmatpush.msra.mxu0 %v4515
    %v4517 = vand.u32 %v4399, 4294901760
    %v4518 = vsub.f32 %v4399, %v4517
    %4519 = vmatpush.msra.mxu0 %v4518
    %v4520 = vand.u32 %v4398, 4294901760
    %v4521 = vsub.f32 %v4398, %v4520
    %4522 = vmatpush.msra.mxu0 %v4521
    %v4523 = vand.u32 %v4397, 4294901760
    %v4524 = vsub.f32 %v4397, %v4523
    %4525 = vmatpush.msra.mxu0 %v4524
    %v4526 = vand.u32 %v4396, 4294901760
    %v4527 = vsub.f32 %v4396, %v4526
    %4528 = vmatpush.msra.mxu0 %v4527
    %v4529 = vand.u32 %v4395, 4294901760
    %v4530 = vsub.f32 %v4395, %v4529
    %4531 = vmatpush.msra.mxu0 %v4530
    %v4532 = vand.u32 %v4394, 4294901760
    %v4533 = vsub.f32 %v4394, %v4532
    %4534 = vmatpush.msra.mxu0 %v4533
    %v4535 = vand.u32 %v4407, 4294901760
    %v4536 = vsub.f32 %v4407, %v4535
    %4537 = vmatmul.f32.gmra.mxu0 %v4536
    %v4538 = vpop.f32.mrf.mxu0
    %v4539 = vadd.f32 %v4501, %v4538
    %4540 = vdwg.mxu0
    %4541 = vmatpush.msra.mxu0 0.0
    %4542 = vmatpush.msra.mxu0 0.0
    %4543 = vmatpush.msra.mxu0 0.0
    %4544 = vmatpush.msra.mxu0 0.0
    %4545 = vmatpush.msra.mxu0 0.0
    %4546 = vmatpush.msra.mxu0 0.0
    %4547 = vmatpush.msra.mxu0 0.0
    %4548 = vmatpush.msra.mxu0 0.0
    %v4549 = vand.u32 %v4401, 4294901760
    %4550 = vmatpush.msra.mxu0 %v4549
    %v4551 = vand.u32 %v4400, 4294901760
    %4552 = vmatpush.msra.mxu0 %v4551
    %v4553 = vand.u32 %v4399, 4294901760
    %4554 = vmatpush.msra.mxu0 %v4553
    %v4555 = vand.u32 %v4398, 4294901760
    %4556 = vmatpush.msra.mxu0 %v4555
    %v4557 = vand.u32 %v4397, 4294901760
    %4558 = vmatpush.msra.mxu0 %v4557
    %v4559 = vand.u32 %v4396, 4294901760
    %4560 = vmatpush.msra.mxu0 %v4559
    %v4561 = vand.u32 %v4395, 4294901760
    %4562 = vmatpush.msra.mxu0 %v4561
    %v4563 = vand.u32 %v4394, 4294901760
    %4564 = vmatpush.msra.mxu0 %v4563
    %v4565 = vand.u32 %v4407, 4294901760
    %v4566 = vsub.f32 %v4407, %v4565
    %v4567 = vand.u32 %v4566, 4294901760
    %4568 = vmatmul.f32.gmra.mxu0 %v4567
    %v4569 = vpop.f32.mrf.mxu0
    %v4570 = vadd.f32 %v4539, %v4569
    %4571 = vdwg.mxu0
    %4572 = vmatpush.msra.mxu0 0.0
    %4573 = vmatpush.msra.mxu0 0.0
    %4574 = vmatpush.msra.mxu0 0.0
    %4575 = vmatpush.msra.mxu0 0.0
    %4576 = vmatpush.msra.mxu0 0.0
    %4577 = vmatpush.msra.mxu0 0.0
    %4578 = vmatpush.msra.mxu0 0.0
    %4579 = vmatpush.msra.mxu0 0.0
    %v4580 = vand.u32 %v4401, 4294901760
    %v4581 = vsub.f32 %v4401, %v4580
    %v4582 = vand.u32 %v4581, 4294901760
    %4583 = vmatpush.msra.mxu0 %v4582
    %v4584 = vand.u32 %v4400, 4294901760
    %v4585 = vsub.f32 %v4400, %v4584
    %v4586 = vand.u32 %v4585, 4294901760
    %4587 = vmatpush.msra.mxu0 %v4586
    %v4588 = vand.u32 %v4399, 4294901760
    %v4589 = vsub.f32 %v4399, %v4588
    %v4590 = vand.u32 %v4589, 4294901760
    %4591 = vmatpush.msra.mxu0 %v4590
    %v4592 = vand.u32 %v4398, 4294901760
    %v4593 = vsub.f32 %v4398, %v4592
    %v4594 = vand.u32 %v4593, 4294901760
    %4595 = vmatpush.msra.mxu0 %v4594
    %v4596 = vand.u32 %v4397, 4294901760
    %v4597 = vsub.f32 %v4397, %v4596
    %v4598 = vand.u32 %v4597, 4294901760
    %4599 = vmatpush.msra.mxu0 %v4598
    %v4600 = vand.u32 %v4396, 4294901760
    %v4601 = vsub.f32 %v4396, %v4600
    %v4602 = vand.u32 %v4601, 4294901760
    %4603 = vmatpush.msra.mxu0 %v4602
    %v4604 = vand.u32 %v4395, 4294901760
    %v4605 = vsub.f32 %v4395, %v4604
    %v4606 = vand.u32 %v4605, 4294901760
    %4607 = vmatpush.msra.mxu0 %v4606
    %v4608 = vand.u32 %v4394, 4294901760
    %v4609 = vsub.f32 %v4394, %v4608
    %v4610 = vand.u32 %v4609, 4294901760
    %4611 = vmatpush.msra.mxu0 %v4610
    %v4612 = vand.u32 %v4407, 4294901760
    %4613 = vmatmul.f32.gmra.mxu0 %v4612
    %v4614 = vpop.f32.mrf.mxu0
    %v4615 = vadd.f32 %v4570, %v4614
    %4616 = vdwg.mxu0
    %4617 = vmatpush.msra.mxu0 0.0
    %4618 = vmatpush.msra.mxu0 0.0
    %4619 = vmatpush.msra.mxu0 0.0
    %4620 = vmatpush.msra.mxu0 0.0
    %4621 = vmatpush.msra.mxu0 0.0
    %4622 = vmatpush.msra.mxu0 0.0
    %4623 = vmatpush.msra.mxu0 0.0
    %4624 = vmatpush.msra.mxu0 0.0
    %v4625 = vand.u32 %v4401, 4294901760
    %4626 = vmatpush.msra.mxu0 %v4625
    %v4627 = vand.u32 %v4400, 4294901760
    %4628 = vmatpush.msra.mxu0 %v4627
    %v4629 = vand.u32 %v4399, 4294901760
    %4630 = vmatpush.msra.mxu0 %v4629
    %v4631 = vand.u32 %v4398, 4294901760
    %4632 = vmatpush.msra.mxu0 %v4631
    %v4633 = vand.u32 %v4397, 4294901760
    %4634 = vmatpush.msra.mxu0 %v4633
    %v4635 = vand.u32 %v4396, 4294901760
    %4636 = vmatpush.msra.mxu0 %v4635
    %v4637 = vand.u32 %v4395, 4294901760
    %4638 = vmatpush.msra.mxu0 %v4637
    %v4639 = vand.u32 %v4394, 4294901760
    %4640 = vmatpush.msra.mxu0 %v4639
    %v4641 = vand.u32 %v4407, 4294901760
    %4642 = vmatmul.f32.gmra.mxu0 %v4641
    %v4643 = vpop.f32.mrf.mxu0
    %v4644 = vadd.f32 %v4615, %v4643
    %4645 = vdwg.mxu0
    %v4646 = vmax.f32 %v4644, 0.0
    %v4647 = vld [vmem:[#allocation30] sm:$0xff]
    %v4648 = vld [vmem:[#allocation30 + $0x8] sm:$0xff]
    %v4649 = vld [vmem:[#allocation30 + $0x10] sm:$0xff]
    %v4650 = vld [vmem:[#allocation30 + $0x18] sm:$0xff]
    %v4651 = vld [vmem:[%s57] sm:$0x1]
    %v4653 = vperm.slane %v4651, 0
    %v4656 = vsel %vm2517, %v4646, 0
    %4658 = vmatpush.msra.mxu0 0.0
    %4659 = vmatpush.msra.mxu0 0.0
    %4660 = vmatpush.msra.mxu0 0.0
    %4661 = vmatpush.msra.mxu0 0.0
    %4662 = vmatpush.msra.mxu0 0.0
    %4663 = vmatpush.msra.mxu0 0.0
    %4664 = vmatpush.msra.mxu0 0.0
    %4665 = vmatpush.msra.mxu0 0.0
    %4666 = vmatpush.msra.mxu0 0.0
    %4667 = vmatpush.msra.mxu0 0.0
    %4668 = vmatpush.msra.mxu0 0.0
    %4669 = vmatpush.msra.mxu0 0.0
    %v4670 = vand.u32 %v4650, 4294901760
    %4671 = vmatpush.msra.mxu0 %v4670
    %v4672 = vand.u32 %v4649, 4294901760
    %4673 = vmatpush.msra.mxu0 %v4672
    %v4674 = vand.u32 %v4648, 4294901760
    %4675 = vmatpush.msra.mxu0 %v4674
    %v4676 = vand.u32 %v4647, 4294901760
    %4677 = vmatpush.msra.mxu0 %v4676
    %v4678 = vand.u32 %v4656, 4294901760
    %v4679 = vsub.f32 %v4656, %v4678
    %v4680 = vand.u32 %v4679, 4294901760
    %v4681 = vsub.f32 %v4679, %v4680
    %v4682 = vand.u32 %v4681, 4294901760
    %4683 = vmatmul.f32.gmra.mxu0 %v4682
    %v4684 = vpop.f32.mrf.mxu0
    %v4685 = vadd.f32 %v4653, %v4684
    %4686 = vdwg.mxu0
    %4687 = vmatpush.msra.mxu0 0.0
    %4688 = vmatpush.msra.mxu0 0.0
    %4689 = vmatpush.msra.mxu0 0.0
    %4690 = vmatpush.msra.mxu0 0.0
    %4691 = vmatpush.msra.mxu0 0.0
    %4692 = vmatpush.msra.mxu0 0.0
    %4693 = vmatpush.msra.mxu0 0.0
    %4694 = vmatpush.msra.mxu0 0.0
    %4695 = vmatpush.msra.mxu0 0.0
    %4696 = vmatpush.msra.mxu0 0.0
    %4697 = vmatpush.msra.mxu0 0.0
    %4698 = vmatpush.msra.mxu0 0.0
    %v4699 = vand.u32 %v4650, 4294901760
    %v4700 = vsub.f32 %v4650, %v4699
    %v4701 = vand.u32 %v4700, 4294901760
    %v4702 = vsub.f32 %v4700, %v4701
    %v4703 = vand.u32 %v4702, 4294901760
    %4704 = vmatpush.msra.mxu0 %v4703
    %v4705 = vand.u32 %v4649, 4294901760
    %v4706 = vsub.f32 %v4649, %v4705
    %v4707 = vand.u32 %v4706, 4294901760
    %v4708 = vsub.f32 %v4706, %v4707
    %v4709 = vand.u32 %v4708, 4294901760
    %4710 = vmatpush.msra.mxu0 %v4709
    %v4711 = vand.u32 %v4648, 4294901760
    %v4712 = vsub.f32 %v4648, %v4711
    %v4713 = vand.u32 %v4712, 4294901760
    %v4714 = vsub.f32 %v4712, %v4713
    %v4715 = vand.u32 %v4714, 4294901760
    %4716 = vmatpush.msra.mxu0 %v4715
    %v4717 = vand.u32 %v4647, 4294901760
    %v4718 = vsub.f32 %v4647, %v4717
    %v4719 = vand.u32 %v4718, 4294901760
    %v4720 = vsub.f32 %v4718, %v4719
    %v4721 = vand.u32 %v4720, 4294901760
    %4722 = vmatpush.msra.mxu0 %v4721
    %v4723 = vand.u32 %v4656, 4294901760
    %4724 = vmatmul.f32.gmra.mxu0 %v4723
    %v4725 = vpop.f32.mrf.mxu0
    %v4726 = vadd.f32 %v4685, %v4725
    %4727 = vdwg.mxu0
    %4728 = vmatpush.msra.mxu0 0.0
    %4729 = vmatpush.msra.mxu0 0.0
    %4730 = vmatpush.msra.mxu0 0.0
    %4731 = vmatpush.msra.mxu0 0.0
    %4732 = vmatpush.msra.mxu0 0.0
    %4733 = vmatpush.msra.mxu0 0.0
    %4734 = vmatpush.msra.mxu0 0.0
    %4735 = vmatpush.msra.mxu0 0.0
    %4736 = vmatpush.msra.mxu0 0.0
    %4737 = vmatpush.msra.mxu0 0.0
    %4738 = vmatpush.msra.mxu0 0.0
    %4739 = vmatpush.msra.mxu0 0.0
    %v4740 = vand.u32 %v4650, 4294901760
    %v4741 = vsub.f32 %v4650, %v4740
    %4742 = vmatpush.msra.mxu0 %v4741
    %v4743 = vand.u32 %v4649, 4294901760
    %v4744 = vsub.f32 %v4649, %v4743
    %4745 = vmatpush.msra.mxu0 %v4744
    %v4746 = vand.u32 %v4648, 4294901760
    %v4747 = vsub.f32 %v4648, %v4746
    %4748 = vmatpush.msra.mxu0 %v4747
    %v4749 = vand.u32 %v4647, 4294901760
    %v4750 = vsub.f32 %v4647, %v4749
    %4751 = vmatpush.msra.mxu0 %v4750
    %v4752 = vand.u32 %v4656, 4294901760
    %v4753 = vsub.f32 %v4656, %v4752
    %4754 = vmatmul.f32.gmra.mxu0 %v4753
    %v4755 = vpop.f32.mrf.mxu0
    %v4756 = vadd.f32 %v4726, %v4755
    %4757 = vdwg.mxu0
    %4758 = vmatpush.msra.mxu0 0.0
    %4759 = vmatpush.msra.mxu0 0.0
    %4760 = vmatpush.msra.mxu0 0.0
    %4761 = vmatpush.msra.mxu0 0.0
    %4762 = vmatpush.msra.mxu0 0.0
    %4763 = vmatpush.msra.mxu0 0.0
    %4764 = vmatpush.msra.mxu0 0.0
    %4765 = vmatpush.msra.mxu0 0.0
    %4766 = vmatpush.msra.mxu0 0.0
    %4767 = vmatpush.msra.mxu0 0.0
    %4768 = vmatpush.msra.mxu0 0.0
    %4769 = vmatpush.msra.mxu0 0.0
    %v4770 = vand.u32 %v4650, 4294901760
    %4771 = vmatpush.msra.mxu0 %v4770
    %v4772 = vand.u32 %v4649, 4294901760
    %4773 = vmatpush.msra.mxu0 %v4772
    %v4774 = vand.u32 %v4648, 4294901760
    %4775 = vmatpush.msra.mxu0 %v4774
    %v4776 = vand.u32 %v4647, 4294901760
    %4777 = vmatpush.msra.mxu0 %v4776
    %v4778 = vand.u32 %v4656, 4294901760
    %v4779 = vsub.f32 %v4656, %v4778
    %v4780 = vand.u32 %v4779, 4294901760
    %4781 = vmatmul.f32.gmra.mxu0 %v4780
    %v4782 = vpop.f32.mrf.mxu0
    %v4783 = vadd.f32 %v4756, %v4782
    %4784 = vdwg.mxu0
    %4785 = vmatpush.msra.mxu0 0.0
    %4786 = vmatpush.msra.mxu0 0.0
    %4787 = vmatpush.msra.mxu0 0.0
    %4788 = vmatpush.msra.mxu0 0.0
    %4789 = vmatpush.msra.mxu0 0.0
    %4790 = vmatpush.msra.mxu0 0.0
    %4791 = vmatpush.msra.mxu0 0.0
    %4792 = vmatpush.msra.mxu0 0.0
    %4793 = vmatpush.msra.mxu0 0.0
    %4794 = vmatpush.msra.mxu0 0.0
    %4795 = vmatpush.msra.mxu0 0.0
    %4796 = vmatpush.msra.mxu0 0.0
    %v4797 = vand.u32 %v4650, 4294901760
    %v4798 = vsub.f32 %v4650, %v4797
    %v4799 = vand.u32 %v4798, 4294901760
    %4800 = vmatpush.msra.mxu0 %v4799
    %v4801 = vand.u32 %v4649, 4294901760
    %v4802 = vsub.f32 %v4649, %v4801
    %v4803 = vand.u32 %v4802, 4294901760
    %4804 = vmatpush.msra.mxu0 %v4803
    %v4805 = vand.u32 %v4648, 4294901760
    %v4806 = vsub.f32 %v4648, %v4805
    %v4807 = vand.u32 %v4806, 4294901760
    %4808 = vmatpush.msra.mxu0 %v4807
    %v4809 = vand.u32 %v4647, 4294901760
    %v4810 = vsub.f32 %v4647, %v4809
    %v4811 = vand.u32 %v4810, 4294901760
    %4812 = vmatpush.msra.mxu0 %v4811
    %v4813 = vand.u32 %v4656, 4294901760
    %4814 = vmatmul.f32.gmra.mxu0 %v4813
    %v4815 = vpop.f32.mrf.mxu0
    %v4816 = vadd.f32 %v4783, %v4815
    %4817 = vdwg.mxu0
    %4818 = vmatpush.msra.mxu0 0.0
    %4819 = vmatpush.msra.mxu0 0.0
    %4820 = vmatpush.msra.mxu0 0.0
    %4821 = vmatpush.msra.mxu0 0.0
    %4822 = vmatpush.msra.mxu0 0.0
    %4823 = vmatpush.msra.mxu0 0.0
    %4824 = vmatpush.msra.mxu0 0.0
    %4825 = vmatpush.msra.mxu0 0.0
    %4826 = vmatpush.msra.mxu0 0.0
    %4827 = vmatpush.msra.mxu0 0.0
    %4828 = vmatpush.msra.mxu0 0.0
    %4829 = vmatpush.msra.mxu0 0.0
    %v4830 = vand.u32 %v4650, 4294901760
    %4831 = vmatpush.msra.mxu0 %v4830
    %v4832 = vand.u32 %v4649, 4294901760
    %4833 = vmatpush.msra.mxu0 %v4832
    %v4834 = vand.u32 %v4648, 4294901760
    %4835 = vmatpush.msra.mxu0 %v4834
    %v4836 = vand.u32 %v4647, 4294901760
    %4837 = vmatpush.msra.mxu0 %v4836
    %v4838 = vand.u32 %v4656, 4294901760
    %4839 = vmatmul.f32.gmra.mxu0 %v4838
    %v4840 = vpop.f32.mrf.mxu0
    %v4841 = vadd.f32 %v4816, %v4840
    %4842 = vdwg.mxu0
    %vm4843 = vcmask 50176
    %v4844 = vsel %vm4843, %v4841, -inf
    %4845 = vmax.xlane.f32.xlu0 %v4844
    %v4846 = vpop.xlane.xlu0 %4845
    %v4847 = vsub.f32 %v4841, %v4846
    %v4848 = vmul.f32 %v4847, 1.442695
    %v4849 = vpow.pop %v4848
    %v4850 = vsel %vm4843, %v4849, 0.0
    %4851 = vadd.xlane.f32.xlu0 %v4850
    %v4852 = vpop.xlane.xlu0 %4851
    %v4853 = vrcp.pop %v4852
    %v4854 = vmul.f32 %v4849, %v4853
    %4855 = vst.msk [vmem:[#allocation32] sm:$0x3] %vm4843, %v4854
    %v4856 = vmax.f32 %v4841, 0.0
    %v4857 = vand.u32 2147483647, %v4841
    %v4858 = vsub.f32 0.0, %v4857
    %v4859 = vmul.f32 %v4858, 1.442695
    %v4860 = vpow.pop %v4859
    %v4861 = vadd.f32 %v4860, 1.0
    %v4862 = vlog2.pop %v4861
    %v4863 = vmul.f32 %v4862, 0.6931472
    %v4864 = vadd.f32 %v4856, %v4863
    %4866 = vrot.lane.b32.xlu0 %v4864, 121
    %v4867 = vpop.permute.xlu0 %4866
    %4869 = vst.msk [vmem:[#allocation33] sm:$0x3] %vm4843, %v4867
    // Predicated region
    $region182: #{_lambda_.1} parent=1 // pred_check
      _
    $region183: #{_lambda_.1} parent=1 // pred_check_branch
      %4871 = sbr.rel (0) target = $region185
    $region184: #{_lambda_.1} parent=1 // pred_region
      %4873 = vsyncadd [#allocation8], 0
      %s4875 = sshll.u32 [#allocation32], 4
      %s4876 = int_to_ptr.vmem [resolvable:$true] %s4875
      %s4877 = sshll.u32 %s59, 4
      %s4878 = int_to_ptr.hbm [resolvable:$true] %s4877
      %4880 = dma.vmem_to_hbm [thread:$0]  %s4876, 32, %s4878, [#allocation8]
    $region185: #{_lambda_.1} parent=1 // pred_fallthru
      _
    // Predicated region
    $region186: #{_lambda_.1} parent=1 // pred_check
      _
    $region187: #{_lambda_.1} parent=1 // pred_check_branch
      %4882 = sbr.rel (0) target = $region189
    $region188: #{_lambda_.1} parent=1 // pred_region
      %4884 = vsyncadd [#allocation34], 0
      %s4886 = sshll.u32 [#allocation33], 4
      %s4887 = int_to_ptr.vmem [resolvable:$true] %s4886
      %s4888 = sshll.u32 %s61, 4
      %s4889 = int_to_ptr.hbm [resolvable:$true] %s4888
      %4891 = dma.vmem_to_hbm [thread:$0]  %s4887, 32, %s4889, [#allocation34]
    $region189: #{_lambda_.1} parent=1 // pred_fallthru
      _
    // Predicated region
    $region190: #{_lambda_.1} parent=1 // pred_check
      _
    $region191: #{_lambda_.1} parent=1 // pred_check_branch
      %4893 = sbr.rel (0) target = $region193
    $region192: #{_lambda_.1} parent=1 // pred_region
      %4895 = vsyncadd [#allocation34], 0
      %s4896 = sshll.u32 [#allocation35], 4
      %s4897 = int_to_ptr.vmem [resolvable:$true] %s4896
      %s4898 = sshll.u32 %s63, 4
      %s4899 = int_to_ptr.hbm [resolvable:$true] %s4898
      %4904 = dma.vmem_to_hbm [thread:$0]  %s4897, 512, %s4899, [#allocation34], 64, 64, 4
    $region193: #{_lambda_.1} parent=1 // pred_fallthru
      _
    // Predicated region
    $region194: #{_lambda_.1} parent=1 // pred_check
      _
    $region195: #{_lambda_.1} parent=1 // pred_check_branch
      %4906 = sbr.rel (0) target = $region197
    $region196: #{_lambda_.1} parent=1 // pred_region
      %4908 = dma.done [#allocation8], 32
    $region197: #{_lambda_.1} parent=1 // pred_fallthru
      _
    // Predicated region
    $region198: #{_lambda_.1} parent=1 // pred_check
      _
    $region199: #{_lambda_.1} parent=1 // pred_check_branch
      %4910 = sbr.rel (0) target = $region201
    $region200: #{_lambda_.1} parent=1 // pred_region
      %4912 = dma.done [#allocation34], 32
    $region201: #{_lambda_.1} parent=1 // pred_fallthru
      _
    // Predicated region
    $region202: #{_lambda_.1} parent=1 // pred_check
      _
    $region203: #{_lambda_.1} parent=1 // pred_check_branch
      %4914 = sbr.rel (0) target = $region205
    $region204: #{_lambda_.1} parent=1 // pred_region
      %4916 = dma.done [#allocation34], 512
    $region205: #{_lambda_.1} parent=1 // pred_fallthru
      _
    %4917 = vsyncpa [#allocation7], 1
    %4918 = vsyncpa [#allocation10], 1
    %4919 = vsyncpa [#allocation13], 1
    %4920 = vsyncpa [#allocation16], 1
    %4921 = vsyncpa [#allocation19], 1
    %4922 = vsyncpa [#allocation22], 1
    %4923 = vsyncpa [#allocation25], 1
    %4924 = vsyncpa [#allocation28], 1
    %4925 = vsyncpa [#allocation31], 1
    %4926 = vsyncpa [#allocation8], 1
    %4927 = vsyncpa [#allocation34], 1

</llo_original>
